<compile_context>
chip_gen: v7x
topology: tpu7x:2x2x1
jax: 0.10.0
libtpu: 0.0.40
codegen_flags: <defaults>
</compile_context>

<pallas_src>
import jax
import jax.numpy as jnp
from jax.experimental import pallas as pl
from jax.experimental.pallas import tpu as pltpu

HIDDEN = 1024
DROP_P = 0.1


def _linear_model_kernel(x_ref, mask_ref, scale_ref, w_ref, b_ref, out_ref):
    # ---- masked sum over the sequence axis: sum_s x[b,s,h] * mask[b,s] ----
    x = x_ref[...]                                    # (B, S, H) f32
    mask = mask_ref[...]                              # (B, S)    f32
    feats = jnp.sum(x * mask[:, :, None], axis=1)     # (B, H)    f32

    # ---- dropout(p=0.1): precomputed keep/(1-p) scale, just a multiply ----
    dropped = feats * scale_ref[...]                  # (B, H)    f32

    # ---- two matmuls against the same VMEM-resident W tile (no concat) ----
    w = w_ref[...]                                    # (H, H) bf16, (in, out)
    b = b_ref[...]                                    # (1, H) f32
    y_clean = jnp.dot(feats.astype(jnp.bfloat16), w,
                      preferred_element_type=jnp.float32) + b      # (B, H) f32
    y_drop = jnp.dot(dropped.astype(jnp.bfloat16), w,
                     preferred_element_type=jnp.float32) + b       # (B, H) f32

    # lane-dense contiguous stores; wrapper transposes to (B, 2, H)
    out_ref[0, ...] = y_clean
    out_ref[1, ...] = y_drop


@jax.jit
def linear_model_forward(x, attention_mask, w_t_bf16, b, dropout_key):
    """x: (B,S,H) f32, attention_mask: (B,S) f32, w_t_bf16: (H,H) bf16 (in,out),
    b: (1,H) f32. Returns (B, 2, H) f32."""
    B, S, H = x.shape

    # dropout randomness (deterministic per key); keep/(1-p) scale in f32
    keep = jax.random.bernoulli(dropout_key, 1.0 - DROP_P, (B, H))
    scale = keep.astype(jnp.float32) * (1.0 / (1.0 - DROP_P))

    out = pl.pallas_call(
        _linear_model_kernel,
        out_shape=jax.ShapeDtypeStruct((2, B, H), jnp.float32),
        grid=(1,),
        in_specs=[
            pl.BlockSpec((B, S, H), lambda i: (0, 0, 0)),   # x
            pl.BlockSpec((B, S), lambda i: (0, 0)),          # attention_mask
            pl.BlockSpec((B, H), lambda i: (0, 0)),           # dropout scale
            pl.BlockSpec((H, H), lambda i: (0, 0)),            # W (in, out) bf16
            pl.BlockSpec((1, H), lambda i: (0, 0)),             # bias
        ],
        out_specs=pl.BlockSpec((2, B, H), lambda i: (0, 0, 0)),
        compiler_params=pltpu.CompilerParams(
            dimension_semantics=("arbitrary",),
        ),
        cost_estimate=pl.CostEstimate(
            flops=2 * (2 * B) * H * H + 2 * B * S * H,
            bytes_accessed=H * H * 2            # bf16 weight (dominant)
                          + B * S * H * 4       # x
                          + B * S * 4           # mask
                          + B * H * 4           # dropout scale
                          + 2 * B * H * 4       # output
                          + H * 4,              # bias
            transcendentals=0,
        ),
    )(x, attention_mask, scale, w_t_bf16, b)

    # (2, B, H) -> (B, 2, H): matches torch.stack((l1(feats), l1(dropped)), 1)
    return jnp.transpose(out, (1, 0, 2))


def init_params(key):
    """nn.Linear(1024, 1024) default init: U(-1/sqrt(in), 1/sqrt(in))."""
    kw, kb = jax.random.split(key)
    bound = 1.0 / (HIDDEN ** 0.5)
    w = jax.random.uniform(kw, (HIDDEN, HIDDEN), jnp.float32, -bound, bound)  # (out, in)
    b = jax.random.uniform(kb, (HIDDEN,), jnp.float32, -bound, bound)
    # transposed (in, out) weight in bf16 (f32 accumulation in-kernel), bias f32
    return w.T.astype(jnp.bfloat16), b.reshape(1, HIDDEN)


if __name__ == "__main__":
    key = jax.random.PRNGKey(0)
    k_x, k_m, k_p, k_d = jax.random.split(key, 4)

    B, S, H = 2, 8, HIDDEN
    x = jax.random.normal(k_x, (B, S, H), jnp.float32)
    attention_mask = (jax.random.uniform(k_m, (B, S)) > 0.3).astype(jnp.float32)
    w_t, bias = init_params(k_p)

    out = linear_model_forward(x, attention_mask, w_t, bias, k_d)
    jax.block_until_ready(out)
    assert out.shape == (B, 2, H), out.shape
    print("KERNEL_OK")
</pallas_src>

<mosaic_0001>
module attributes {stable_mosaic.version = 11 : i64} {
  func.func @_linear_model_kernel(%arg0: i32, %arg1: memref<2x8x1024xf32, #tpu.memory_space<vmem>>, %arg2: memref<2x8xf32, #tpu.memory_space<vmem>>, %arg3: memref<2x1024xf32, #tpu.memory_space<vmem>>, %arg4: memref<1024x1024xbf16, #tpu.memory_space<vmem>>, %arg5: memref<1x1024xf32, #tpu.memory_space<vmem>>, %arg6: memref<2x2x1024xf32, #tpu.memory_space<vmem>>) attributes {dimension_semantics = [#tpu.dimension_semantics<arbitrary>], iteration_bounds = array<i64: 1>, scalar_prefetch = 0 : i64, scratch_operands = 0 : i64, tpu.core_type = #tpu.core_type<tc>, window_params = [{pipeline_mode = #tpu.pipeline_mode<synchronous>, transform_indices = @transform_0, window_bounds = array<i64: 2, 8, 1024>}, {pipeline_mode = #tpu.pipeline_mode<synchronous>, transform_indices = @transform_1, window_bounds = array<i64: 2, 8>}, {pipeline_mode = #tpu.pipeline_mode<synchronous>, transform_indices = @transform_2, window_bounds = array<i64: 2, 1024>}, {pipeline_mode = #tpu.pipeline_mode<synchronous>, transform_indices = @transform_3, window_bounds = array<i64: 1024, 1024>}, {pipeline_mode = #tpu.pipeline_mode<synchronous>, transform_indices = @transform_4, window_bounds = array<i64: 1, 1024>}, {pipeline_mode = #tpu.pipeline_mode<synchronous>, transform_indices = @transform_5, window_bounds = array<i64: 2, 2, 1024>}]} {
    %c0 = arith.constant 0 : index
    %c0_0 = arith.constant 0 : index
    %c0_1 = arith.constant 0 : index
    %0 = vector.load %arg1[%c0, %c0_0, %c0_1] : memref<2x8x1024xf32, #tpu.memory_space<vmem>>, vector<2x8x1024xf32>
    %c0_2 = arith.constant 0 : index
    %c0_3 = arith.constant 0 : index
    %1 = vector.load %arg2[%c0_2, %c0_3] : memref<2x8xf32, #tpu.memory_space<vmem>>, vector<2x8xf32>
    %2 = vector.shape_cast %1 : vector<2x8xf32> to vector<2x8x1xf32>
    %3 = vector.broadcast %2 : vector<2x8x1xf32> to vector<2x8x1024xf32>
    %4 = arith.mulf %0, %3 : vector<2x8x1024xf32>
    %cst = arith.constant dense<0.000000e+00> : vector<2x1024xf32>
    %5 = vector.multi_reduction <add>, %4, %cst [1] : vector<2x8x1024xf32> to vector<2x1024xf32>
    %c0_4 = arith.constant 0 : index
    %c0_5 = arith.constant 0 : index
    %6 = vector.load %arg3[%c0_4, %c0_5] : memref<2x1024xf32, #tpu.memory_space<vmem>>, vector<2x1024xf32>
    %7 = arith.mulf %5, %6 : vector<2x1024xf32>
    %c0_6 = arith.constant 0 : index
    %c0_7 = arith.constant 0 : index
    %8 = vector.load %arg4[%c0_6, %c0_7] : memref<1024x1024xbf16, #tpu.memory_space<vmem>>, vector<1024x1024xbf16>
    %c0_8 = arith.constant 0 : index
    %c0_9 = arith.constant 0 : index
    %9 = vector.load %arg5[%c0_8, %c0_9] : memref<1x1024xf32, #tpu.memory_space<vmem>>, vector<1x1024xf32>
    %10 = arith.truncf %5 : vector<2x1024xf32> to vector<2x1024xbf16>
    %cst_10 = arith.constant dense<0.000000e+00> : vector<2x1024xf32>
    %11 = tpu.matmul %10, %8, %cst_10 {dimension_numbers = #tpu.dot_dimension_numbers<[1], [0], [0], [1], [0, 0, 1, 1], [], []>} : vector<2x1024xbf16>, vector<1024x1024xbf16>, vector<2x1024xf32> -> vector<2x1024xf32>
    %12 = vector.broadcast %9 : vector<1x1024xf32> to vector<2x1024xf32>
    %13 = arith.addf %11, %12 : vector<2x1024xf32>
    %14 = arith.truncf %7 : vector<2x1024xf32> to vector<2x1024xbf16>
    %cst_11 = arith.constant dense<0.000000e+00> : vector<2x1024xf32>
    %15 = tpu.matmul %14, %8, %cst_11 {dimension_numbers = #tpu.dot_dimension_numbers<[1], [0], [0], [1], [0, 0, 1, 1], [], []>} : vector<2x1024xbf16>, vector<1024x1024xbf16>, vector<2x1024xf32> -> vector<2x1024xf32>
    %16 = vector.broadcast %9 : vector<1x1024xf32> to vector<2x1024xf32>
    %17 = arith.addf %15, %16 : vector<2x1024xf32>
    %c0_12 = arith.constant 0 : index
    %c0_13 = arith.constant 0 : index
    %c0_14 = arith.constant 0 : index
    %18 = vector.load %arg6[%c0_12, %c0_13, %c0_14] : memref<2x2x1024xf32, #tpu.memory_space<vmem>>, vector<1x2x1024xf32>
    %19 = vector.shape_cast %18 : vector<1x2x1024xf32> to vector<2x1024xf32>
    %20 = vector.shape_cast %13 : vector<2x1024xf32> to vector<1x2x1024xf32>
    tpu.vector_store %arg6[%c0_12, %c0_13, %c0_14], %20 {strides = array<i32>} : memref<2x2x1024xf32, #tpu.memory_space<vmem>>, vector<1x2x1024xf32>,
    %c1 = arith.constant 1 : index
    %c0_15 = arith.constant 0 : index
    %c0_16 = arith.constant 0 : index
    %21 = vector.load %arg6[%c1, %c0_15, %c0_16] : memref<2x2x1024xf32, #tpu.memory_space<vmem>>, vector<1x2x1024xf32>
    %22 = vector.shape_cast %21 : vector<1x2x1024xf32> to vector<2x1024xf32>
    %23 = vector.shape_cast %17 : vector<2x1024xf32> to vector<1x2x1024xf32>
    tpu.vector_store %arg6[%c1, %c0_15, %c0_16], %23 {strides = array<i32>} : memref<2x2x1024xf32, #tpu.memory_space<vmem>>, vector<1x2x1024xf32>,
    return
  }
  func.func @transform_0(%arg0: i32) -> (i32, i32, i32) {
    %c0_i32 = arith.constant 0 : i32
    %c0_i32_0 = arith.constant 0 : i32
    %c0_i32_1 = arith.constant 0 : i32
    %c0_i32_2 = arith.constant 0 : i32
    return %c0_i32, %c0_i32_0, %c0_i32_1 : i32, i32, i32
  }
  func.func @transform_1(%arg0: i32) -> (i32, i32) {
    %c0_i32 = arith.constant 0 : i32
    %c0_i32_0 = arith.constant 0 : i32
    %c0_i32_1 = arith.constant 0 : i32
    return %c0_i32, %c0_i32_0 : i32, i32
  }
  func.func @transform_2(%arg0: i32) -> (i32, i32) {
    %c0_i32 = arith.constant 0 : i32
    %c0_i32_0 = arith.constant 0 : i32
    %c0_i32_1 = arith.constant 0 : i32
    return %c0_i32, %c0_i32_0 : i32, i32
  }
  func.func @transform_3(%arg0: i32) -> (i32, i32) {
    %c0_i32 = arith.constant 0 : i32
    %c0_i32_0 = arith.constant 0 : i32
    %c0_i32_1 = arith.constant 0 : i32
    return %c0_i32, %c0_i32_0 : i32, i32
  }
  func.func @transform_4(%arg0: i32) -> (i32, i32) {
    %c0_i32 = arith.constant 0 : i32
    %c0_i32_0 = arith.constant 0 : i32
    %c0_i32_1 = arith.constant 0 : i32
    return %c0_i32, %c0_i32_0 : i32, i32
  }
  func.func @transform_5(%arg0: i32) -> (i32, i32, i32) {
    %c0_i32 = arith.constant 0 : i32
    %c0_i32_0 = arith.constant 0 : i32
    %c0_i32_1 = arith.constant 0 : i32
    %c0_i32_2 = arith.constant 0 : i32
    return %c0_i32, %c0_i32_0, %c0_i32_1 : i32, i32, i32
  }
}

</mosaic_0001>

<llo_original>
// kernel: linear_model_forward.1
$region0: #{linear_model_forward.1}
  #allocation0 [shape = 'u32[]', space=smem, size = 0x4, offset = 0x4, fixed_abs, tag = 'smem constant byte address 0x4 - core index']
  #allocation1 [shape = 'u32[144,128]{1,0:T(1,128)}', space=vmem, size = 0x12000, scoped, tag = 'internal scratch']
  %s0 = inlined_call_operand.hbm [shape: f32[2,8,1024], index: 0, kind: input, shape index: {}]
  %s1 = inlined_call_operand.hbm [shape: f32[2,8], index: 1, kind: input, shape index: {}]
  %s2 = inlined_call_operand.vmem [shape: f32[2,1024], index: 2, kind: input, shape index: {}]
  %s3 = inlined_call_operand.hbm [shape: bf16[1024,1024], index: 3, kind: input, shape index: {}]
  %s4 = inlined_call_operand.hbm [shape: f32[1,1024], index: 4, kind: input, shape index: {}]
  %s5 = inlined_call_operand.vmem [shape: f32[2,2,1024], index: 5, kind: output, shape index: {}]
  %s6 = sld [smem:[#allocation0]]
  $region46: #{linear_model_forward.1} parent=0
    _
  %s8 = ssub.s32 1, %s6
  %s9 = scalar_select 0, %s8, %s6
  $region1: #{linear_model_forward.1} parent=0
    #allocation2 [shape = 'u8[65536]{0}', space=vmem, size = 0x10000, scoped, tag = 'input window, operand 0, single buffered']
    #allocation3 [shape = 's32[1]{0}', space=sflag, size = 0x4, scoped, tag = 'scoped memory for linear_model_forward.1']
    #allocation4 [shape = 'u8[1024]{0}', space=vmem, size = 0x400, scoped, tag = 'input window, operand 1, single buffered']
    #allocation5 [shape = 's32[1]{0}', space=sflag, size = 0x4, scoped, tag = 'scoped memory for linear_model_forward.1']
    #allocation6 [shape = 'u8[2097152]{0}', space=vmem, size = 0x200000, scoped, tag = 'input window, operand 3, single buffered']
    #allocation7 [shape = 'u8[4096]{0}', space=vmem, size = 0x1000, scoped, tag = 'input window, operand 4, single buffered']
    #allocation8 [shape = 's32[1]{0}', space=sflag, size = 0x4, scoped, tag = 'scoped memory for linear_model_forward.1']
    %10 = vsyncpa [#allocation3], 0
    %11 = vsyncpa [#allocation5], 0
    %12 = vsyncpa [#allocation8], 0
    // Predicated region
    $region2: #{linear_model_forward.1} parent=1 // pred_check
      _
    $region3: #{linear_model_forward.1} parent=1 // pred_check_branch
      %14 = sbr.rel (0) target = $region5
    $region4: #{linear_model_forward.1} parent=1 // pred_region
      %s16 = ssub.s32 2048, 2048
      %17 = vsyncadd [#allocation3], %s16
      %s18 = sshll.u32 [#allocation2], 4
      %s19 = int_to_ptr.vmem [resolvable:$true] %s18
      %24 = dma.hbm_to_vmem [thread:$0]  %s0, 2048, %s19, [#allocation3], 1024, 1024, 64
    $region5: #{linear_model_forward.1} parent=1 // pred_fallthru
      _
    // Predicated region
    $region6: #{linear_model_forward.1} parent=1 // pred_check
      _
    $region7: #{linear_model_forward.1} parent=1 // pred_check_branch
      %26 = sbr.rel (0) target = $region9
    $region8: #{linear_model_forward.1} parent=1 // pred_region
      %s28 = ssub.s32 32, 32
      %29 = vsyncadd [#allocation5], %s28
      %s31 = sshll.u32 [#allocation4], 4
      %s32 = int_to_ptr.vmem [resolvable:$true] %s31
      %34 = dma.hbm_to_vmem [thread:$0]  %s1, 32, %s32, [#allocation5]
    $region9: #{linear_model_forward.1} parent=1 // pred_fallthru
      _
    // Predicated region
    $region10: #{linear_model_forward.1} parent=1 // pred_check
      _
    $region11: #{linear_model_forward.1} parent=1 // pred_check_branch
      %36 = sbr.rel (0) target = $region13
    $region12: #{linear_model_forward.1} parent=1 // pred_region
      _
    $region13: #{linear_model_forward.1} parent=1 // pred_fallthru
      _
    // Predicated region
    $region14: #{linear_model_forward.1} parent=1 // pred_check
      _
    $region15: #{linear_model_forward.1} parent=1 // pred_check_branch
      %38 = sbr.rel (0) target = $region17
    $region16: #{linear_model_forward.1} parent=1 // pred_region
      %s40 = ssub.s32 65536, 65536
      %41 = vsyncadd [#allocation5], %s40
      %s42 = sshll.u32 [#allocation6], 4
      %s43 = int_to_ptr.vmem [resolvable:$true] %s42
      %48 = dma.hbm_to_vmem [thread:$0]  %s3, 65536, %s43, [#allocation5], 512, 512, 32
    $region17: #{linear_model_forward.1} parent=1 // pred_fallthru
      _
    // Predicated region
    $region18: #{linear_model_forward.1} parent=1 // pred_check
      _
    $region19: #{linear_model_forward.1} parent=1 // pred_check_branch
      %50 = sbr.rel (0) target = $region21
    $region20: #{linear_model_forward.1} parent=1 // pred_region
      %s52 = ssub.s32 128, 128
      %53 = vsyncadd [#allocation8], %s52
      %s55 = sshll.u32 [#allocation7], 4
      %s56 = int_to_ptr.vmem [resolvable:$true] %s55
      %58 = dma.hbm_to_vmem [thread:$0]  %s4, 128, %s56, [#allocation8]
    $region21: #{linear_model_forward.1} parent=1 // pred_fallthru
      _
    // Predicated region
    $region22: #{linear_model_forward.1} parent=1 // pred_check
      _
    $region23: #{linear_model_forward.1} parent=1 // pred_check_branch
      %60 = sbr.rel (0) target = $region25
    $region24: #{linear_model_forward.1} parent=1 // pred_region
      %61 = dma.done [#allocation3], 2048
    $region25: #{linear_model_forward.1} parent=1 // pred_fallthru
      _
    // Predicated region
    $region26: #{linear_model_forward.1} parent=1 // pred_check
      _
    $region27: #{linear_model_forward.1} parent=1 // pred_check_branch
      %63 = sbr.rel (0) target = $region29
    $region28: #{linear_model_forward.1} parent=1 // pred_region
      %64 = dma.done [#allocation5], 32
    $region29: #{linear_model_forward.1} parent=1 // pred_fallthru
      _
    // Predicated region
    $region30: #{linear_model_forward.1} parent=1 // pred_check
      _
    $region31: #{linear_model_forward.1} parent=1 // pred_check_branch
      %66 = sbr.rel (0) target = $region33
    $region32: #{linear_model_forward.1} parent=1 // pred_region
      %67 = dma.done [#allocation5], 65536
    $region33: #{linear_model_forward.1} parent=1 // pred_fallthru
      _
    // Predicated region
    $region34: #{linear_model_forward.1} parent=1 // pred_check
      _
    $region35: #{linear_model_forward.1} parent=1 // pred_check_branch
      %69 = sbr.rel (0) target = $region37
    $region36: #{linear_model_forward.1} parent=1 // pred_region
      %70 = dma.done [#allocation8], 128
    $region37: #{linear_model_forward.1} parent=1 // pred_fallthru
      _
    %v71 = vld [vmem:[#allocation2] sm:$0xff]
    %v72 = vld [vmem:[#allocation2 + $0x8] sm:$0xff]
    %v73 = vld [vmem:[#allocation2 + $0x10] sm:$0xff]
    %v74 = vld [vmem:[#allocation2 + $0x18] sm:$0xff]
    %v75 = vld [vmem:[#allocation2 + $0x20] sm:$0xff]
    %v76 = vld [vmem:[#allocation2 + $0x28] sm:$0xff]
    %v77 = vld [vmem:[#allocation2 + $0x30] sm:$0xff]
    %v78 = vld [vmem:[#allocation2 + $0x38] sm:$0xff]
    %v79 = vld [vmem:[#allocation2 + $0x40] sm:$0xff]
    %v80 = vld [vmem:[#allocation2 + $0x48] sm:$0xff]
    %v81 = vld [vmem:[#allocation2 + $0x50] sm:$0xff]
    %v82 = vld [vmem:[#allocation2 + $0x58] sm:$0xff]
    %v83 = vld [vmem:[#allocation2 + $0x60] sm:$0xff]
    %v84 = vld [vmem:[#allocation2 + $0x68] sm:$0xff]
    %v85 = vld [vmem:[#allocation2 + $0x70] sm:$0xff]
    %v86 = vld [vmem:[#allocation2 + $0x78] sm:$0xff]
    %v87 = vld [vmem:[#allocation4] sm:$0x3]
    %v88 = vlaneseq
    %v89 = vshrl.u32 %v88, 7
    %v90 = vsub.s32 0, %v89
    %v91 = vrot.slane %v87, %v90
    %93 = vbcast.lane.b32.xlu0 %v91, 256
    %v94 = vpop.permute.xlu0 %93
    %v95 = vlaneseq
    %v96 = vshrl.u32 %v95, 7
    %v97 = vsub.s32 1, %v96
    %v98 = vrot.slane %v87, %v97
    %100 = vbcast.lane.b32.xlu0 %v98, 256
    %v101 = vpop.permute.xlu0 %100
    %v102 = vmul.f32 %v71, %v94
    %v103 = vmul.f32 %v72, %v94
    %v104 = vmul.f32 %v73, %v94
    %v105 = vmul.f32 %v74, %v94
    %v106 = vmul.f32 %v75, %v94
    %v107 = vmul.f32 %v76, %v94
    %v108 = vmul.f32 %v77, %v94
    %v109 = vmul.f32 %v78, %v94
    %v110 = vmul.f32 %v79, %v101
    %v111 = vmul.f32 %v80, %v101
    %v112 = vmul.f32 %v81, %v101
    %v113 = vmul.f32 %v82, %v101
    %v114 = vmul.f32 %v83, %v101
    %v115 = vmul.f32 %v84, %v101
    %v116 = vmul.f32 %v85, %v101
    %v117 = vmul.f32 %v86, %v101
    %v118 = vrot.slane %v102, 4
    %v119 = vadd.f32 %v102, %v118
    %v120 = vrot.slane %v119, 2
    %v121 = vadd.f32 %v119, %v120
    %v122 = vrot.slane %v121, 1
    %v123 = vadd.f32 %v121, %v122
    %v124 = vrot.slane %v103, 4
    %v125 = vadd.f32 %v103, %v124
    %v126 = vrot.slane %v125, 2
    %v127 = vadd.f32 %v125, %v126
    %v128 = vrot.slane %v127, 1
    %v129 = vadd.f32 %v127, %v128
    %v130 = vrot.slane %v104, 4
    %v131 = vadd.f32 %v104, %v130
    %v132 = vrot.slane %v131, 2
    %v133 = vadd.f32 %v131, %v132
    %v134 = vrot.slane %v133, 1
    %v135 = vadd.f32 %v133, %v134
    %v136 = vrot.slane %v105, 4
    %v137 = vadd.f32 %v105, %v136
    %v138 = vrot.slane %v137, 2
    %v139 = vadd.f32 %v137, %v138
    %v140 = vrot.slane %v139, 1
    %v141 = vadd.f32 %v139, %v140
    %v142 = vrot.slane %v106, 4
    %v143 = vadd.f32 %v106, %v142
    %v144 = vrot.slane %v143, 2
    %v145 = vadd.f32 %v143, %v144
    %v146 = vrot.slane %v145, 1
    %v147 = vadd.f32 %v145, %v146
    %v148 = vrot.slane %v107, 4
    %v149 = vadd.f32 %v107, %v148
    %v150 = vrot.slane %v149, 2
    %v151 = vadd.f32 %v149, %v150
    %v152 = vrot.slane %v151, 1
    %v153 = vadd.f32 %v151, %v152
    %v154 = vrot.slane %v108, 4
    %v155 = vadd.f32 %v108, %v154
    %v156 = vrot.slane %v155, 2
    %v157 = vadd.f32 %v155, %v156
    %v158 = vrot.slane %v157, 1
    %v159 = vadd.f32 %v157, %v158
    %v160 = vrot.slane %v109, 4
    %v161 = vadd.f32 %v109, %v160
    %v162 = vrot.slane %v161, 2
    %v163 = vadd.f32 %v161, %v162
    %v164 = vrot.slane %v163, 1
    %v165 = vadd.f32 %v163, %v164
    %v166 = vrot.slane %v110, 4
    %v167 = vadd.f32 %v110, %v166
    %v168 = vrot.slane %v167, 2
    %v169 = vadd.f32 %v167, %v168
    %v170 = vrot.slane %v169, 1
    %v171 = vadd.f32 %v169, %v170
    %v172 = vrot.slane %v111, 4
    %v173 = vadd.f32 %v111, %v172
    %v174 = vrot.slane %v173, 2
    %v175 = vadd.f32 %v173, %v174
    %v176 = vrot.slane %v175, 1
    %v177 = vadd.f32 %v175, %v176
    %v178 = vrot.slane %v112, 4
    %v179 = vadd.f32 %v112, %v178
    %v180 = vrot.slane %v179, 2
    %v181 = vadd.f32 %v179, %v180
    %v182 = vrot.slane %v181, 1
    %v183 = vadd.f32 %v181, %v182
    %v184 = vrot.slane %v113, 4
    %v185 = vadd.f32 %v113, %v184
    %v186 = vrot.slane %v185, 2
    %v187 = vadd.f32 %v185, %v186
    %v188 = vrot.slane %v187, 1
    %v189 = vadd.f32 %v187, %v188
    %v190 = vrot.slane %v114, 4
    %v191 = vadd.f32 %v114, %v190
    %v192 = vrot.slane %v191, 2
    %v193 = vadd.f32 %v191, %v192
    %v194 = vrot.slane %v193, 1
    %v195 = vadd.f32 %v193, %v194
    %v196 = vrot.slane %v115, 4
    %v197 = vadd.f32 %v115, %v196
    %v198 = vrot.slane %v197, 2
    %v199 = vadd.f32 %v197, %v198
    %v200 = vrot.slane %v199, 1
    %v201 = vadd.f32 %v199, %v200
    %v202 = vrot.slane %v116, 4
    %v203 = vadd.f32 %v116, %v202
    %v204 = vrot.slane %v203, 2
    %v205 = vadd.f32 %v203, %v204
    %v206 = vrot.slane %v205, 1
    %v207 = vadd.f32 %v205, %v206
    %v208 = vrot.slane %v117, 4
    %v209 = vadd.f32 %v117, %v208
    %v210 = vrot.slane %v209, 2
    %v211 = vadd.f32 %v209, %v210
    %v212 = vrot.slane %v211, 1
    %v213 = vadd.f32 %v211, %v212
    %v214 = vld [vmem:[%s2] sm:$0xff]
    %v215 = vld [vmem:[%s2 + $0x8] sm:$0xff]
    %v218 = vcombine.high %v214, %v214
    %v220 = vunpack.c.l.s4 1983009808
    %v221 = vunpack.c.0.s8 %v220
    %v222 = vlaneseq
    %v223 = vshrl.u32 %v222, 7
    %v224 = vsub.s32 %v221, %v223
    %v225 = vrot.slane %v214, %v224
    %v227 = vunpack.c.l.s4 1983009808
    %v228 = vunpack.c.0.s8 %v227
    %v229 = vlaneseq
    %v230 = vshrl.u32 %v229, 7
    %v231 = vsub.s32 %v228, %v230
    %v232 = vrot.slane %v218, %v231
    %v233 = vcombine.high %v225, %v225
    %v234 = vcombine.high %v232, %v232
    %v235 = vcombine.high %v215, %v215
    %v237 = vunpack.c.l.s4 1983009808
    %v238 = vunpack.c.0.s8 %v237
    %v239 = vlaneseq
    %v240 = vshrl.u32 %v239, 7
    %v241 = vsub.s32 %v238, %v240
    %v242 = vrot.slane %v215, %v241
    %v244 = vunpack.c.l.s4 1983009808
    %v245 = vunpack.c.0.s8 %v244
    %v246 = vlaneseq
    %v247 = vshrl.u32 %v246, 7
    %v248 = vsub.s32 %v245, %v247
    %v249 = vrot.slane %v235, %v248
    %v250 = vcombine.high %v242, %v242
    %v251 = vcombine.high %v249, %v249
    %v252 = vrot.slane %v225, 1
    %v253 = vrot.slane %v233, 1
    %v254 = vrot.slane %v232, 1
    %v255 = vrot.slane %v234, 1
    %v256 = vrot.slane %v242, 1
    %v257 = vrot.slane %v250, 1
    %v258 = vrot.slane %v249, 1
    %v259 = vrot.slane %v251, 1
    %v276 = vmul.f32 %v123, %v225
    %v277 = vmul.f32 %v129, %v233
    %v278 = vmul.f32 %v135, %v232
    %v279 = vmul.f32 %v141, %v234
    %v280 = vmul.f32 %v147, %v242
    %v281 = vmul.f32 %v153, %v250
    %v282 = vmul.f32 %v159, %v249
    %v283 = vmul.f32 %v165, %v251
    %v284 = vmul.f32 %v171, %v252
    %v285 = vmul.f32 %v177, %v253
    %v286 = vmul.f32 %v183, %v254
    %v287 = vmul.f32 %v189, %v255
    %v288 = vmul.f32 %v195, %v256
    %v289 = vmul.f32 %v201, %v257
    %v290 = vmul.f32 %v207, %v258
    %v291 = vmul.f32 %v213, %v259
    %v292 = vld [vmem:[#allocation6] sm:$0xff]
    %v293 = vld [vmem:[#allocation6 + $0x8] sm:$0xff]
    %v294 = vld [vmem:[#allocation6 + $0x10] sm:$0xff]
    %v295 = vld [vmem:[#allocation6 + $0x18] sm:$0xff]
    %v296 = vld [vmem:[#allocation6 + $0x20] sm:$0xff]
    %v297 = vld [vmem:[#allocation6 + $0x28] sm:$0xff]
    %v298 = vld [vmem:[#allocation6 + $0x30] sm:$0xff]
    %v299 = vld [vmem:[#allocation6 + $0x38] sm:$0xff]
    %v300 = vld [vmem:[#allocation6 + $0x40] sm:$0xff]
    %v301 = vld [vmem:[#allocation6 + $0x48] sm:$0xff]
    %v302 = vld [vmem:[#allocation6 + $0x50] sm:$0xff]
    %v303 = vld [vmem:[#allocation6 + $0x58] sm:$0xff]
    %v304 = vld [vmem:[#allocation6 + $0x60] sm:$0xff]
    %v305 = vld [vmem:[#allocation6 + $0x68] sm:$0xff]
    %v306 = vld [vmem:[#allocation6 + $0x70] sm:$0xff]
    %v307 = vld [vmem:[#allocation6 + $0x78] sm:$0xff]
    %v308 = vld [vmem:[#allocation6 + $0x80] sm:$0xff]
    %v309 = vld [vmem:[#allocation6 + $0x88] sm:$0xff]
    %v310 = vld [vmem:[#allocation6 + $0x90] sm:$0xff]
    %v311 = vld [vmem:[#allocation6 + $0x98] sm:$0xff]
    %v312 = vld [vmem:[#allocation6 + $0xa0] sm:$0xff]
    %v313 = vld [vmem:[#allocation6 + $0xa8] sm:$0xff]
    %v314 = vld [vmem:[#allocation6 + $0xb0] sm:$0xff]
    %v315 = vld [vmem:[#allocation6 + $0xb8] sm:$0xff]
    %v316 = vld [vmem:[#allocation6 + $0xc0] sm:$0xff]
    %v317 = vld [vmem:[#allocation6 + $0xc8] sm:$0xff]
    %v318 = vld [vmem:[#allocation6 + $0xd0] sm:$0xff]
    %v319 = vld [vmem:[#allocation6 + $0xd8] sm:$0xff]
    %v320 = vld [vmem:[#allocation6 + $0xe0] sm:$0xff]
    %v321 = vld [vmem:[#allocation6 + $0xe8] sm:$0xff]
    %v322 = vld [vmem:[#allocation6 + $0xf0] sm:$0xff]
    %v323 = vld [vmem:[#allocation6 + $0xf8] sm:$0xff]
    %v324 = vld [vmem:[#allocation6 + $0x100] sm:$0xff]
    %v325 = vld [vmem:[#allocation6 + $0x108] sm:$0xff]
    %v326 = vld [vmem:[#allocation6 + $0x110] sm:$0xff]
    %v327 = vld [vmem:[#allocation6 + $0x118] sm:$0xff]
    %v328 = vld [vmem:[#allocation6 + $0x120] sm:$0xff]
    %v329 = vld [vmem:[#allocation6 + $0x128] sm:$0xff]
    %v330 = vld [vmem:[#allocation6 + $0x130] sm:$0xff]
    %v331 = vld [vmem:[#allocation6 + $0x138] sm:$0xff]
    %v332 = vld [vmem:[#allocation6 + $0x140] sm:$0xff]
    %v333 = vld [vmem:[#allocation6 + $0x148] sm:$0xff]
    %v334 = vld [vmem:[#allocation6 + $0x150] sm:$0xff]
    %v335 = vld [vmem:[#allocation6 + $0x158] sm:$0xff]
    %v336 = vld [vmem:[#allocation6 + $0x160] sm:$0xff]
    %v337 = vld [vmem:[#allocation6 + $0x168] sm:$0xff]
    %v338 = vld [vmem:[#allocation6 + $0x170] sm:$0xff]
    %v339 = vld [vmem:[#allocation6 + $0x178] sm:$0xff]
    %v340 = vld [vmem:[#allocation6 + $0x180] sm:$0xff]
    %v341 = vld [vmem:[#allocation6 + $0x188] sm:$0xff]
    %v342 = vld [vmem:[#allocation6 + $0x190] sm:$0xff]
    %v343 = vld [vmem:[#allocation6 + $0x198] sm:$0xff]
    %v344 = vld [vmem:[#allocation6 + $0x1a0] sm:$0xff]
    %v345 = vld [vmem:[#allocation6 + $0x1a8] sm:$0xff]
    %v346 = vld [vmem:[#allocation6 + $0x1b0] sm:$0xff]
    %v347 = vld [vmem:[#allocation6 + $0x1b8] sm:$0xff]
    %v348 = vld [vmem:[#allocation6 + $0x1c0] sm:$0xff]
    %v349 = vld [vmem:[#allocation6 + $0x1c8] sm:$0xff]
    %v350 = vld [vmem:[#allocation6 + $0x1d0] sm:$0xff]
    %v351 = vld [vmem:[#allocation6 + $0x1d8] sm:$0xff]
    %v352 = vld [vmem:[#allocation6 + $0x1e0] sm:$0xff]
    %v353 = vld [vmem:[#allocation6 + $0x1e8] sm:$0xff]
    %v354 = vld [vmem:[#allocation6 + $0x1f0] sm:$0xff]
    %v355 = vld [vmem:[#allocation6 + $0x1f8] sm:$0xff]
    %v356 = vld [vmem:[#allocation6 + $0x200] sm:$0xff]
    %v357 = vld [vmem:[#allocation6 + $0x208] sm:$0xff]
    %v358 = vld [vmem:[#allocation6 + $0x210] sm:$0xff]
    %v359 = vld [vmem:[#allocation6 + $0x218] sm:$0xff]
    %v360 = vld [vmem:[#allocation6 + $0x220] sm:$0xff]
    %v361 = vld [vmem:[#allocation6 + $0x228] sm:$0xff]
    %v362 = vld [vmem:[#allocation6 + $0x230] sm:$0xff]
    %v363 = vld [vmem:[#allocation6 + $0x238] sm:$0xff]
    %v364 = vld [vmem:[#allocation6 + $0x240] sm:$0xff]
    %v365 = vld [vmem:[#allocation6 + $0x248] sm:$0xff]
    %v366 = vld [vmem:[#allocation6 + $0x250] sm:$0xff]
    %v367 = vld [vmem:[#allocation6 + $0x258] sm:$0xff]
    %v368 = vld [vmem:[#allocation6 + $0x260] sm:$0xff]
    %v369 = vld [vmem:[#allocation6 + $0x268] sm:$0xff]
    %v370 = vld [vmem:[#allocation6 + $0x270] sm:$0xff]
    %v371 = vld [vmem:[#allocation6 + $0x278] sm:$0xff]
    %v372 = vld [vmem:[#allocation6 + $0x280] sm:$0xff]
    %v373 = vld [vmem:[#allocation6 + $0x288] sm:$0xff]
    %v374 = vld [vmem:[#allocation6 + $0x290] sm:$0xff]
    %v375 = vld [vmem:[#allocation6 + $0x298] sm:$0xff]
    %v376 = vld [vmem:[#allocation6 + $0x2a0] sm:$0xff]
    %v377 = vld [vmem:[#allocation6 + $0x2a8] sm:$0xff]
    %v378 = vld [vmem:[#allocation6 + $0x2b0] sm:$0xff]
    %v379 = vld [vmem:[#allocation6 + $0x2b8] sm:$0xff]
    %v380 = vld [vmem:[#allocation6 + $0x2c0] sm:$0xff]
    %v381 = vld [vmem:[#allocation6 + $0x2c8] sm:$0xff]
    %v382 = vld [vmem:[#allocation6 + $0x2d0] sm:$0xff]
    %v383 = vld [vmem:[#allocation6 + $0x2d8] sm:$0xff]
    %v384 = vld [vmem:[#allocation6 + $0x2e0] sm:$0xff]
    %v385 = vld [vmem:[#allocation6 + $0x2e8] sm:$0xff]
    %v386 = vld [vmem:[#allocation6 + $0x2f0] sm:$0xff]
    %v387 = vld [vmem:[#allocation6 + $0x2f8] sm:$0xff]
    %v388 = vld [vmem:[#allocation6 + $0x300] sm:$0xff]
    %v389 = vld [vmem:[#allocation6 + $0x308] sm:$0xff]
    %v390 = vld [vmem:[#allocation6 + $0x310] sm:$0xff]
    %v391 = vld [vmem:[#allocation6 + $0x318] sm:$0xff]
    %v392 = vld [vmem:[#allocation6 + $0x320] sm:$0xff]
    %v393 = vld [vmem:[#allocation6 + $0x328] sm:$0xff]
    %v394 = vld [vmem:[#allocation6 + $0x330] sm:$0xff]
    %v395 = vld [vmem:[#allocation6 + $0x338] sm:$0xff]
    %v396 = vld [vmem:[#allocation6 + $0x340] sm:$0xff]
    %v397 = vld [vmem:[#allocation6 + $0x348] sm:$0xff]
    %v398 = vld [vmem:[#allocation6 + $0x350] sm:$0xff]
    %v399 = vld [vmem:[#allocation6 + $0x358] sm:$0xff]
    %v400 = vld [vmem:[#allocation6 + $0x360] sm:$0xff]
    %v401 = vld [vmem:[#allocation6 + $0x368] sm:$0xff]
    %v402 = vld [vmem:[#allocation6 + $0x370] sm:$0xff]
    %v403 = vld [vmem:[#allocation6 + $0x378] sm:$0xff]
    %v404 = vld [vmem:[#allocation6 + $0x380] sm:$0xff]
    %v405 = vld [vmem:[#allocation6 + $0x388] sm:$0xff]
    %v406 = vld [vmem:[#allocation6 + $0x390] sm:$0xff]
    %v407 = vld [vmem:[#allocation6 + $0x398] sm:$0xff]
    %v408 = vld [vmem:[#allocation6 + $0x3a0] sm:$0xff]
    %v409 = vld [vmem:[#allocation6 + $0x3a8] sm:$0xff]
    %v410 = vld [vmem:[#allocation6 + $0x3b0] sm:$0xff]
    %v411 = vld [vmem:[#allocation6 + $0x3b8] sm:$0xff]
    %v412 = vld [vmem:[#allocation6 + $0x3c0] sm:$0xff]
    %v413 = vld [vmem:[#allocation6 + $0x3c8] sm:$0xff]
    %v414 = vld [vmem:[#allocation6 + $0x3d0] sm:$0xff]
    %v415 = vld [vmem:[#allocation6 + $0x3d8] sm:$0xff]
    %v416 = vld [vmem:[#allocation6 + $0x3e0] sm:$0xff]
    %v417 = vld [vmem:[#allocation6 + $0x3e8] sm:$0xff]
    %v418 = vld [vmem:[#allocation6 + $0x3f0] sm:$0xff]
    %v419 = vld [vmem:[#allocation6 + $0x3f8] sm:$0xff]
    %v420 = vld [vmem:[#allocation6 + $0x400] sm:$0xff]
    %v421 = vld [vmem:[#allocation6 + $0x408] sm:$0xff]
    %v422 = vld [vmem:[#allocation6 + $0x410] sm:$0xff]
    %v423 = vld [vmem:[#allocation6 + $0x418] sm:$0xff]
    %v424 = vld [vmem:[#allocation6 + $0x420] sm:$0xff]
    %v425 = vld [vmem:[#allocation6 + $0x428] sm:$0xff]
    %v426 = vld [vmem:[#allocation6 + $0x430] sm:$0xff]
    %v427 = vld [vmem:[#allocation6 + $0x438] sm:$0xff]
    %v428 = vld [vmem:[#allocation6 + $0x440] sm:$0xff]
    %v429 = vld [vmem:[#allocation6 + $0x448] sm:$0xff]
    %v430 = vld [vmem:[#allocation6 + $0x450] sm:$0xff]
    %v431 = vld [vmem:[#allocation6 + $0x458] sm:$0xff]
    %v432 = vld [vmem:[#allocation6 + $0x460] sm:$0xff]
    %v433 = vld [vmem:[#allocation6 + $0x468] sm:$0xff]
    %v434 = vld [vmem:[#allocation6 + $0x470] sm:$0xff]
    %v435 = vld [vmem:[#allocation6 + $0x478] sm:$0xff]
    %v436 = vld [vmem:[#allocation6 + $0x480] sm:$0xff]
    %v437 = vld [vmem:[#allocation6 + $0x488] sm:$0xff]
    %v438 = vld [vmem:[#allocation6 + $0x490] sm:$0xff]
    %v439 = vld [vmem:[#allocation6 + $0x498] sm:$0xff]
    %v440 = vld [vmem:[#allocation6 + $0x4a0] sm:$0xff]
    %v441 = vld [vmem:[#allocation6 + $0x4a8] sm:$0xff]
    %v442 = vld [vmem:[#allocation6 + $0x4b0] sm:$0xff]
    %v443 = vld [vmem:[#allocation6 + $0x4b8] sm:$0xff]
    %v444 = vld [vmem:[#allocation6 + $0x4c0] sm:$0xff]
    %v445 = vld [vmem:[#allocation6 + $0x4c8] sm:$0xff]
    %v446 = vld [vmem:[#allocation6 + $0x4d0] sm:$0xff]
    %v447 = vld [vmem:[#allocation6 + $0x4d8] sm:$0xff]
    %v448 = vld [vmem:[#allocation6 + $0x4e0] sm:$0xff]
    %v449 = vld [vmem:[#allocation6 + $0x4e8] sm:$0xff]
    %v450 = vld [vmem:[#allocation6 + $0x4f0] sm:$0xff]
    %v451 = vld [vmem:[#allocation6 + $0x4f8] sm:$0xff]
    %v452 = vld [vmem:[#allocation6 + $0x500] sm:$0xff]
    %v453 = vld [vmem:[#allocation6 + $0x508] sm:$0xff]
    %v454 = vld [vmem:[#allocation6 + $0x510] sm:$0xff]
    %v455 = vld [vmem:[#allocation6 + $0x518] sm:$0xff]
    %v456 = vld [vmem:[#allocation6 + $0x520] sm:$0xff]
    %v457 = vld [vmem:[#allocation6 + $0x528] sm:$0xff]
    %v458 = vld [vmem:[#allocation6 + $0x530] sm:$0xff]
    %v459 = vld [vmem:[#allocation6 + $0x538] sm:$0xff]
    %v460 = vld [vmem:[#allocation6 + $0x540] sm:$0xff]
    %v461 = vld [vmem:[#allocation6 + $0x548] sm:$0xff]
    %v462 = vld [vmem:[#allocation6 + $0x550] sm:$0xff]
    %v463 = vld [vmem:[#allocation6 + $0x558] sm:$0xff]
    %v464 = vld [vmem:[#allocation6 + $0x560] sm:$0xff]
    %v465 = vld [vmem:[#allocation6 + $0x568] sm:$0xff]
    %v466 = vld [vmem:[#allocation6 + $0x570] sm:$0xff]
    %v467 = vld [vmem:[#allocation6 + $0x578] sm:$0xff]
    %v468 = vld [vmem:[#allocation6 + $0x580] sm:$0xff]
    %v469 = vld [vmem:[#allocation6 + $0x588] sm:$0xff]
    %v470 = vld [vmem:[#allocation6 + $0x590] sm:$0xff]
    %v471 = vld [vmem:[#allocation6 + $0x598] sm:$0xff]
    %v472 = vld [vmem:[#allocation6 + $0x5a0] sm:$0xff]
    %v473 = vld [vmem:[#allocation6 + $0x5a8] sm:$0xff]
    %v474 = vld [vmem:[#allocation6 + $0x5b0] sm:$0xff]
    %v475 = vld [vmem:[#allocation6 + $0x5b8] sm:$0xff]
    %v476 = vld [vmem:[#allocation6 + $0x5c0] sm:$0xff]
    %v477 = vld [vmem:[#allocation6 + $0x5c8] sm:$0xff]
    %v478 = vld [vmem:[#allocation6 + $0x5d0] sm:$0xff]
    %v479 = vld [vmem:[#allocation6 + $0x5d8] sm:$0xff]
    %v480 = vld [vmem:[#allocation6 + $0x5e0] sm:$0xff]
    %v481 = vld [vmem:[#allocation6 + $0x5e8] sm:$0xff]
    %v482 = vld [vmem:[#allocation6 + $0x5f0] sm:$0xff]
    %v483 = vld [vmem:[#allocation6 + $0x5f8] sm:$0xff]
    %v484 = vld [vmem:[#allocation6 + $0x600] sm:$0xff]
    %v485 = vld [vmem:[#allocation6 + $0x608] sm:$0xff]
    %v486 = vld [vmem:[#allocation6 + $0x610] sm:$0xff]
    %v487 = vld [vmem:[#allocation6 + $0x618] sm:$0xff]
    %v488 = vld [vmem:[#allocation6 + $0x620] sm:$0xff]
    %v489 = vld [vmem:[#allocation6 + $0x628] sm:$0xff]
    %v490 = vld [vmem:[#allocation6 + $0x630] sm:$0xff]
    %v491 = vld [vmem:[#allocation6 + $0x638] sm:$0xff]
    %v492 = vld [vmem:[#allocation6 + $0x640] sm:$0xff]
    %v493 = vld [vmem:[#allocation6 + $0x648] sm:$0xff]
    %v494 = vld [vmem:[#allocation6 + $0x650] sm:$0xff]
    %v495 = vld [vmem:[#allocation6 + $0x658] sm:$0xff]
    %v496 = vld [vmem:[#allocation6 + $0x660] sm:$0xff]
    %v497 = vld [vmem:[#allocation6 + $0x668] sm:$0xff]
    %v498 = vld [vmem:[#allocation6 + $0x670] sm:$0xff]
    %v499 = vld [vmem:[#allocation6 + $0x678] sm:$0xff]
    %v500 = vld [vmem:[#allocation6 + $0x680] sm:$0xff]
    %v501 = vld [vmem:[#allocation6 + $0x688] sm:$0xff]
    %v502 = vld [vmem:[#allocation6 + $0x690] sm:$0xff]
    %v503 = vld [vmem:[#allocation6 + $0x698] sm:$0xff]
    %v504 = vld [vmem:[#allocation6 + $0x6a0] sm:$0xff]
    %v505 = vld [vmem:[#allocation6 + $0x6a8] sm:$0xff]
    %v506 = vld [vmem:[#allocation6 + $0x6b0] sm:$0xff]
    %v507 = vld [vmem:[#allocation6 + $0x6b8] sm:$0xff]
    %v508 = vld [vmem:[#allocation6 + $0x6c0] sm:$0xff]
    %v509 = vld [vmem:[#allocation6 + $0x6c8] sm:$0xff]
    %v510 = vld [vmem:[#allocation6 + $0x6d0] sm:$0xff]
    %v511 = vld [vmem:[#allocation6 + $0x6d8] sm:$0xff]
    %v512 = vld [vmem:[#allocation6 + $0x6e0] sm:$0xff]
    %v513 = vld [vmem:[#allocation6 + $0x6e8] sm:$0xff]
    %v514 = vld [vmem:[#allocation6 + $0x6f0] sm:$0xff]
    %v515 = vld [vmem:[#allocation6 + $0x6f8] sm:$0xff]
    %v516 = vld [vmem:[#allocation6 + $0x700] sm:$0xff]
    %v517 = vld [vmem:[#allocation6 + $0x708] sm:$0xff]
    %v518 = vld [vmem:[#allocation6 + $0x710] sm:$0xff]
    %v519 = vld [vmem:[#allocation6 + $0x718] sm:$0xff]
    %v520 = vld [vmem:[#allocation6 + $0x720] sm:$0xff]
    %v521 = vld [vmem:[#allocation6 + $0x728] sm:$0xff]
    %v522 = vld [vmem:[#allocation6 + $0x730] sm:$0xff]
    %v523 = vld [vmem:[#allocation6 + $0x738] sm:$0xff]
    %v524 = vld [vmem:[#allocation6 + $0x740] sm:$0xff]
    %v525 = vld [vmem:[#allocation6 + $0x748] sm:$0xff]
    %v526 = vld [vmem:[#allocation6 + $0x750] sm:$0xff]
    %v527 = vld [vmem:[#allocation6 + $0x758] sm:$0xff]
    %v528 = vld [vmem:[#allocation6 + $0x760] sm:$0xff]
    %v529 = vld [vmem:[#allocation6 + $0x768] sm:$0xff]
    %v530 = vld [vmem:[#allocation6 + $0x770] sm:$0xff]
    %v531 = vld [vmem:[#allocation6 + $0x778] sm:$0xff]
    %v532 = vld [vmem:[#allocation6 + $0x780] sm:$0xff]
    %v533 = vld [vmem:[#allocation6 + $0x788] sm:$0xff]
    %v534 = vld [vmem:[#allocation6 + $0x790] sm:$0xff]
    %v535 = vld [vmem:[#allocation6 + $0x798] sm:$0xff]
    %v536 = vld [vmem:[#allocation6 + $0x7a0] sm:$0xff]
    %v537 = vld [vmem:[#allocation6 + $0x7a8] sm:$0xff]
    %v538 = vld [vmem:[#allocation6 + $0x7b0] sm:$0xff]
    %v539 = vld [vmem:[#allocation6 + $0x7b8] sm:$0xff]
    %v540 = vld [vmem:[#allocation6 + $0x7c0] sm:$0xff]
    %v541 = vld [vmem:[#allocation6 + $0x7c8] sm:$0xff]
    %v542 = vld [vmem:[#allocation6 + $0x7d0] sm:$0xff]
    %v543 = vld [vmem:[#allocation6 + $0x7d8] sm:$0xff]
    %v544 = vld [vmem:[#allocation6 + $0x7e0] sm:$0xff]
    %v545 = vld [vmem:[#allocation6 + $0x7e8] sm:$0xff]
    %v546 = vld [vmem:[#allocation6 + $0x7f0] sm:$0xff]
    %v547 = vld [vmem:[#allocation6 + $0x7f8] sm:$0xff]
    %v548 = vld [vmem:[#allocation6 + $0x800] sm:$0xff]
    %v549 = vld [vmem:[#allocation6 + $0x808] sm:$0xff]
    %v550 = vld [vmem:[#allocation6 + $0x810] sm:$0xff]
    %v551 = vld [vmem:[#allocation6 + $0x818] sm:$0xff]
    %v552 = vld [vmem:[#allocation6 + $0x820] sm:$0xff]
    %v553 = vld [vmem:[#allocation6 + $0x828] sm:$0xff]
    %v554 = vld [vmem:[#allocation6 + $0x830] sm:$0xff]
    %v555 = vld [vmem:[#allocation6 + $0x838] sm:$0xff]
    %v556 = vld [vmem:[#allocation6 + $0x840] sm:$0xff]
    %v557 = vld [vmem:[#allocation6 + $0x848] sm:$0xff]
    %v558 = vld [vmem:[#allocation6 + $0x850] sm:$0xff]
    %v559 = vld [vmem:[#allocation6 + $0x858] sm:$0xff]
    %v560 = vld [vmem:[#allocation6 + $0x860] sm:$0xff]
    %v561 = vld [vmem:[#allocation6 + $0x868] sm:$0xff]
    %v562 = vld [vmem:[#allocation6 + $0x870] sm:$0xff]
    %v563 = vld [vmem:[#allocation6 + $0x878] sm:$0xff]
    %v564 = vld [vmem:[#allocation6 + $0x880] sm:$0xff]
    %v565 = vld [vmem:[#allocation6 + $0x888] sm:$0xff]
    %v566 = vld [vmem:[#allocation6 + $0x890] sm:$0xff]
    %v567 = vld [vmem:[#allocation6 + $0x898] sm:$0xff]
    %v568 = vld [vmem:[#allocation6 + $0x8a0] sm:$0xff]
    %v569 = vld [vmem:[#allocation6 + $0x8a8] sm:$0xff]
    %v570 = vld [vmem:[#allocation6 + $0x8b0] sm:$0xff]
    %v571 = vld [vmem:[#allocation6 + $0x8b8] sm:$0xff]
    %v572 = vld [vmem:[#allocation6 + $0x8c0] sm:$0xff]
    %v573 = vld [vmem:[#allocation6 + $0x8c8] sm:$0xff]
    %v574 = vld [vmem:[#allocation6 + $0x8d0] sm:$0xff]
    %v575 = vld [vmem:[#allocation6 + $0x8d8] sm:$0xff]
    %v576 = vld [vmem:[#allocation6 + $0x8e0] sm:$0xff]
    %v577 = vld [vmem:[#allocation6 + $0x8e8] sm:$0xff]
    %v578 = vld [vmem:[#allocation6 + $0x8f0] sm:$0xff]
    %v579 = vld [vmem:[#allocation6 + $0x8f8] sm:$0xff]
    %v580 = vld [vmem:[#allocation6 + $0x900] sm:$0xff]
    %v581 = vld [vmem:[#allocation6 + $0x908] sm:$0xff]
    %v582 = vld [vmem:[#allocation6 + $0x910] sm:$0xff]
    %v583 = vld [vmem:[#allocation6 + $0x918] sm:$0xff]
    %v584 = vld [vmem:[#allocation6 + $0x920] sm:$0xff]
    %v585 = vld [vmem:[#allocation6 + $0x928] sm:$0xff]
    %v586 = vld [vmem:[#allocation6 + $0x930] sm:$0xff]
    %v587 = vld [vmem:[#allocation6 + $0x938] sm:$0xff]
    %v588 = vld [vmem:[#allocation6 + $0x940] sm:$0xff]
    %v589 = vld [vmem:[#allocation6 + $0x948] sm:$0xff]
    %v590 = vld [vmem:[#allocation6 + $0x950] sm:$0xff]
    %v591 = vld [vmem:[#allocation6 + $0x958] sm:$0xff]
    %v592 = vld [vmem:[#allocation6 + $0x960] sm:$0xff]
    %v593 = vld [vmem:[#allocation6 + $0x968] sm:$0xff]
    %v594 = vld [vmem:[#allocation6 + $0x970] sm:$0xff]
    %v595 = vld [vmem:[#allocation6 + $0x978] sm:$0xff]
    %v596 = vld [vmem:[#allocation6 + $0x980] sm:$0xff]
    %v597 = vld [vmem:[#allocation6 + $0x988] sm:$0xff]
    %v598 = vld [vmem:[#allocation6 + $0x990] sm:$0xff]
    %v599 = vld [vmem:[#allocation6 + $0x998] sm:$0xff]
    %v600 = vld [vmem:[#allocation6 + $0x9a0] sm:$0xff]
    %v601 = vld [vmem:[#allocation6 + $0x9a8] sm:$0xff]
    %v602 = vld [vmem:[#allocation6 + $0x9b0] sm:$0xff]
    %v603 = vld [vmem:[#allocation6 + $0x9b8] sm:$0xff]
    %v604 = vld [vmem:[#allocation6 + $0x9c0] sm:$0xff]
    %v605 = vld [vmem:[#allocation6 + $0x9c8] sm:$0xff]
    %v606 = vld [vmem:[#allocation6 + $0x9d0] sm:$0xff]
    %v607 = vld [vmem:[#allocation6 + $0x9d8] sm:$0xff]
    %v608 = vld [vmem:[#allocation6 + $0x9e0] sm:$0xff]
    %v609 = vld [vmem:[#allocation6 + $0x9e8] sm:$0xff]
    %v610 = vld [vmem:[#allocation6 + $0x9f0] sm:$0xff]
    %v611 = vld [vmem:[#allocation6 + $0x9f8] sm:$0xff]
    %v612 = vld [vmem:[#allocation6 + $0xa00] sm:$0xff]
    %v613 = vld [vmem:[#allocation6 + $0xa08] sm:$0xff]
    %v614 = vld [vmem:[#allocation6 + $0xa10] sm:$0xff]
    %v615 = vld [vmem:[#allocation6 + $0xa18] sm:$0xff]
    %v616 = vld [vmem:[#allocation6 + $0xa20] sm:$0xff]
    %v617 = vld [vmem:[#allocation6 + $0xa28] sm:$0xff]
    %v618 = vld [vmem:[#allocation6 + $0xa30] sm:$0xff]
    %v619 = vld [vmem:[#allocation6 + $0xa38] sm:$0xff]
    %v620 = vld [vmem:[#allocation6 + $0xa40] sm:$0xff]
    %v621 = vld [vmem:[#allocation6 + $0xa48] sm:$0xff]
    %v622 = vld [vmem:[#allocation6 + $0xa50] sm:$0xff]
    %v623 = vld [vmem:[#allocation6 + $0xa58] sm:$0xff]
    %v624 = vld [vmem:[#allocation6 + $0xa60] sm:$0xff]
    %v625 = vld [vmem:[#allocation6 + $0xa68] sm:$0xff]
    %v626 = vld [vmem:[#allocation6 + $0xa70] sm:$0xff]
    %v627 = vld [vmem:[#allocation6 + $0xa78] sm:$0xff]
    %v628 = vld [vmem:[#allocation6 + $0xa80] sm:$0xff]
    %v629 = vld [vmem:[#allocation6 + $0xa88] sm:$0xff]
    %v630 = vld [vmem:[#allocation6 + $0xa90] sm:$0xff]
    %v631 = vld [vmem:[#allocation6 + $0xa98] sm:$0xff]
    %v632 = vld [vmem:[#allocation6 + $0xaa0] sm:$0xff]
    %v633 = vld [vmem:[#allocation6 + $0xaa8] sm:$0xff]
    %v634 = vld [vmem:[#allocation6 + $0xab0] sm:$0xff]
    %v635 = vld [vmem:[#allocation6 + $0xab8] sm:$0xff]
    %v636 = vld [vmem:[#allocation6 + $0xac0] sm:$0xff]
    %v637 = vld [vmem:[#allocation6 + $0xac8] sm:$0xff]
    %v638 = vld [vmem:[#allocation6 + $0xad0] sm:$0xff]
    %v639 = vld [vmem:[#allocation6 + $0xad8] sm:$0xff]
    %v640 = vld [vmem:[#allocation6 + $0xae0] sm:$0xff]
    %v641 = vld [vmem:[#allocation6 + $0xae8] sm:$0xff]
    %v642 = vld [vmem:[#allocation6 + $0xaf0] sm:$0xff]
    %v643 = vld [vmem:[#allocation6 + $0xaf8] sm:$0xff]
    %v644 = vld [vmem:[#allocation6 + $0xb00] sm:$0xff]
    %v645 = vld [vmem:[#allocation6 + $0xb08] sm:$0xff]
    %v646 = vld [vmem:[#allocation6 + $0xb10] sm:$0xff]
    %v647 = vld [vmem:[#allocation6 + $0xb18] sm:$0xff]
    %v648 = vld [vmem:[#allocation6 + $0xb20] sm:$0xff]
    %v649 = vld [vmem:[#allocation6 + $0xb28] sm:$0xff]
    %v650 = vld [vmem:[#allocation6 + $0xb30] sm:$0xff]
    %v651 = vld [vmem:[#allocation6 + $0xb38] sm:$0xff]
    %v652 = vld [vmem:[#allocation6 + $0xb40] sm:$0xff]
    %v653 = vld [vmem:[#allocation6 + $0xb48] sm:$0xff]
    %v654 = vld [vmem:[#allocation6 + $0xb50] sm:$0xff]
    %v655 = vld [vmem:[#allocation6 + $0xb58] sm:$0xff]
    %v656 = vld [vmem:[#allocation6 + $0xb60] sm:$0xff]
    %v657 = vld [vmem:[#allocation6 + $0xb68] sm:$0xff]
    %v658 = vld [vmem:[#allocation6 + $0xb70] sm:$0xff]
    %v659 = vld [vmem:[#allocation6 + $0xb78] sm:$0xff]
    %v660 = vld [vmem:[#allocation6 + $0xb80] sm:$0xff]
    %v661 = vld [vmem:[#allocation6 + $0xb88] sm:$0xff]
    %v662 = vld [vmem:[#allocation6 + $0xb90] sm:$0xff]
    %v663 = vld [vmem:[#allocation6 + $0xb98] sm:$0xff]
    %v664 = vld [vmem:[#allocation6 + $0xba0] sm:$0xff]
    %v665 = vld [vmem:[#allocation6 + $0xba8] sm:$0xff]
    %v666 = vld [vmem:[#allocation6 + $0xbb0] sm:$0xff]
    %v667 = vld [vmem:[#allocation6 + $0xbb8] sm:$0xff]
    %v668 = vld [vmem:[#allocation6 + $0xbc0] sm:$0xff]
    %v669 = vld [vmem:[#allocation6 + $0xbc8] sm:$0xff]
    %v670 = vld [vmem:[#allocation6 + $0xbd0] sm:$0xff]
    %v671 = vld [vmem:[#allocation6 + $0xbd8] sm:$0xff]
    %v672 = vld [vmem:[#allocation6 + $0xbe0] sm:$0xff]
    %v673 = vld [vmem:[#allocation6 + $0xbe8] sm:$0xff]
    %v674 = vld [vmem:[#allocation6 + $0xbf0] sm:$0xff]
    %v675 = vld [vmem:[#allocation6 + $0xbf8] sm:$0xff]
    %v676 = vld [vmem:[#allocation6 + $0xc00] sm:$0xff]
    %v677 = vld [vmem:[#allocation6 + $0xc08] sm:$0xff]
    %v678 = vld [vmem:[#allocation6 + $0xc10] sm:$0xff]
    %v679 = vld [vmem:[#allocation6 + $0xc18] sm:$0xff]
    %v680 = vld [vmem:[#allocation6 + $0xc20] sm:$0xff]
    %v681 = vld [vmem:[#allocation6 + $0xc28] sm:$0xff]
    %v682 = vld [vmem:[#allocation6 + $0xc30] sm:$0xff]
    %v683 = vld [vmem:[#allocation6 + $0xc38] sm:$0xff]
    %v684 = vld [vmem:[#allocation6 + $0xc40] sm:$0xff]
    %v685 = vld [vmem:[#allocation6 + $0xc48] sm:$0xff]
    %v686 = vld [vmem:[#allocation6 + $0xc50] sm:$0xff]
    %v687 = vld [vmem:[#allocation6 + $0xc58] sm:$0xff]
    %v688 = vld [vmem:[#allocation6 + $0xc60] sm:$0xff]
    %v689 = vld [vmem:[#allocation6 + $0xc68] sm:$0xff]
    %v690 = vld [vmem:[#allocation6 + $0xc70] sm:$0xff]
    %v691 = vld [vmem:[#allocation6 + $0xc78] sm:$0xff]
    %v692 = vld [vmem:[#allocation6 + $0xc80] sm:$0xff]
    %v693 = vld [vmem:[#allocation6 + $0xc88] sm:$0xff]
    %v694 = vld [vmem:[#allocation6 + $0xc90] sm:$0xff]
    %v695 = vld [vmem:[#allocation6 + $0xc98] sm:$0xff]
    %v696 = vld [vmem:[#allocation6 + $0xca0] sm:$0xff]
    %v697 = vld [vmem:[#allocation6 + $0xca8] sm:$0xff]
    %v698 = vld [vmem:[#allocation6 + $0xcb0] sm:$0xff]
    %v699 = vld [vmem:[#allocation6 + $0xcb8] sm:$0xff]
    %v700 = vld [vmem:[#allocation6 + $0xcc0] sm:$0xff]
    %v701 = vld [vmem:[#allocation6 + $0xcc8] sm:$0xff]
    %v702 = vld [vmem:[#allocation6 + $0xcd0] sm:$0xff]
    %v703 = vld [vmem:[#allocation6 + $0xcd8] sm:$0xff]
    %v704 = vld [vmem:[#allocation6 + $0xce0] sm:$0xff]
    %v705 = vld [vmem:[#allocation6 + $0xce8] sm:$0xff]
    %v706 = vld [vmem:[#allocation6 + $0xcf0] sm:$0xff]
    %v707 = vld [vmem:[#allocation6 + $0xcf8] sm:$0xff]
    %v708 = vld [vmem:[#allocation6 + $0xd00] sm:$0xff]
    %v709 = vld [vmem:[#allocation6 + $0xd08] sm:$0xff]
    %v710 = vld [vmem:[#allocation6 + $0xd10] sm:$0xff]
    %v711 = vld [vmem:[#allocation6 + $0xd18] sm:$0xff]
    %v712 = vld [vmem:[#allocation6 + $0xd20] sm:$0xff]
    %v713 = vld [vmem:[#allocation6 + $0xd28] sm:$0xff]
    %v714 = vld [vmem:[#allocation6 + $0xd30] sm:$0xff]
    %v715 = vld [vmem:[#allocation6 + $0xd38] sm:$0xff]
    %v716 = vld [vmem:[#allocation6 + $0xd40] sm:$0xff]
    %v717 = vld [vmem:[#allocation6 + $0xd48] sm:$0xff]
    %v718 = vld [vmem:[#allocation6 + $0xd50] sm:$0xff]
    %v719 = vld [vmem:[#allocation6 + $0xd58] sm:$0xff]
    %v720 = vld [vmem:[#allocation6 + $0xd60] sm:$0xff]
    %v721 = vld [vmem:[#allocation6 + $0xd68] sm:$0xff]
    %v722 = vld [vmem:[#allocation6 + $0xd70] sm:$0xff]
    %v723 = vld [vmem:[#allocation6 + $0xd78] sm:$0xff]
    %v724 = vld [vmem:[#allocation6 + $0xd80] sm:$0xff]
    %v725 = vld [vmem:[#allocation6 + $0xd88] sm:$0xff]
    %v726 = vld [vmem:[#allocation6 + $0xd90] sm:$0xff]
    %v727 = vld [vmem:[#allocation6 + $0xd98] sm:$0xff]
    %v728 = vld [vmem:[#allocation6 + $0xda0] sm:$0xff]
    %v729 = vld [vmem:[#allocation6 + $0xda8] sm:$0xff]
    %v730 = vld [vmem:[#allocation6 + $0xdb0] sm:$0xff]
    %v731 = vld [vmem:[#allocation6 + $0xdb8] sm:$0xff]
    %v732 = vld [vmem:[#allocation6 + $0xdc0] sm:$0xff]
    %v733 = vld [vmem:[#allocation6 + $0xdc8] sm:$0xff]
    %v734 = vld [vmem:[#allocation6 + $0xdd0] sm:$0xff]
    %v735 = vld [vmem:[#allocation6 + $0xdd8] sm:$0xff]
    %v736 = vld [vmem:[#allocation6 + $0xde0] sm:$0xff]
    %v737 = vld [vmem:[#allocation6 + $0xde8] sm:$0xff]
    %v738 = vld [vmem:[#allocation6 + $0xdf0] sm:$0xff]
    %v739 = vld [vmem:[#allocation6 + $0xdf8] sm:$0xff]
    %v740 = vld [vmem:[#allocation6 + $0xe00] sm:$0xff]
    %v741 = vld [vmem:[#allocation6 + $0xe08] sm:$0xff]
    %v742 = vld [vmem:[#allocation6 + $0xe10] sm:$0xff]
    %v743 = vld [vmem:[#allocation6 + $0xe18] sm:$0xff]
    %v744 = vld [vmem:[#allocation6 + $0xe20] sm:$0xff]
    %v745 = vld [vmem:[#allocation6 + $0xe28] sm:$0xff]
    %v746 = vld [vmem:[#allocation6 + $0xe30] sm:$0xff]
    %v747 = vld [vmem:[#allocation6 + $0xe38] sm:$0xff]
    %v748 = vld [vmem:[#allocation6 + $0xe40] sm:$0xff]
    %v749 = vld [vmem:[#allocation6 + $0xe48] sm:$0xff]
    %v750 = vld [vmem:[#allocation6 + $0xe50] sm:$0xff]
    %v751 = vld [vmem:[#allocation6 + $0xe58] sm:$0xff]
    %v752 = vld [vmem:[#allocation6 + $0xe60] sm:$0xff]
    %v753 = vld [vmem:[#allocation6 + $0xe68] sm:$0xff]
    %v754 = vld [vmem:[#allocation6 + $0xe70] sm:$0xff]
    %v755 = vld [vmem:[#allocation6 + $0xe78] sm:$0xff]
    %v756 = vld [vmem:[#allocation6 + $0xe80] sm:$0xff]
    %v757 = vld [vmem:[#allocation6 + $0xe88] sm:$0xff]
    %v758 = vld [vmem:[#allocation6 + $0xe90] sm:$0xff]
    %v759 = vld [vmem:[#allocation6 + $0xe98] sm:$0xff]
    %v760 = vld [vmem:[#allocation6 + $0xea0] sm:$0xff]
    %v761 = vld [vmem:[#allocation6 + $0xea8] sm:$0xff]
    %v762 = vld [vmem:[#allocation6 + $0xeb0] sm:$0xff]
    %v763 = vld [vmem:[#allocation6 + $0xeb8] sm:$0xff]
    %v764 = vld [vmem:[#allocation6 + $0xec0] sm:$0xff]
    %v765 = vld [vmem:[#allocation6 + $0xec8] sm:$0xff]
    %v766 = vld [vmem:[#allocation6 + $0xed0] sm:$0xff]
    %v767 = vld [vmem:[#allocation6 + $0xed8] sm:$0xff]
    %v768 = vld [vmem:[#allocation6 + $0xee0] sm:$0xff]
    %v769 = vld [vmem:[#allocation6 + $0xee8] sm:$0xff]
    %v770 = vld [vmem:[#allocation6 + $0xef0] sm:$0xff]
    %v771 = vld [vmem:[#allocation6 + $0xef8] sm:$0xff]
    %v772 = vld [vmem:[#allocation6 + $0xf00] sm:$0xff]
    %v773 = vld [vmem:[#allocation6 + $0xf08] sm:$0xff]
    %v774 = vld [vmem:[#allocation6 + $0xf10] sm:$0xff]
    %v775 = vld [vmem:[#allocation6 + $0xf18] sm:$0xff]
    %v776 = vld [vmem:[#allocation6 + $0xf20] sm:$0xff]
    %v777 = vld [vmem:[#allocation6 + $0xf28] sm:$0xff]
    %v778 = vld [vmem:[#allocation6 + $0xf30] sm:$0xff]
    %v779 = vld [vmem:[#allocation6 + $0xf38] sm:$0xff]
    %v780 = vld [vmem:[#allocation6 + $0xf40] sm:$0xff]
    %v781 = vld [vmem:[#allocation6 + $0xf48] sm:$0xff]
    %v782 = vld [vmem:[#allocation6 + $0xf50] sm:$0xff]
    %v783 = vld [vmem:[#allocation6 + $0xf58] sm:$0xff]
    %v784 = vld [vmem:[#allocation6 + $0xf60] sm:$0xff]
    %v785 = vld [vmem:[#allocation6 + $0xf68] sm:$0xff]
    %v786 = vld [vmem:[#allocation6 + $0xf70] sm:$0xff]
    %v787 = vld [vmem:[#allocation6 + $0xf78] sm:$0xff]
    %v788 = vld [vmem:[#allocation6 + $0xf80] sm:$0xff]
    %v789 = vld [vmem:[#allocation6 + $0xf88] sm:$0xff]
    %v790 = vld [vmem:[#allocation6 + $0xf90] sm:$0xff]
    %v791 = vld [vmem:[#allocation6 + $0xf98] sm:$0xff]
    %v792 = vld [vmem:[#allocation6 + $0xfa0] sm:$0xff]
    %v793 = vld [vmem:[#allocation6 + $0xfa8] sm:$0xff]
    %v794 = vld [vmem:[#allocation6 + $0xfb0] sm:$0xff]
    %v795 = vld [vmem:[#allocation6 + $0xfb8] sm:$0xff]
    %v796 = vld [vmem:[#allocation6 + $0xfc0] sm:$0xff]
    %v797 = vld [vmem:[#allocation6 + $0xfc8] sm:$0xff]
    %v798 = vld [vmem:[#allocation6 + $0xfd0] sm:$0xff]
    %v799 = vld [vmem:[#allocation6 + $0xfd8] sm:$0xff]
    %v800 = vld [vmem:[#allocation6 + $0xfe0] sm:$0xff]
    %v801 = vld [vmem:[#allocation6 + $0xfe8] sm:$0xff]
    %v802 = vld [vmem:[#allocation6 + $0xff0] sm:$0xff]
    %v803 = vld [vmem:[#allocation6 + $0xff8] sm:$0xff]
    %v804 = vld [vmem:[#allocation7] sm:$0xff]
    %v805 = vpack.c.bf16 %v123, %v123
    %v806 = vpack.c.bf16 %v129, %v129
    %v807 = vpack.c.bf16 %v135, %v135
    %v808 = vpack.c.bf16 %v141, %v141
    %v809 = vpack.c.bf16 %v147, %v147
    %v810 = vpack.c.bf16 %v153, %v153
    %v811 = vpack.c.bf16 %v159, %v159
    %v812 = vpack.c.bf16 %v165, %v165
    %v813 = vpack.c.bf16 %v171, %v171
    %v814 = vpack.c.bf16 %v177, %v177
    %v815 = vpack.c.bf16 %v183, %v183
    %v816 = vpack.c.bf16 %v189, %v189
    %v817 = vpack.c.bf16 %v195, %v195
    %v818 = vpack.c.bf16 %v201, %v201
    %v819 = vpack.c.bf16 %v207, %v207
    %v820 = vpack.c.bf16 %v213, %v213
    %v822 = vlaneseq
    %v823 = vshrl.u32 %v822, 7
    %v824 = vsub.s32 0, %v823
    %v825 = vrot.slane %v804, %v824
    %v826 = vlaneseq
    %v827 = vshrl.u32 %v826, 7
    %v828 = vsub.s32 1, %v827
    %v829 = vrot.slane %v804, %v828
    %v830 = vlaneseq
    %v831 = vshrl.u32 %v830, 7
    %v832 = vsub.s32 2, %v831
    %v833 = vrot.slane %v804, %v832
    %v834 = vlaneseq
    %v835 = vshrl.u32 %v834, 7
    %v836 = vsub.s32 3, %v835
    %v837 = vrot.slane %v804, %v836
    %v838 = vlaneseq
    %v839 = vshrl.u32 %v838, 7
    %v840 = vsub.s32 4, %v839
    %v841 = vrot.slane %v804, %v840
    %v842 = vlaneseq
    %v843 = vshrl.u32 %v842, 7
    %v844 = vsub.s32 5, %v843
    %v845 = vrot.slane %v804, %v844
    %v846 = vlaneseq
    %v847 = vshrl.u32 %v846, 7
    %v848 = vsub.s32 6, %v847
    %v849 = vrot.slane %v804, %v848
    %v850 = vlaneseq
    %v851 = vshrl.u32 %v850, 7
    %v852 = vsub.s32 7, %v851
    %v853 = vrot.slane %v804, %v852
    %v878 = vunpack.c.l.b16 %v805
    %v879 = vunpack.c.l.b16 %v806
    %v880 = vunpack.c.l.b16 %v807
    %v881 = vunpack.c.l.b16 %v808
    %v882 = vunpack.c.l.b16 %v809
    %v883 = vunpack.c.l.b16 %v810
    %v884 = vunpack.c.l.b16 %v811
    %v885 = vunpack.c.l.b16 %v812
    %v886 = vunpack.c.l.b16 %v813
    %v887 = vunpack.c.l.b16 %v814
    %v888 = vunpack.c.l.b16 %v815
    %v889 = vunpack.c.l.b16 %v816
    %v890 = vunpack.c.l.b16 %v817
    %v891 = vunpack.c.l.b16 %v818
    %v892 = vunpack.c.l.b16 %v819
    %v893 = vunpack.c.l.b16 %v820
    %vm894 = vcmask 1041409
    %v895 = vsel %vm894, %v886, %v878
    %v896 = vsel %vm894, %v887, %v879
    %v897 = vsel %vm894, %v888, %v880
    %v898 = vsel %vm894, %v889, %v881
    %v899 = vsel %vm894, %v890, %v882
    %v900 = vsel %vm894, %v891, %v883
    %v901 = vsel %vm894, %v892, %v884
    %v902 = vsel %vm894, %v893, %v885
    %v903 = vpack.c.b16 %v895, %v895
    %v904 = vpack.c.b16 %v896, %v896
    %v905 = vpack.c.b16 %v897, %v897
    %v906 = vpack.c.b16 %v898, %v898
    %v907 = vpack.c.b16 %v899, %v899
    %v908 = vpack.c.b16 %v900, %v900
    %v909 = vpack.c.b16 %v901, %v901
    %v910 = vpack.c.b16 %v902, %v902
    %v1431 = vunpack.c.l.b16 %v292
    %v1432 = vunpack.c.h.b16 %v292
    %v1433 = vunpack.c.l.b16 %v293
    %v1434 = vunpack.c.h.b16 %v293
    %v1435 = vunpack.c.l.b16 %v294
    %v1436 = vunpack.c.h.b16 %v294
    %v1437 = vunpack.c.l.b16 %v295
    %v1438 = vunpack.c.h.b16 %v295
    %v1439 = vunpack.c.l.b16 %v296
    %v1440 = vunpack.c.h.b16 %v296
    %v1441 = vunpack.c.l.b16 %v297
    %v1442 = vunpack.c.h.b16 %v297
    %v1443 = vunpack.c.l.b16 %v298
    %v1444 = vunpack.c.h.b16 %v298
    %v1445 = vunpack.c.l.b16 %v299
    %v1446 = vunpack.c.h.b16 %v299
    %v1447 = vunpack.c.l.b16 %v300
    %v1448 = vunpack.c.h.b16 %v300
    %v1449 = vunpack.c.l.b16 %v301
    %v1450 = vunpack.c.h.b16 %v301
    %v1451 = vunpack.c.l.b16 %v302
    %v1452 = vunpack.c.h.b16 %v302
    %v1453 = vunpack.c.l.b16 %v303
    %v1454 = vunpack.c.h.b16 %v303
    %v1455 = vunpack.c.l.b16 %v304
    %v1456 = vunpack.c.h.b16 %v304
    %v1457 = vunpack.c.l.b16 %v305
    %v1458 = vunpack.c.h.b16 %v305
    %v1459 = vunpack.c.l.b16 %v306
    %v1460 = vunpack.c.h.b16 %v306
    %v1461 = vunpack.c.l.b16 %v307
    %v1462 = vunpack.c.h.b16 %v307
    %v1463 = vunpack.c.l.b16 %v308
    %v1464 = vunpack.c.h.b16 %v308
    %v1465 = vunpack.c.l.b16 %v309
    %v1466 = vunpack.c.h.b16 %v309
    %v1467 = vunpack.c.l.b16 %v310
    %v1468 = vunpack.c.h.b16 %v310
    %v1469 = vunpack.c.l.b16 %v311
    %v1470 = vunpack.c.h.b16 %v311
    %v1471 = vunpack.c.l.b16 %v312
    %v1472 = vunpack.c.h.b16 %v312
    %v1473 = vunpack.c.l.b16 %v313
    %v1474 = vunpack.c.h.b16 %v313
    %v1475 = vunpack.c.l.b16 %v314
    %v1476 = vunpack.c.h.b16 %v314
    %v1477 = vunpack.c.l.b16 %v315
    %v1478 = vunpack.c.h.b16 %v315
    %v1479 = vunpack.c.l.b16 %v316
    %v1480 = vunpack.c.h.b16 %v316
    %v1481 = vunpack.c.l.b16 %v317
    %v1482 = vunpack.c.h.b16 %v317
    %v1483 = vunpack.c.l.b16 %v318
    %v1484 = vunpack.c.h.b16 %v318
    %v1485 = vunpack.c.l.b16 %v319
    %v1486 = vunpack.c.h.b16 %v319
    %v1487 = vunpack.c.l.b16 %v320
    %v1488 = vunpack.c.h.b16 %v320
    %v1489 = vunpack.c.l.b16 %v321
    %v1490 = vunpack.c.h.b16 %v321
    %v1491 = vunpack.c.l.b16 %v322
    %v1492 = vunpack.c.h.b16 %v322
    %v1493 = vunpack.c.l.b16 %v323
    %v1494 = vunpack.c.h.b16 %v323
    %v1495 = vunpack.c.l.b16 %v324
    %v1496 = vunpack.c.h.b16 %v324
    %v1497 = vunpack.c.l.b16 %v325
    %v1498 = vunpack.c.h.b16 %v325
    %v1499 = vunpack.c.l.b16 %v326
    %v1500 = vunpack.c.h.b16 %v326
    %v1501 = vunpack.c.l.b16 %v327
    %v1502 = vunpack.c.h.b16 %v327
    %v1503 = vunpack.c.l.b16 %v328
    %v1504 = vunpack.c.h.b16 %v328
    %v1505 = vunpack.c.l.b16 %v329
    %v1506 = vunpack.c.h.b16 %v329
    %v1507 = vunpack.c.l.b16 %v330
    %v1508 = vunpack.c.h.b16 %v330
    %v1509 = vunpack.c.l.b16 %v331
    %v1510 = vunpack.c.h.b16 %v331
    %v1511 = vunpack.c.l.b16 %v332
    %v1512 = vunpack.c.h.b16 %v332
    %v1513 = vunpack.c.l.b16 %v333
    %v1514 = vunpack.c.h.b16 %v333
    %v1515 = vunpack.c.l.b16 %v334
    %v1516 = vunpack.c.h.b16 %v334
    %v1517 = vunpack.c.l.b16 %v335
    %v1518 = vunpack.c.h.b16 %v335
    %v1519 = vunpack.c.l.b16 %v336
    %v1520 = vunpack.c.h.b16 %v336
    %v1521 = vunpack.c.l.b16 %v337
    %v1522 = vunpack.c.h.b16 %v337
    %v1523 = vunpack.c.l.b16 %v338
    %v1524 = vunpack.c.h.b16 %v338
    %v1525 = vunpack.c.l.b16 %v339
    %v1526 = vunpack.c.h.b16 %v339
    %v1527 = vunpack.c.l.b16 %v340
    %v1528 = vunpack.c.h.b16 %v340
    %v1529 = vunpack.c.l.b16 %v341
    %v1530 = vunpack.c.h.b16 %v341
    %v1531 = vunpack.c.l.b16 %v342
    %v1532 = vunpack.c.h.b16 %v342
    %v1533 = vunpack.c.l.b16 %v343
    %v1534 = vunpack.c.h.b16 %v343
    %v1535 = vunpack.c.l.b16 %v344
    %v1536 = vunpack.c.h.b16 %v344
    %v1537 = vunpack.c.l.b16 %v345
    %v1538 = vunpack.c.h.b16 %v345
    %v1539 = vunpack.c.l.b16 %v346
    %v1540 = vunpack.c.h.b16 %v346
    %v1541 = vunpack.c.l.b16 %v347
    %v1542 = vunpack.c.h.b16 %v347
    %v1543 = vunpack.c.l.b16 %v348
    %v1544 = vunpack.c.h.b16 %v348
    %v1545 = vunpack.c.l.b16 %v349
    %v1546 = vunpack.c.h.b16 %v349
    %v1547 = vunpack.c.l.b16 %v350
    %v1548 = vunpack.c.h.b16 %v350
    %v1549 = vunpack.c.l.b16 %v351
    %v1550 = vunpack.c.h.b16 %v351
    %v1551 = vunpack.c.l.b16 %v352
    %v1552 = vunpack.c.h.b16 %v352
    %v1553 = vunpack.c.l.b16 %v353
    %v1554 = vunpack.c.h.b16 %v353
    %v1555 = vunpack.c.l.b16 %v354
    %v1556 = vunpack.c.h.b16 %v354
    %v1557 = vunpack.c.l.b16 %v355
    %v1558 = vunpack.c.h.b16 %v355
    %v1559 = vunpack.c.l.b16 %v356
    %v1560 = vunpack.c.h.b16 %v356
    %v1561 = vunpack.c.l.b16 %v357
    %v1562 = vunpack.c.h.b16 %v357
    %v1563 = vunpack.c.l.b16 %v358
    %v1564 = vunpack.c.h.b16 %v358
    %v1565 = vunpack.c.l.b16 %v359
    %v1566 = vunpack.c.h.b16 %v359
    %v1567 = vunpack.c.l.b16 %v360
    %v1568 = vunpack.c.h.b16 %v360
    %v1569 = vunpack.c.l.b16 %v361
    %v1570 = vunpack.c.h.b16 %v361
    %v1571 = vunpack.c.l.b16 %v362
    %v1572 = vunpack.c.h.b16 %v362
    %v1573 = vunpack.c.l.b16 %v363
    %v1574 = vunpack.c.h.b16 %v363
    %v1575 = vunpack.c.l.b16 %v364
    %v1576 = vunpack.c.h.b16 %v364
    %v1577 = vunpack.c.l.b16 %v365
    %v1578 = vunpack.c.h.b16 %v365
    %v1579 = vunpack.c.l.b16 %v366
    %v1580 = vunpack.c.h.b16 %v366
    %v1581 = vunpack.c.l.b16 %v367
    %v1582 = vunpack.c.h.b16 %v367
    %v1583 = vunpack.c.l.b16 %v368
    %v1584 = vunpack.c.h.b16 %v368
    %v1585 = vunpack.c.l.b16 %v369
    %v1586 = vunpack.c.h.b16 %v369
    %v1587 = vunpack.c.l.b16 %v370
    %v1588 = vunpack.c.h.b16 %v370
    %v1589 = vunpack.c.l.b16 %v371
    %v1590 = vunpack.c.h.b16 %v371
    %v1591 = vunpack.c.l.b16 %v372
    %v1592 = vunpack.c.h.b16 %v372
    %v1593 = vunpack.c.l.b16 %v373
    %v1594 = vunpack.c.h.b16 %v373
    %v1595 = vunpack.c.l.b16 %v374
    %v1596 = vunpack.c.h.b16 %v374
    %v1597 = vunpack.c.l.b16 %v375
    %v1598 = vunpack.c.h.b16 %v375
    %v1599 = vunpack.c.l.b16 %v376
    %v1600 = vunpack.c.h.b16 %v376
    %v1601 = vunpack.c.l.b16 %v377
    %v1602 = vunpack.c.h.b16 %v377
    %v1603 = vunpack.c.l.b16 %v378
    %v1604 = vunpack.c.h.b16 %v378
    %v1605 = vunpack.c.l.b16 %v379
    %v1606 = vunpack.c.h.b16 %v379
    %v1607 = vunpack.c.l.b16 %v380
    %v1608 = vunpack.c.h.b16 %v380
    %v1609 = vunpack.c.l.b16 %v381
    %v1610 = vunpack.c.h.b16 %v381
    %v1611 = vunpack.c.l.b16 %v382
    %v1612 = vunpack.c.h.b16 %v382
    %v1613 = vunpack.c.l.b16 %v383
    %v1614 = vunpack.c.h.b16 %v383
    %v1615 = vunpack.c.l.b16 %v384
    %v1616 = vunpack.c.h.b16 %v384
    %v1617 = vunpack.c.l.b16 %v385
    %v1618 = vunpack.c.h.b16 %v385
    %v1619 = vunpack.c.l.b16 %v386
    %v1620 = vunpack.c.h.b16 %v386
    %v1621 = vunpack.c.l.b16 %v387
    %v1622 = vunpack.c.h.b16 %v387
    %v1623 = vunpack.c.l.b16 %v388
    %v1624 = vunpack.c.h.b16 %v388
    %v1625 = vunpack.c.l.b16 %v389
    %v1626 = vunpack.c.h.b16 %v389
    %v1627 = vunpack.c.l.b16 %v390
    %v1628 = vunpack.c.h.b16 %v390
    %v1629 = vunpack.c.l.b16 %v391
    %v1630 = vunpack.c.h.b16 %v391
    %v1631 = vunpack.c.l.b16 %v392
    %v1632 = vunpack.c.h.b16 %v392
    %v1633 = vunpack.c.l.b16 %v393
    %v1634 = vunpack.c.h.b16 %v393
    %v1635 = vunpack.c.l.b16 %v394
    %v1636 = vunpack.c.h.b16 %v394
    %v1637 = vunpack.c.l.b16 %v395
    %v1638 = vunpack.c.h.b16 %v395
    %v1639 = vunpack.c.l.b16 %v396
    %v1640 = vunpack.c.h.b16 %v396
    %v1641 = vunpack.c.l.b16 %v397
    %v1642 = vunpack.c.h.b16 %v397
    %v1643 = vunpack.c.l.b16 %v398
    %v1644 = vunpack.c.h.b16 %v398
    %v1645 = vunpack.c.l.b16 %v399
    %v1646 = vunpack.c.h.b16 %v399
    %v1647 = vunpack.c.l.b16 %v400
    %v1648 = vunpack.c.h.b16 %v400
    %v1649 = vunpack.c.l.b16 %v401
    %v1650 = vunpack.c.h.b16 %v401
    %v1651 = vunpack.c.l.b16 %v402
    %v1652 = vunpack.c.h.b16 %v402
    %v1653 = vunpack.c.l.b16 %v403
    %v1654 = vunpack.c.h.b16 %v403
    %v1655 = vunpack.c.l.b16 %v404
    %v1656 = vunpack.c.h.b16 %v404
    %v1657 = vunpack.c.l.b16 %v405
    %v1658 = vunpack.c.h.b16 %v405
    %v1659 = vunpack.c.l.b16 %v406
    %v1660 = vunpack.c.h.b16 %v406
    %v1661 = vunpack.c.l.b16 %v407
    %v1662 = vunpack.c.h.b16 %v407
    %v1663 = vunpack.c.l.b16 %v408
    %v1664 = vunpack.c.h.b16 %v408
    %v1665 = vunpack.c.l.b16 %v409
    %v1666 = vunpack.c.h.b16 %v409
    %v1667 = vunpack.c.l.b16 %v410
    %v1668 = vunpack.c.h.b16 %v410
    %v1669 = vunpack.c.l.b16 %v411
    %v1670 = vunpack.c.h.b16 %v411
    %v1671 = vunpack.c.l.b16 %v412
    %v1672 = vunpack.c.h.b16 %v412
    %v1673 = vunpack.c.l.b16 %v413
    %v1674 = vunpack.c.h.b16 %v413
    %v1675 = vunpack.c.l.b16 %v414
    %v1676 = vunpack.c.h.b16 %v414
    %v1677 = vunpack.c.l.b16 %v415
    %v1678 = vunpack.c.h.b16 %v415
    %v1679 = vunpack.c.l.b16 %v416
    %v1680 = vunpack.c.h.b16 %v416
    %v1681 = vunpack.c.l.b16 %v417
    %v1682 = vunpack.c.h.b16 %v417
    %v1683 = vunpack.c.l.b16 %v418
    %v1684 = vunpack.c.h.b16 %v418
    %v1685 = vunpack.c.l.b16 %v419
    %v1686 = vunpack.c.h.b16 %v419
    %v1687 = vunpack.c.l.b16 %v420
    %v1688 = vunpack.c.h.b16 %v420
    %v1689 = vunpack.c.l.b16 %v421
    %v1690 = vunpack.c.h.b16 %v421
    %v1691 = vunpack.c.l.b16 %v422
    %v1692 = vunpack.c.h.b16 %v422
    %v1693 = vunpack.c.l.b16 %v423
    %v1694 = vunpack.c.h.b16 %v423
    %v1695 = vunpack.c.l.b16 %v424
    %v1696 = vunpack.c.h.b16 %v424
    %v1697 = vunpack.c.l.b16 %v425
    %v1698 = vunpack.c.h.b16 %v425
    %v1699 = vunpack.c.l.b16 %v426
    %v1700 = vunpack.c.h.b16 %v426
    %v1701 = vunpack.c.l.b16 %v427
    %v1702 = vunpack.c.h.b16 %v427
    %v1703 = vunpack.c.l.b16 %v428
    %v1704 = vunpack.c.h.b16 %v428
    %v1705 = vunpack.c.l.b16 %v429
    %v1706 = vunpack.c.h.b16 %v429
    %v1707 = vunpack.c.l.b16 %v430
    %v1708 = vunpack.c.h.b16 %v430
    %v1709 = vunpack.c.l.b16 %v431
    %v1710 = vunpack.c.h.b16 %v431
    %v1711 = vunpack.c.l.b16 %v432
    %v1712 = vunpack.c.h.b16 %v432
    %v1713 = vunpack.c.l.b16 %v433
    %v1714 = vunpack.c.h.b16 %v433
    %v1715 = vunpack.c.l.b16 %v434
    %v1716 = vunpack.c.h.b16 %v434
    %v1717 = vunpack.c.l.b16 %v435
    %v1718 = vunpack.c.h.b16 %v435
    %v1719 = vunpack.c.l.b16 %v436
    %v1720 = vunpack.c.h.b16 %v436
    %v1721 = vunpack.c.l.b16 %v437
    %v1722 = vunpack.c.h.b16 %v437
    %v1723 = vunpack.c.l.b16 %v438
    %v1724 = vunpack.c.h.b16 %v438
    %v1725 = vunpack.c.l.b16 %v439
    %v1726 = vunpack.c.h.b16 %v439
    %v1727 = vunpack.c.l.b16 %v440
    %v1728 = vunpack.c.h.b16 %v440
    %v1729 = vunpack.c.l.b16 %v441
    %v1730 = vunpack.c.h.b16 %v441
    %v1731 = vunpack.c.l.b16 %v442
    %v1732 = vunpack.c.h.b16 %v442
    %v1733 = vunpack.c.l.b16 %v443
    %v1734 = vunpack.c.h.b16 %v443
    %v1735 = vunpack.c.l.b16 %v444
    %v1736 = vunpack.c.h.b16 %v444
    %v1737 = vunpack.c.l.b16 %v445
    %v1738 = vunpack.c.h.b16 %v445
    %v1739 = vunpack.c.l.b16 %v446
    %v1740 = vunpack.c.h.b16 %v446
    %v1741 = vunpack.c.l.b16 %v447
    %v1742 = vunpack.c.h.b16 %v447
    %v1743 = vunpack.c.l.b16 %v448
    %v1744 = vunpack.c.h.b16 %v448
    %v1745 = vunpack.c.l.b16 %v449
    %v1746 = vunpack.c.h.b16 %v449
    %v1747 = vunpack.c.l.b16 %v450
    %v1748 = vunpack.c.h.b16 %v450
    %v1749 = vunpack.c.l.b16 %v451
    %v1750 = vunpack.c.h.b16 %v451
    %v1751 = vunpack.c.l.b16 %v452
    %v1752 = vunpack.c.h.b16 %v452
    %v1753 = vunpack.c.l.b16 %v453
    %v1754 = vunpack.c.h.b16 %v453
    %v1755 = vunpack.c.l.b16 %v454
    %v1756 = vunpack.c.h.b16 %v454
    %v1757 = vunpack.c.l.b16 %v455
    %v1758 = vunpack.c.h.b16 %v455
    %v1759 = vunpack.c.l.b16 %v456
    %v1760 = vunpack.c.h.b16 %v456
    %v1761 = vunpack.c.l.b16 %v457
    %v1762 = vunpack.c.h.b16 %v457
    %v1763 = vunpack.c.l.b16 %v458
    %v1764 = vunpack.c.h.b16 %v458
    %v1765 = vunpack.c.l.b16 %v459
    %v1766 = vunpack.c.h.b16 %v459
    %v1767 = vunpack.c.l.b16 %v460
    %v1768 = vunpack.c.h.b16 %v460
    %v1769 = vunpack.c.l.b16 %v461
    %v1770 = vunpack.c.h.b16 %v461
    %v1771 = vunpack.c.l.b16 %v462
    %v1772 = vunpack.c.h.b16 %v462
    %v1773 = vunpack.c.l.b16 %v463
    %v1774 = vunpack.c.h.b16 %v463
    %v1775 = vunpack.c.l.b16 %v464
    %v1776 = vunpack.c.h.b16 %v464
    %v1777 = vunpack.c.l.b16 %v465
    %v1778 = vunpack.c.h.b16 %v465
    %v1779 = vunpack.c.l.b16 %v466
    %v1780 = vunpack.c.h.b16 %v466
    %v1781 = vunpack.c.l.b16 %v467
    %v1782 = vunpack.c.h.b16 %v467
    %v1783 = vunpack.c.l.b16 %v468
    %v1784 = vunpack.c.h.b16 %v468
    %v1785 = vunpack.c.l.b16 %v469
    %v1786 = vunpack.c.h.b16 %v469
    %v1787 = vunpack.c.l.b16 %v470
    %v1788 = vunpack.c.h.b16 %v470
    %v1789 = vunpack.c.l.b16 %v471
    %v1790 = vunpack.c.h.b16 %v471
    %v1791 = vunpack.c.l.b16 %v472
    %v1792 = vunpack.c.h.b16 %v472
    %v1793 = vunpack.c.l.b16 %v473
    %v1794 = vunpack.c.h.b16 %v473
    %v1795 = vunpack.c.l.b16 %v474
    %v1796 = vunpack.c.h.b16 %v474
    %v1797 = vunpack.c.l.b16 %v475
    %v1798 = vunpack.c.h.b16 %v475
    %v1799 = vunpack.c.l.b16 %v476
    %v1800 = vunpack.c.h.b16 %v476
    %v1801 = vunpack.c.l.b16 %v477
    %v1802 = vunpack.c.h.b16 %v477
    %v1803 = vunpack.c.l.b16 %v478
    %v1804 = vunpack.c.h.b16 %v478
    %v1805 = vunpack.c.l.b16 %v479
    %v1806 = vunpack.c.h.b16 %v479
    %v1807 = vunpack.c.l.b16 %v480
    %v1808 = vunpack.c.h.b16 %v480
    %v1809 = vunpack.c.l.b16 %v481
    %v1810 = vunpack.c.h.b16 %v481
    %v1811 = vunpack.c.l.b16 %v482
    %v1812 = vunpack.c.h.b16 %v482
    %v1813 = vunpack.c.l.b16 %v483
    %v1814 = vunpack.c.h.b16 %v483
    %v1815 = vunpack.c.l.b16 %v484
    %v1816 = vunpack.c.h.b16 %v484
    %v1817 = vunpack.c.l.b16 %v485
    %v1818 = vunpack.c.h.b16 %v485
    %v1819 = vunpack.c.l.b16 %v486
    %v1820 = vunpack.c.h.b16 %v486
    %v1821 = vunpack.c.l.b16 %v487
    %v1822 = vunpack.c.h.b16 %v487
    %v1823 = vunpack.c.l.b16 %v488
    %v1824 = vunpack.c.h.b16 %v488
    %v1825 = vunpack.c.l.b16 %v489
    %v1826 = vunpack.c.h.b16 %v489
    %v1827 = vunpack.c.l.b16 %v490
    %v1828 = vunpack.c.h.b16 %v490
    %v1829 = vunpack.c.l.b16 %v491
    %v1830 = vunpack.c.h.b16 %v491
    %v1831 = vunpack.c.l.b16 %v492
    %v1832 = vunpack.c.h.b16 %v492
    %v1833 = vunpack.c.l.b16 %v493
    %v1834 = vunpack.c.h.b16 %v493
    %v1835 = vunpack.c.l.b16 %v494
    %v1836 = vunpack.c.h.b16 %v494
    %v1837 = vunpack.c.l.b16 %v495
    %v1838 = vunpack.c.h.b16 %v495
    %v1839 = vunpack.c.l.b16 %v496
    %v1840 = vunpack.c.h.b16 %v496
    %v1841 = vunpack.c.l.b16 %v497
    %v1842 = vunpack.c.h.b16 %v497
    %v1843 = vunpack.c.l.b16 %v498
    %v1844 = vunpack.c.h.b16 %v498
    %v1845 = vunpack.c.l.b16 %v499
    %v1846 = vunpack.c.h.b16 %v499
    %v1847 = vunpack.c.l.b16 %v500
    %v1848 = vunpack.c.h.b16 %v500
    %v1849 = vunpack.c.l.b16 %v501
    %v1850 = vunpack.c.h.b16 %v501
    %v1851 = vunpack.c.l.b16 %v502
    %v1852 = vunpack.c.h.b16 %v502
    %v1853 = vunpack.c.l.b16 %v503
    %v1854 = vunpack.c.h.b16 %v503
    %v1855 = vunpack.c.l.b16 %v504
    %v1856 = vunpack.c.h.b16 %v504
    %v1857 = vunpack.c.l.b16 %v505
    %v1858 = vunpack.c.h.b16 %v505
    %v1859 = vunpack.c.l.b16 %v506
    %v1860 = vunpack.c.h.b16 %v506
    %v1861 = vunpack.c.l.b16 %v507
    %v1862 = vunpack.c.h.b16 %v507
    %v1863 = vunpack.c.l.b16 %v508
    %v1864 = vunpack.c.h.b16 %v508
    %v1865 = vunpack.c.l.b16 %v509
    %v1866 = vunpack.c.h.b16 %v509
    %v1867 = vunpack.c.l.b16 %v510
    %v1868 = vunpack.c.h.b16 %v510
    %v1869 = vunpack.c.l.b16 %v511
    %v1870 = vunpack.c.h.b16 %v511
    %v1871 = vunpack.c.l.b16 %v512
    %v1872 = vunpack.c.h.b16 %v512
    %v1873 = vunpack.c.l.b16 %v513
    %v1874 = vunpack.c.h.b16 %v513
    %v1875 = vunpack.c.l.b16 %v514
    %v1876 = vunpack.c.h.b16 %v514
    %v1877 = vunpack.c.l.b16 %v515
    %v1878 = vunpack.c.h.b16 %v515
    %v1879 = vunpack.c.l.b16 %v516
    %v1880 = vunpack.c.h.b16 %v516
    %v1881 = vunpack.c.l.b16 %v517
    %v1882 = vunpack.c.h.b16 %v517
    %v1883 = vunpack.c.l.b16 %v518
    %v1884 = vunpack.c.h.b16 %v518
    %v1885 = vunpack.c.l.b16 %v519
    %v1886 = vunpack.c.h.b16 %v519
    %v1887 = vunpack.c.l.b16 %v520
    %v1888 = vunpack.c.h.b16 %v520
    %v1889 = vunpack.c.l.b16 %v521
    %v1890 = vunpack.c.h.b16 %v521
    %v1891 = vunpack.c.l.b16 %v522
    %v1892 = vunpack.c.h.b16 %v522
    %v1893 = vunpack.c.l.b16 %v523
    %v1894 = vunpack.c.h.b16 %v523
    %v1895 = vunpack.c.l.b16 %v524
    %v1896 = vunpack.c.h.b16 %v524
    %v1897 = vunpack.c.l.b16 %v525
    %v1898 = vunpack.c.h.b16 %v525
    %v1899 = vunpack.c.l.b16 %v526
    %v1900 = vunpack.c.h.b16 %v526
    %v1901 = vunpack.c.l.b16 %v527
    %v1902 = vunpack.c.h.b16 %v527
    %v1903 = vunpack.c.l.b16 %v528
    %v1904 = vunpack.c.h.b16 %v528
    %v1905 = vunpack.c.l.b16 %v529
    %v1906 = vunpack.c.h.b16 %v529
    %v1907 = vunpack.c.l.b16 %v530
    %v1908 = vunpack.c.h.b16 %v530
    %v1909 = vunpack.c.l.b16 %v531
    %v1910 = vunpack.c.h.b16 %v531
    %v1911 = vunpack.c.l.b16 %v532
    %v1912 = vunpack.c.h.b16 %v532
    %v1913 = vunpack.c.l.b16 %v533
    %v1914 = vunpack.c.h.b16 %v533
    %v1915 = vunpack.c.l.b16 %v534
    %v1916 = vunpack.c.h.b16 %v534
    %v1917 = vunpack.c.l.b16 %v535
    %v1918 = vunpack.c.h.b16 %v535
    %v1919 = vunpack.c.l.b16 %v536
    %v1920 = vunpack.c.h.b16 %v536
    %v1921 = vunpack.c.l.b16 %v537
    %v1922 = vunpack.c.h.b16 %v537
    %v1923 = vunpack.c.l.b16 %v538
    %v1924 = vunpack.c.h.b16 %v538
    %v1925 = vunpack.c.l.b16 %v539
    %v1926 = vunpack.c.h.b16 %v539
    %v1927 = vunpack.c.l.b16 %v540
    %v1928 = vunpack.c.h.b16 %v540
    %v1929 = vunpack.c.l.b16 %v541
    %v1930 = vunpack.c.h.b16 %v541
    %v1931 = vunpack.c.l.b16 %v542
    %v1932 = vunpack.c.h.b16 %v542
    %v1933 = vunpack.c.l.b16 %v543
    %v1934 = vunpack.c.h.b16 %v543
    %v1935 = vunpack.c.l.b16 %v544
    %v1936 = vunpack.c.h.b16 %v544
    %v1937 = vunpack.c.l.b16 %v545
    %v1938 = vunpack.c.h.b16 %v545
    %v1939 = vunpack.c.l.b16 %v546
    %v1940 = vunpack.c.h.b16 %v546
    %v1941 = vunpack.c.l.b16 %v547
    %v1942 = vunpack.c.h.b16 %v547
    %v1943 = vunpack.c.l.b16 %v548
    %v1944 = vunpack.c.h.b16 %v548
    %v1945 = vunpack.c.l.b16 %v549
    %v1946 = vunpack.c.h.b16 %v549
    %v1947 = vunpack.c.l.b16 %v550
    %v1948 = vunpack.c.h.b16 %v550
    %v1949 = vunpack.c.l.b16 %v551
    %v1950 = vunpack.c.h.b16 %v551
    %v1951 = vunpack.c.l.b16 %v552
    %v1952 = vunpack.c.h.b16 %v552
    %v1953 = vunpack.c.l.b16 %v553
    %v1954 = vunpack.c.h.b16 %v553
    %v1955 = vunpack.c.l.b16 %v554
    %v1956 = vunpack.c.h.b16 %v554
    %v1957 = vunpack.c.l.b16 %v555
    %v1958 = vunpack.c.h.b16 %v555
    %v1959 = vunpack.c.l.b16 %v556
    %v1960 = vunpack.c.h.b16 %v556
    %v1961 = vunpack.c.l.b16 %v557
    %v1962 = vunpack.c.h.b16 %v557
    %v1963 = vunpack.c.l.b16 %v558
    %v1964 = vunpack.c.h.b16 %v558
    %v1965 = vunpack.c.l.b16 %v559
    %v1966 = vunpack.c.h.b16 %v559
    %v1967 = vunpack.c.l.b16 %v560
    %v1968 = vunpack.c.h.b16 %v560
    %v1969 = vunpack.c.l.b16 %v561
    %v1970 = vunpack.c.h.b16 %v561
    %v1971 = vunpack.c.l.b16 %v562
    %v1972 = vunpack.c.h.b16 %v562
    %v1973 = vunpack.c.l.b16 %v563
    %v1974 = vunpack.c.h.b16 %v563
    %v1975 = vunpack.c.l.b16 %v564
    %v1976 = vunpack.c.h.b16 %v564
    %v1977 = vunpack.c.l.b16 %v565
    %v1978 = vunpack.c.h.b16 %v565
    %v1979 = vunpack.c.l.b16 %v566
    %v1980 = vunpack.c.h.b16 %v566
    %v1981 = vunpack.c.l.b16 %v567
    %v1982 = vunpack.c.h.b16 %v567
    %v1983 = vunpack.c.l.b16 %v568
    %v1984 = vunpack.c.h.b16 %v568
    %v1985 = vunpack.c.l.b16 %v569
    %v1986 = vunpack.c.h.b16 %v569
    %v1987 = vunpack.c.l.b16 %v570
    %v1988 = vunpack.c.h.b16 %v570
    %v1989 = vunpack.c.l.b16 %v571
    %v1990 = vunpack.c.h.b16 %v571
    %v1991 = vunpack.c.l.b16 %v572
    %v1992 = vunpack.c.h.b16 %v572
    %v1993 = vunpack.c.l.b16 %v573
    %v1994 = vunpack.c.h.b16 %v573
    %v1995 = vunpack.c.l.b16 %v574
    %v1996 = vunpack.c.h.b16 %v574
    %v1997 = vunpack.c.l.b16 %v575
    %v1998 = vunpack.c.h.b16 %v575
    %v1999 = vunpack.c.l.b16 %v576
    %v2000 = vunpack.c.h.b16 %v576
    %v2001 = vunpack.c.l.b16 %v577
    %v2002 = vunpack.c.h.b16 %v577
    %v2003 = vunpack.c.l.b16 %v578
    %v2004 = vunpack.c.h.b16 %v578
    %v2005 = vunpack.c.l.b16 %v579
    %v2006 = vunpack.c.h.b16 %v579
    %v2007 = vunpack.c.l.b16 %v580
    %v2008 = vunpack.c.h.b16 %v580
    %v2009 = vunpack.c.l.b16 %v581
    %v2010 = vunpack.c.h.b16 %v581
    %v2011 = vunpack.c.l.b16 %v582
    %v2012 = vunpack.c.h.b16 %v582
    %v2013 = vunpack.c.l.b16 %v583
    %v2014 = vunpack.c.h.b16 %v583
    %v2015 = vunpack.c.l.b16 %v584
    %v2016 = vunpack.c.h.b16 %v584
    %v2017 = vunpack.c.l.b16 %v585
    %v2018 = vunpack.c.h.b16 %v585
    %v2019 = vunpack.c.l.b16 %v586
    %v2020 = vunpack.c.h.b16 %v586
    %v2021 = vunpack.c.l.b16 %v587
    %v2022 = vunpack.c.h.b16 %v587
    %v2023 = vunpack.c.l.b16 %v588
    %v2024 = vunpack.c.h.b16 %v588
    %v2025 = vunpack.c.l.b16 %v589
    %v2026 = vunpack.c.h.b16 %v589
    %v2027 = vunpack.c.l.b16 %v590
    %v2028 = vunpack.c.h.b16 %v590
    %v2029 = vunpack.c.l.b16 %v591
    %v2030 = vunpack.c.h.b16 %v591
    %v2031 = vunpack.c.l.b16 %v592
    %v2032 = vunpack.c.h.b16 %v592
    %v2033 = vunpack.c.l.b16 %v593
    %v2034 = vunpack.c.h.b16 %v593
    %v2035 = vunpack.c.l.b16 %v594
    %v2036 = vunpack.c.h.b16 %v594
    %v2037 = vunpack.c.l.b16 %v595
    %v2038 = vunpack.c.h.b16 %v595
    %v2039 = vunpack.c.l.b16 %v596
    %v2040 = vunpack.c.h.b16 %v596
    %v2041 = vunpack.c.l.b16 %v597
    %v2042 = vunpack.c.h.b16 %v597
    %v2043 = vunpack.c.l.b16 %v598
    %v2044 = vunpack.c.h.b16 %v598
    %v2045 = vunpack.c.l.b16 %v599
    %v2046 = vunpack.c.h.b16 %v599
    %v2047 = vunpack.c.l.b16 %v600
    %v2048 = vunpack.c.h.b16 %v600
    %v2049 = vunpack.c.l.b16 %v601
    %v2050 = vunpack.c.h.b16 %v601
    %v2051 = vunpack.c.l.b16 %v602
    %v2052 = vunpack.c.h.b16 %v602
    %v2053 = vunpack.c.l.b16 %v603
    %v2054 = vunpack.c.h.b16 %v603
    %v2055 = vunpack.c.l.b16 %v604
    %v2056 = vunpack.c.h.b16 %v604
    %v2057 = vunpack.c.l.b16 %v605
    %v2058 = vunpack.c.h.b16 %v605
    %v2059 = vunpack.c.l.b16 %v606
    %v2060 = vunpack.c.h.b16 %v606
    %v2061 = vunpack.c.l.b16 %v607
    %v2062 = vunpack.c.h.b16 %v607
    %v2063 = vunpack.c.l.b16 %v608
    %v2064 = vunpack.c.h.b16 %v608
    %v2065 = vunpack.c.l.b16 %v609
    %v2066 = vunpack.c.h.b16 %v609
    %v2067 = vunpack.c.l.b16 %v610
    %v2068 = vunpack.c.h.b16 %v610
    %v2069 = vunpack.c.l.b16 %v611
    %v2070 = vunpack.c.h.b16 %v611
    %v2071 = vunpack.c.l.b16 %v612
    %v2072 = vunpack.c.h.b16 %v612
    %v2073 = vunpack.c.l.b16 %v613
    %v2074 = vunpack.c.h.b16 %v613
    %v2075 = vunpack.c.l.b16 %v614
    %v2076 = vunpack.c.h.b16 %v614
    %v2077 = vunpack.c.l.b16 %v615
    %v2078 = vunpack.c.h.b16 %v615
    %v2079 = vunpack.c.l.b16 %v616
    %v2080 = vunpack.c.h.b16 %v616
    %v2081 = vunpack.c.l.b16 %v617
    %v2082 = vunpack.c.h.b16 %v617
    %v2083 = vunpack.c.l.b16 %v618
    %v2084 = vunpack.c.h.b16 %v618
    %v2085 = vunpack.c.l.b16 %v619
    %v2086 = vunpack.c.h.b16 %v619
    %v2087 = vunpack.c.l.b16 %v620
    %v2088 = vunpack.c.h.b16 %v620
    %v2089 = vunpack.c.l.b16 %v621
    %v2090 = vunpack.c.h.b16 %v621
    %v2091 = vunpack.c.l.b16 %v622
    %v2092 = vunpack.c.h.b16 %v622
    %v2093 = vunpack.c.l.b16 %v623
    %v2094 = vunpack.c.h.b16 %v623
    %v2095 = vunpack.c.l.b16 %v624
    %v2096 = vunpack.c.h.b16 %v624
    %v2097 = vunpack.c.l.b16 %v625
    %v2098 = vunpack.c.h.b16 %v625
    %v2099 = vunpack.c.l.b16 %v626
    %v2100 = vunpack.c.h.b16 %v626
    %v2101 = vunpack.c.l.b16 %v627
    %v2102 = vunpack.c.h.b16 %v627
    %v2103 = vunpack.c.l.b16 %v628
    %v2104 = vunpack.c.h.b16 %v628
    %v2105 = vunpack.c.l.b16 %v629
    %v2106 = vunpack.c.h.b16 %v629
    %v2107 = vunpack.c.l.b16 %v630
    %v2108 = vunpack.c.h.b16 %v630
    %v2109 = vunpack.c.l.b16 %v631
    %v2110 = vunpack.c.h.b16 %v631
    %v2111 = vunpack.c.l.b16 %v632
    %v2112 = vunpack.c.h.b16 %v632
    %v2113 = vunpack.c.l.b16 %v633
    %v2114 = vunpack.c.h.b16 %v633
    %v2115 = vunpack.c.l.b16 %v634
    %v2116 = vunpack.c.h.b16 %v634
    %v2117 = vunpack.c.l.b16 %v635
    %v2118 = vunpack.c.h.b16 %v635
    %v2119 = vunpack.c.l.b16 %v636
    %v2120 = vunpack.c.h.b16 %v636
    %v2121 = vunpack.c.l.b16 %v637
    %v2122 = vunpack.c.h.b16 %v637
    %v2123 = vunpack.c.l.b16 %v638
    %v2124 = vunpack.c.h.b16 %v638
    %v2125 = vunpack.c.l.b16 %v639
    %v2126 = vunpack.c.h.b16 %v639
    %v2127 = vunpack.c.l.b16 %v640
    %v2128 = vunpack.c.h.b16 %v640
    %v2129 = vunpack.c.l.b16 %v641
    %v2130 = vunpack.c.h.b16 %v641
    %v2131 = vunpack.c.l.b16 %v642
    %v2132 = vunpack.c.h.b16 %v642
    %v2133 = vunpack.c.l.b16 %v643
    %v2134 = vunpack.c.h.b16 %v643
    %v2135 = vunpack.c.l.b16 %v644
    %v2136 = vunpack.c.h.b16 %v644
    %v2137 = vunpack.c.l.b16 %v645
    %v2138 = vunpack.c.h.b16 %v645
    %v2139 = vunpack.c.l.b16 %v646
    %v2140 = vunpack.c.h.b16 %v646
    %v2141 = vunpack.c.l.b16 %v647
    %v2142 = vunpack.c.h.b16 %v647
    %v2143 = vunpack.c.l.b16 %v648
    %v2144 = vunpack.c.h.b16 %v648
    %v2145 = vunpack.c.l.b16 %v649
    %v2146 = vunpack.c.h.b16 %v649
    %v2147 = vunpack.c.l.b16 %v650
    %v2148 = vunpack.c.h.b16 %v650
    %v2149 = vunpack.c.l.b16 %v651
    %v2150 = vunpack.c.h.b16 %v651
    %v2151 = vunpack.c.l.b16 %v652
    %v2152 = vunpack.c.h.b16 %v652
    %v2153 = vunpack.c.l.b16 %v653
    %v2154 = vunpack.c.h.b16 %v653
    %v2155 = vunpack.c.l.b16 %v654
    %v2156 = vunpack.c.h.b16 %v654
    %v2157 = vunpack.c.l.b16 %v655
    %v2158 = vunpack.c.h.b16 %v655
    %v2159 = vunpack.c.l.b16 %v656
    %v2160 = vunpack.c.h.b16 %v656
    %v2161 = vunpack.c.l.b16 %v657
    %v2162 = vunpack.c.h.b16 %v657
    %v2163 = vunpack.c.l.b16 %v658
    %v2164 = vunpack.c.h.b16 %v658
    %v2165 = vunpack.c.l.b16 %v659
    %v2166 = vunpack.c.h.b16 %v659
    %v2167 = vunpack.c.l.b16 %v660
    %v2168 = vunpack.c.h.b16 %v660
    %v2169 = vunpack.c.l.b16 %v661
    %v2170 = vunpack.c.h.b16 %v661
    %v2171 = vunpack.c.l.b16 %v662
    %v2172 = vunpack.c.h.b16 %v662
    %v2173 = vunpack.c.l.b16 %v663
    %v2174 = vunpack.c.h.b16 %v663
    %v2175 = vunpack.c.l.b16 %v664
    %v2176 = vunpack.c.h.b16 %v664
    %v2177 = vunpack.c.l.b16 %v665
    %v2178 = vunpack.c.h.b16 %v665
    %v2179 = vunpack.c.l.b16 %v666
    %v2180 = vunpack.c.h.b16 %v666
    %v2181 = vunpack.c.l.b16 %v667
    %v2182 = vunpack.c.h.b16 %v667
    %v2183 = vunpack.c.l.b16 %v668
    %v2184 = vunpack.c.h.b16 %v668
    %v2185 = vunpack.c.l.b16 %v669
    %v2186 = vunpack.c.h.b16 %v669
    %v2187 = vunpack.c.l.b16 %v670
    %v2188 = vunpack.c.h.b16 %v670
    %v2189 = vunpack.c.l.b16 %v671
    %v2190 = vunpack.c.h.b16 %v671
    %v2191 = vunpack.c.l.b16 %v672
    %v2192 = vunpack.c.h.b16 %v672
    %v2193 = vunpack.c.l.b16 %v673
    %v2194 = vunpack.c.h.b16 %v673
    %v2195 = vunpack.c.l.b16 %v674
    %v2196 = vunpack.c.h.b16 %v674
    %v2197 = vunpack.c.l.b16 %v675
    %v2198 = vunpack.c.h.b16 %v675
    %v2199 = vunpack.c.l.b16 %v676
    %v2200 = vunpack.c.h.b16 %v676
    %v2201 = vunpack.c.l.b16 %v677
    %v2202 = vunpack.c.h.b16 %v677
    %v2203 = vunpack.c.l.b16 %v678
    %v2204 = vunpack.c.h.b16 %v678
    %v2205 = vunpack.c.l.b16 %v679
    %v2206 = vunpack.c.h.b16 %v679
    %v2207 = vunpack.c.l.b16 %v680
    %v2208 = vunpack.c.h.b16 %v680
    %v2209 = vunpack.c.l.b16 %v681
    %v2210 = vunpack.c.h.b16 %v681
    %v2211 = vunpack.c.l.b16 %v682
    %v2212 = vunpack.c.h.b16 %v682
    %v2213 = vunpack.c.l.b16 %v683
    %v2214 = vunpack.c.h.b16 %v683
    %v2215 = vunpack.c.l.b16 %v684
    %v2216 = vunpack.c.h.b16 %v684
    %v2217 = vunpack.c.l.b16 %v685
    %v2218 = vunpack.c.h.b16 %v685
    %v2219 = vunpack.c.l.b16 %v686
    %v2220 = vunpack.c.h.b16 %v686
    %v2221 = vunpack.c.l.b16 %v687
    %v2222 = vunpack.c.h.b16 %v687
    %v2223 = vunpack.c.l.b16 %v688
    %v2224 = vunpack.c.h.b16 %v688
    %v2225 = vunpack.c.l.b16 %v689
    %v2226 = vunpack.c.h.b16 %v689
    %v2227 = vunpack.c.l.b16 %v690
    %v2228 = vunpack.c.h.b16 %v690
    %v2229 = vunpack.c.l.b16 %v691
    %v2230 = vunpack.c.h.b16 %v691
    %v2231 = vunpack.c.l.b16 %v692
    %v2232 = vunpack.c.h.b16 %v692
    %v2233 = vunpack.c.l.b16 %v693
    %v2234 = vunpack.c.h.b16 %v693
    %v2235 = vunpack.c.l.b16 %v694
    %v2236 = vunpack.c.h.b16 %v694
    %v2237 = vunpack.c.l.b16 %v695
    %v2238 = vunpack.c.h.b16 %v695
    %v2239 = vunpack.c.l.b16 %v696
    %v2240 = vunpack.c.h.b16 %v696
    %v2241 = vunpack.c.l.b16 %v697
    %v2242 = vunpack.c.h.b16 %v697
    %v2243 = vunpack.c.l.b16 %v698
    %v2244 = vunpack.c.h.b16 %v698
    %v2245 = vunpack.c.l.b16 %v699
    %v2246 = vunpack.c.h.b16 %v699
    %v2247 = vunpack.c.l.b16 %v700
    %v2248 = vunpack.c.h.b16 %v700
    %v2249 = vunpack.c.l.b16 %v701
    %v2250 = vunpack.c.h.b16 %v701
    %v2251 = vunpack.c.l.b16 %v702
    %v2252 = vunpack.c.h.b16 %v702
    %v2253 = vunpack.c.l.b16 %v703
    %v2254 = vunpack.c.h.b16 %v703
    %v2255 = vunpack.c.l.b16 %v704
    %v2256 = vunpack.c.h.b16 %v704
    %v2257 = vunpack.c.l.b16 %v705
    %v2258 = vunpack.c.h.b16 %v705
    %v2259 = vunpack.c.l.b16 %v706
    %v2260 = vunpack.c.h.b16 %v706
    %v2261 = vunpack.c.l.b16 %v707
    %v2262 = vunpack.c.h.b16 %v707
    %v2263 = vunpack.c.l.b16 %v708
    %v2264 = vunpack.c.h.b16 %v708
    %v2265 = vunpack.c.l.b16 %v709
    %v2266 = vunpack.c.h.b16 %v709
    %v2267 = vunpack.c.l.b16 %v710
    %v2268 = vunpack.c.h.b16 %v710
    %v2269 = vunpack.c.l.b16 %v711
    %v2270 = vunpack.c.h.b16 %v711
    %v2271 = vunpack.c.l.b16 %v712
    %v2272 = vunpack.c.h.b16 %v712
    %v2273 = vunpack.c.l.b16 %v713
    %v2274 = vunpack.c.h.b16 %v713
    %v2275 = vunpack.c.l.b16 %v714
    %v2276 = vunpack.c.h.b16 %v714
    %v2277 = vunpack.c.l.b16 %v715
    %v2278 = vunpack.c.h.b16 %v715
    %v2279 = vunpack.c.l.b16 %v716
    %v2280 = vunpack.c.h.b16 %v716
    %v2281 = vunpack.c.l.b16 %v717
    %v2282 = vunpack.c.h.b16 %v717
    %v2283 = vunpack.c.l.b16 %v718
    %v2284 = vunpack.c.h.b16 %v718
    %v2285 = vunpack.c.l.b16 %v719
    %v2286 = vunpack.c.h.b16 %v719
    %v2287 = vunpack.c.l.b16 %v720
    %v2288 = vunpack.c.h.b16 %v720
    %v2289 = vunpack.c.l.b16 %v721
    %v2290 = vunpack.c.h.b16 %v721
    %v2291 = vunpack.c.l.b16 %v722
    %v2292 = vunpack.c.h.b16 %v722
    %v2293 = vunpack.c.l.b16 %v723
    %v2294 = vunpack.c.h.b16 %v723
    %v2295 = vunpack.c.l.b16 %v724
    %v2296 = vunpack.c.h.b16 %v724
    %v2297 = vunpack.c.l.b16 %v725
    %v2298 = vunpack.c.h.b16 %v725
    %v2299 = vunpack.c.l.b16 %v726
    %v2300 = vunpack.c.h.b16 %v726
    %v2301 = vunpack.c.l.b16 %v727
    %v2302 = vunpack.c.h.b16 %v727
    %v2303 = vunpack.c.l.b16 %v728
    %v2304 = vunpack.c.h.b16 %v728
    %v2305 = vunpack.c.l.b16 %v729
    %v2306 = vunpack.c.h.b16 %v729
    %v2307 = vunpack.c.l.b16 %v730
    %v2308 = vunpack.c.h.b16 %v730
    %v2309 = vunpack.c.l.b16 %v731
    %v2310 = vunpack.c.h.b16 %v731
    %v2311 = vunpack.c.l.b16 %v732
    %v2312 = vunpack.c.h.b16 %v732
    %v2313 = vunpack.c.l.b16 %v733
    %v2314 = vunpack.c.h.b16 %v733
    %v2315 = vunpack.c.l.b16 %v734
    %v2316 = vunpack.c.h.b16 %v734
    %v2317 = vunpack.c.l.b16 %v735
    %v2318 = vunpack.c.h.b16 %v735
    %v2319 = vunpack.c.l.b16 %v736
    %v2320 = vunpack.c.h.b16 %v736
    %v2321 = vunpack.c.l.b16 %v737
    %v2322 = vunpack.c.h.b16 %v737
    %v2323 = vunpack.c.l.b16 %v738
    %v2324 = vunpack.c.h.b16 %v738
    %v2325 = vunpack.c.l.b16 %v739
    %v2326 = vunpack.c.h.b16 %v739
    %v2327 = vunpack.c.l.b16 %v740
    %v2328 = vunpack.c.h.b16 %v740
    %v2329 = vunpack.c.l.b16 %v741
    %v2330 = vunpack.c.h.b16 %v741
    %v2331 = vunpack.c.l.b16 %v742
    %v2332 = vunpack.c.h.b16 %v742
    %v2333 = vunpack.c.l.b16 %v743
    %v2334 = vunpack.c.h.b16 %v743
    %v2335 = vunpack.c.l.b16 %v744
    %v2336 = vunpack.c.h.b16 %v744
    %v2337 = vunpack.c.l.b16 %v745
    %v2338 = vunpack.c.h.b16 %v745
    %v2339 = vunpack.c.l.b16 %v746
    %v2340 = vunpack.c.h.b16 %v746
    %v2341 = vunpack.c.l.b16 %v747
    %v2342 = vunpack.c.h.b16 %v747
    %v2343 = vunpack.c.l.b16 %v748
    %v2344 = vunpack.c.h.b16 %v748
    %v2345 = vunpack.c.l.b16 %v749
    %v2346 = vunpack.c.h.b16 %v749
    %v2347 = vunpack.c.l.b16 %v750
    %v2348 = vunpack.c.h.b16 %v750
    %v2349 = vunpack.c.l.b16 %v751
    %v2350 = vunpack.c.h.b16 %v751
    %v2351 = vunpack.c.l.b16 %v752
    %v2352 = vunpack.c.h.b16 %v752
    %v2353 = vunpack.c.l.b16 %v753
    %v2354 = vunpack.c.h.b16 %v753
    %v2355 = vunpack.c.l.b16 %v754
    %v2356 = vunpack.c.h.b16 %v754
    %v2357 = vunpack.c.l.b16 %v755
    %v2358 = vunpack.c.h.b16 %v755
    %v2359 = vunpack.c.l.b16 %v756
    %v2360 = vunpack.c.h.b16 %v756
    %v2361 = vunpack.c.l.b16 %v757
    %v2362 = vunpack.c.h.b16 %v757
    %v2363 = vunpack.c.l.b16 %v758
    %v2364 = vunpack.c.h.b16 %v758
    %v2365 = vunpack.c.l.b16 %v759
    %v2366 = vunpack.c.h.b16 %v759
    %v2367 = vunpack.c.l.b16 %v760
    %v2368 = vunpack.c.h.b16 %v760
    %v2369 = vunpack.c.l.b16 %v761
    %v2370 = vunpack.c.h.b16 %v761
    %v2371 = vunpack.c.l.b16 %v762
    %v2372 = vunpack.c.h.b16 %v762
    %v2373 = vunpack.c.l.b16 %v763
    %v2374 = vunpack.c.h.b16 %v763
    %v2375 = vunpack.c.l.b16 %v764
    %v2376 = vunpack.c.h.b16 %v764
    %v2377 = vunpack.c.l.b16 %v765
    %v2378 = vunpack.c.h.b16 %v765
    %v2379 = vunpack.c.l.b16 %v766
    %v2380 = vunpack.c.h.b16 %v766
    %v2381 = vunpack.c.l.b16 %v767
    %v2382 = vunpack.c.h.b16 %v767
    %v2383 = vunpack.c.l.b16 %v768
    %v2384 = vunpack.c.h.b16 %v768
    %v2385 = vunpack.c.l.b16 %v769
    %v2386 = vunpack.c.h.b16 %v769
    %v2387 = vunpack.c.l.b16 %v770
    %v2388 = vunpack.c.h.b16 %v770
    %v2389 = vunpack.c.l.b16 %v771
    %v2390 = vunpack.c.h.b16 %v771
    %v2391 = vunpack.c.l.b16 %v772
    %v2392 = vunpack.c.h.b16 %v772
    %v2393 = vunpack.c.l.b16 %v773
    %v2394 = vunpack.c.h.b16 %v773
    %v2395 = vunpack.c.l.b16 %v774
    %v2396 = vunpack.c.h.b16 %v774
    %v2397 = vunpack.c.l.b16 %v775
    %v2398 = vunpack.c.h.b16 %v775
    %v2399 = vunpack.c.l.b16 %v776
    %v2400 = vunpack.c.h.b16 %v776
    %v2401 = vunpack.c.l.b16 %v777
    %v2402 = vunpack.c.h.b16 %v777
    %v2403 = vunpack.c.l.b16 %v778
    %v2404 = vunpack.c.h.b16 %v778
    %v2405 = vunpack.c.l.b16 %v779
    %v2406 = vunpack.c.h.b16 %v779
    %v2407 = vunpack.c.l.b16 %v780
    %v2408 = vunpack.c.h.b16 %v780
    %v2409 = vunpack.c.l.b16 %v781
    %v2410 = vunpack.c.h.b16 %v781
    %v2411 = vunpack.c.l.b16 %v782
    %v2412 = vunpack.c.h.b16 %v782
    %v2413 = vunpack.c.l.b16 %v783
    %v2414 = vunpack.c.h.b16 %v783
    %v2415 = vunpack.c.l.b16 %v784
    %v2416 = vunpack.c.h.b16 %v784
    %v2417 = vunpack.c.l.b16 %v785
    %v2418 = vunpack.c.h.b16 %v785
    %v2419 = vunpack.c.l.b16 %v786
    %v2420 = vunpack.c.h.b16 %v786
    %v2421 = vunpack.c.l.b16 %v787
    %v2422 = vunpack.c.h.b16 %v787
    %v2423 = vunpack.c.l.b16 %v788
    %v2424 = vunpack.c.h.b16 %v788
    %v2425 = vunpack.c.l.b16 %v789
    %v2426 = vunpack.c.h.b16 %v789
    %v2427 = vunpack.c.l.b16 %v790
    %v2428 = vunpack.c.h.b16 %v790
    %v2429 = vunpack.c.l.b16 %v791
    %v2430 = vunpack.c.h.b16 %v791
    %v2431 = vunpack.c.l.b16 %v792
    %v2432 = vunpack.c.h.b16 %v792
    %v2433 = vunpack.c.l.b16 %v793
    %v2434 = vunpack.c.h.b16 %v793
    %v2435 = vunpack.c.l.b16 %v794
    %v2436 = vunpack.c.h.b16 %v794
    %v2437 = vunpack.c.l.b16 %v795
    %v2438 = vunpack.c.h.b16 %v795
    %v2439 = vunpack.c.l.b16 %v796
    %v2440 = vunpack.c.h.b16 %v796
    %v2441 = vunpack.c.l.b16 %v797
    %v2442 = vunpack.c.h.b16 %v797
    %v2443 = vunpack.c.l.b16 %v798
    %v2444 = vunpack.c.h.b16 %v798
    %v2445 = vunpack.c.l.b16 %v799
    %v2446 = vunpack.c.h.b16 %v799
    %v2447 = vunpack.c.l.b16 %v800
    %v2448 = vunpack.c.h.b16 %v800
    %v2449 = vunpack.c.l.b16 %v801
    %v2450 = vunpack.c.h.b16 %v801
    %v2451 = vunpack.c.l.b16 %v802
    %v2452 = vunpack.c.h.b16 %v802
    %v2453 = vunpack.c.l.b16 %v803
    %v2454 = vunpack.c.h.b16 %v803
    %v2455 = vpack.c.b16 %v1439, %v1431
    %v2456 = vpack.c.b16 %v1440, %v1432
    %v2457 = vpack.c.b16 %v1441, %v1433
    %v2458 = vpack.c.b16 %v1442, %v1434
    %v2459 = vpack.c.b16 %v1443, %v1435
    %v2460 = vpack.c.b16 %v1444, %v1436
    %v2461 = vpack.c.b16 %v1445, %v1437
    %v2462 = vpack.c.b16 %v1446, %v1438
    %v2463 = vpack.c.b16 %v1455, %v1447
    %v2464 = vpack.c.b16 %v1456, %v1448
    %v2465 = vpack.c.b16 %v1457, %v1449
    %v2466 = vpack.c.b16 %v1458, %v1450
    %v2467 = vpack.c.b16 %v1459, %v1451
    %v2468 = vpack.c.b16 %v1460, %v1452
    %v2469 = vpack.c.b16 %v1461, %v1453
    %v2470 = vpack.c.b16 %v1462, %v1454
    %v2471 = vpack.c.b16 %v1471, %v1463
    %v2472 = vpack.c.b16 %v1472, %v1464
    %v2473 = vpack.c.b16 %v1473, %v1465
    %v2474 = vpack.c.b16 %v1474, %v1466
    %v2475 = vpack.c.b16 %v1475, %v1467
    %v2476 = vpack.c.b16 %v1476, %v1468
    %v2477 = vpack.c.b16 %v1477, %v1469
    %v2478 = vpack.c.b16 %v1478, %v1470
    %v2479 = vpack.c.b16 %v1487, %v1479
    %v2480 = vpack.c.b16 %v1488, %v1480
    %v2481 = vpack.c.b16 %v1489, %v1481
    %v2482 = vpack.c.b16 %v1490, %v1482
    %v2483 = vpack.c.b16 %v1491, %v1483
    %v2484 = vpack.c.b16 %v1492, %v1484
    %v2485 = vpack.c.b16 %v1493, %v1485
    %v2486 = vpack.c.b16 %v1494, %v1486
    %v2487 = vpack.c.b16 %v1503, %v1495
    %v2488 = vpack.c.b16 %v1504, %v1496
    %v2489 = vpack.c.b16 %v1505, %v1497
    %v2490 = vpack.c.b16 %v1506, %v1498
    %v2491 = vpack.c.b16 %v1507, %v1499
    %v2492 = vpack.c.b16 %v1508, %v1500
    %v2493 = vpack.c.b16 %v1509, %v1501
    %v2494 = vpack.c.b16 %v1510, %v1502
    %v2495 = vpack.c.b16 %v1519, %v1511
    %v2496 = vpack.c.b16 %v1520, %v1512
    %v2497 = vpack.c.b16 %v1521, %v1513
    %v2498 = vpack.c.b16 %v1522, %v1514
    %v2499 = vpack.c.b16 %v1523, %v1515
    %v2500 = vpack.c.b16 %v1524, %v1516
    %v2501 = vpack.c.b16 %v1525, %v1517
    %v2502 = vpack.c.b16 %v1526, %v1518
    %v2503 = vpack.c.b16 %v1535, %v1527
    %v2504 = vpack.c.b16 %v1536, %v1528
    %v2505 = vpack.c.b16 %v1537, %v1529
    %v2506 = vpack.c.b16 %v1538, %v1530
    %v2507 = vpack.c.b16 %v1539, %v1531
    %v2508 = vpack.c.b16 %v1540, %v1532
    %v2509 = vpack.c.b16 %v1541, %v1533
    %v2510 = vpack.c.b16 %v1542, %v1534
    %v2511 = vpack.c.b16 %v1551, %v1543
    %v2512 = vpack.c.b16 %v1552, %v1544
    %v2513 = vpack.c.b16 %v1553, %v1545
    %v2514 = vpack.c.b16 %v1554, %v1546
    %v2515 = vpack.c.b16 %v1555, %v1547
    %v2516 = vpack.c.b16 %v1556, %v1548
    %v2517 = vpack.c.b16 %v1557, %v1549
    %v2518 = vpack.c.b16 %v1558, %v1550
    %v2519 = vpack.c.b16 %v1567, %v1559
    %v2520 = vpack.c.b16 %v1568, %v1560
    %v2521 = vpack.c.b16 %v1569, %v1561
    %v2522 = vpack.c.b16 %v1570, %v1562
    %v2523 = vpack.c.b16 %v1571, %v1563
    %v2524 = vpack.c.b16 %v1572, %v1564
    %v2525 = vpack.c.b16 %v1573, %v1565
    %v2526 = vpack.c.b16 %v1574, %v1566
    %v2527 = vpack.c.b16 %v1583, %v1575
    %v2528 = vpack.c.b16 %v1584, %v1576
    %v2529 = vpack.c.b16 %v1585, %v1577
    %v2530 = vpack.c.b16 %v1586, %v1578
    %v2531 = vpack.c.b16 %v1587, %v1579
    %v2532 = vpack.c.b16 %v1588, %v1580
    %v2533 = vpack.c.b16 %v1589, %v1581
    %v2534 = vpack.c.b16 %v1590, %v1582
    %v2535 = vpack.c.b16 %v1599, %v1591
    %v2536 = vpack.c.b16 %v1600, %v1592
    %v2537 = vpack.c.b16 %v1601, %v1593
    %v2538 = vpack.c.b16 %v1602, %v1594
    %v2539 = vpack.c.b16 %v1603, %v1595
    %v2540 = vpack.c.b16 %v1604, %v1596
    %v2541 = vpack.c.b16 %v1605, %v1597
    %v2542 = vpack.c.b16 %v1606, %v1598
    %v2543 = vpack.c.b16 %v1615, %v1607
    %v2544 = vpack.c.b16 %v1616, %v1608
    %v2545 = vpack.c.b16 %v1617, %v1609
    %v2546 = vpack.c.b16 %v1618, %v1610
    %v2547 = vpack.c.b16 %v1619, %v1611
    %v2548 = vpack.c.b16 %v1620, %v1612
    %v2549 = vpack.c.b16 %v1621, %v1613
    %v2550 = vpack.c.b16 %v1622, %v1614
    %v2551 = vpack.c.b16 %v1631, %v1623
    %v2552 = vpack.c.b16 %v1632, %v1624
    %v2553 = vpack.c.b16 %v1633, %v1625
    %v2554 = vpack.c.b16 %v1634, %v1626
    %v2555 = vpack.c.b16 %v1635, %v1627
    %v2556 = vpack.c.b16 %v1636, %v1628
    %v2557 = vpack.c.b16 %v1637, %v1629
    %v2558 = vpack.c.b16 %v1638, %v1630
    %v2559 = vpack.c.b16 %v1647, %v1639
    %v2560 = vpack.c.b16 %v1648, %v1640
    %v2561 = vpack.c.b16 %v1649, %v1641
    %v2562 = vpack.c.b16 %v1650, %v1642
    %v2563 = vpack.c.b16 %v1651, %v1643
    %v2564 = vpack.c.b16 %v1652, %v1644
    %v2565 = vpack.c.b16 %v1653, %v1645
    %v2566 = vpack.c.b16 %v1654, %v1646
    %v2567 = vpack.c.b16 %v1663, %v1655
    %v2568 = vpack.c.b16 %v1664, %v1656
    %v2569 = vpack.c.b16 %v1665, %v1657
    %v2570 = vpack.c.b16 %v1666, %v1658
    %v2571 = vpack.c.b16 %v1667, %v1659
    %v2572 = vpack.c.b16 %v1668, %v1660
    %v2573 = vpack.c.b16 %v1669, %v1661
    %v2574 = vpack.c.b16 %v1670, %v1662
    %v2575 = vpack.c.b16 %v1679, %v1671
    %v2576 = vpack.c.b16 %v1680, %v1672
    %v2577 = vpack.c.b16 %v1681, %v1673
    %v2578 = vpack.c.b16 %v1682, %v1674
    %v2579 = vpack.c.b16 %v1683, %v1675
    %v2580 = vpack.c.b16 %v1684, %v1676
    %v2581 = vpack.c.b16 %v1685, %v1677
    %v2582 = vpack.c.b16 %v1686, %v1678
    %v2583 = vpack.c.b16 %v1695, %v1687
    %v2584 = vpack.c.b16 %v1696, %v1688
    %v2585 = vpack.c.b16 %v1697, %v1689
    %v2586 = vpack.c.b16 %v1698, %v1690
    %v2587 = vpack.c.b16 %v1699, %v1691
    %v2588 = vpack.c.b16 %v1700, %v1692
    %v2589 = vpack.c.b16 %v1701, %v1693
    %v2590 = vpack.c.b16 %v1702, %v1694
    %v2591 = vpack.c.b16 %v1711, %v1703
    %v2592 = vpack.c.b16 %v1712, %v1704
    %v2593 = vpack.c.b16 %v1713, %v1705
    %v2594 = vpack.c.b16 %v1714, %v1706
    %v2595 = vpack.c.b16 %v1715, %v1707
    %v2596 = vpack.c.b16 %v1716, %v1708
    %v2597 = vpack.c.b16 %v1717, %v1709
    %v2598 = vpack.c.b16 %v1718, %v1710
    %v2599 = vpack.c.b16 %v1727, %v1719
    %v2600 = vpack.c.b16 %v1728, %v1720
    %v2601 = vpack.c.b16 %v1729, %v1721
    %v2602 = vpack.c.b16 %v1730, %v1722
    %v2603 = vpack.c.b16 %v1731, %v1723
    %v2604 = vpack.c.b16 %v1732, %v1724
    %v2605 = vpack.c.b16 %v1733, %v1725
    %v2606 = vpack.c.b16 %v1734, %v1726
    %v2607 = vpack.c.b16 %v1743, %v1735
    %v2608 = vpack.c.b16 %v1744, %v1736
    %v2609 = vpack.c.b16 %v1745, %v1737
    %v2610 = vpack.c.b16 %v1746, %v1738
    %v2611 = vpack.c.b16 %v1747, %v1739
    %v2612 = vpack.c.b16 %v1748, %v1740
    %v2613 = vpack.c.b16 %v1749, %v1741
    %v2614 = vpack.c.b16 %v1750, %v1742
    %v2615 = vpack.c.b16 %v1759, %v1751
    %v2616 = vpack.c.b16 %v1760, %v1752
    %v2617 = vpack.c.b16 %v1761, %v1753
    %v2618 = vpack.c.b16 %v1762, %v1754
    %v2619 = vpack.c.b16 %v1763, %v1755
    %v2620 = vpack.c.b16 %v1764, %v1756
    %v2621 = vpack.c.b16 %v1765, %v1757
    %v2622 = vpack.c.b16 %v1766, %v1758
    %v2623 = vpack.c.b16 %v1775, %v1767
    %v2624 = vpack.c.b16 %v1776, %v1768
    %v2625 = vpack.c.b16 %v1777, %v1769
    %v2626 = vpack.c.b16 %v1778, %v1770
    %v2627 = vpack.c.b16 %v1779, %v1771
    %v2628 = vpack.c.b16 %v1780, %v1772
    %v2629 = vpack.c.b16 %v1781, %v1773
    %v2630 = vpack.c.b16 %v1782, %v1774
    %v2631 = vpack.c.b16 %v1791, %v1783
    %v2632 = vpack.c.b16 %v1792, %v1784
    %v2633 = vpack.c.b16 %v1793, %v1785
    %v2634 = vpack.c.b16 %v1794, %v1786
    %v2635 = vpack.c.b16 %v1795, %v1787
    %v2636 = vpack.c.b16 %v1796, %v1788
    %v2637 = vpack.c.b16 %v1797, %v1789
    %v2638 = vpack.c.b16 %v1798, %v1790
    %v2639 = vpack.c.b16 %v1807, %v1799
    %v2640 = vpack.c.b16 %v1808, %v1800
    %v2641 = vpack.c.b16 %v1809, %v1801
    %v2642 = vpack.c.b16 %v1810, %v1802
    %v2643 = vpack.c.b16 %v1811, %v1803
    %v2644 = vpack.c.b16 %v1812, %v1804
    %v2645 = vpack.c.b16 %v1813, %v1805
    %v2646 = vpack.c.b16 %v1814, %v1806
    %v2647 = vpack.c.b16 %v1823, %v1815
    %v2648 = vpack.c.b16 %v1824, %v1816
    %v2649 = vpack.c.b16 %v1825, %v1817
    %v2650 = vpack.c.b16 %v1826, %v1818
    %v2651 = vpack.c.b16 %v1827, %v1819
    %v2652 = vpack.c.b16 %v1828, %v1820
    %v2653 = vpack.c.b16 %v1829, %v1821
    %v2654 = vpack.c.b16 %v1830, %v1822
    %v2655 = vpack.c.b16 %v1839, %v1831
    %v2656 = vpack.c.b16 %v1840, %v1832
    %v2657 = vpack.c.b16 %v1841, %v1833
    %v2658 = vpack.c.b16 %v1842, %v1834
    %v2659 = vpack.c.b16 %v1843, %v1835
    %v2660 = vpack.c.b16 %v1844, %v1836
    %v2661 = vpack.c.b16 %v1845, %v1837
    %v2662 = vpack.c.b16 %v1846, %v1838
    %v2663 = vpack.c.b16 %v1855, %v1847
    %v2664 = vpack.c.b16 %v1856, %v1848
    %v2665 = vpack.c.b16 %v1857, %v1849
    %v2666 = vpack.c.b16 %v1858, %v1850
    %v2667 = vpack.c.b16 %v1859, %v1851
    %v2668 = vpack.c.b16 %v1860, %v1852
    %v2669 = vpack.c.b16 %v1861, %v1853
    %v2670 = vpack.c.b16 %v1862, %v1854
    %v2671 = vpack.c.b16 %v1871, %v1863
    %v2672 = vpack.c.b16 %v1872, %v1864
    %v2673 = vpack.c.b16 %v1873, %v1865
    %v2674 = vpack.c.b16 %v1874, %v1866
    %v2675 = vpack.c.b16 %v1875, %v1867
    %v2676 = vpack.c.b16 %v1876, %v1868
    %v2677 = vpack.c.b16 %v1877, %v1869
    %v2678 = vpack.c.b16 %v1878, %v1870
    %v2679 = vpack.c.b16 %v1887, %v1879
    %v2680 = vpack.c.b16 %v1888, %v1880
    %v2681 = vpack.c.b16 %v1889, %v1881
    %v2682 = vpack.c.b16 %v1890, %v1882
    %v2683 = vpack.c.b16 %v1891, %v1883
    %v2684 = vpack.c.b16 %v1892, %v1884
    %v2685 = vpack.c.b16 %v1893, %v1885
    %v2686 = vpack.c.b16 %v1894, %v1886
    %v2687 = vpack.c.b16 %v1903, %v1895
    %v2688 = vpack.c.b16 %v1904, %v1896
    %v2689 = vpack.c.b16 %v1905, %v1897
    %v2690 = vpack.c.b16 %v1906, %v1898
    %v2691 = vpack.c.b16 %v1907, %v1899
    %v2692 = vpack.c.b16 %v1908, %v1900
    %v2693 = vpack.c.b16 %v1909, %v1901
    %v2694 = vpack.c.b16 %v1910, %v1902
    %v2695 = vpack.c.b16 %v1919, %v1911
    %v2696 = vpack.c.b16 %v1920, %v1912
    %v2697 = vpack.c.b16 %v1921, %v1913
    %v2698 = vpack.c.b16 %v1922, %v1914
    %v2699 = vpack.c.b16 %v1923, %v1915
    %v2700 = vpack.c.b16 %v1924, %v1916
    %v2701 = vpack.c.b16 %v1925, %v1917
    %v2702 = vpack.c.b16 %v1926, %v1918
    %v2703 = vpack.c.b16 %v1935, %v1927
    %v2704 = vpack.c.b16 %v1936, %v1928
    %v2705 = vpack.c.b16 %v1937, %v1929
    %v2706 = vpack.c.b16 %v1938, %v1930
    %v2707 = vpack.c.b16 %v1939, %v1931
    %v2708 = vpack.c.b16 %v1940, %v1932
    %v2709 = vpack.c.b16 %v1941, %v1933
    %v2710 = vpack.c.b16 %v1942, %v1934
    %v2711 = vpack.c.b16 %v1951, %v1943
    %v2712 = vpack.c.b16 %v1952, %v1944
    %v2713 = vpack.c.b16 %v1953, %v1945
    %v2714 = vpack.c.b16 %v1954, %v1946
    %v2715 = vpack.c.b16 %v1955, %v1947
    %v2716 = vpack.c.b16 %v1956, %v1948
    %v2717 = vpack.c.b16 %v1957, %v1949
    %v2718 = vpack.c.b16 %v1958, %v1950
    %v2719 = vpack.c.b16 %v1967, %v1959
    %v2720 = vpack.c.b16 %v1968, %v1960
    %v2721 = vpack.c.b16 %v1969, %v1961
    %v2722 = vpack.c.b16 %v1970, %v1962
    %v2723 = vpack.c.b16 %v1971, %v1963
    %v2724 = vpack.c.b16 %v1972, %v1964
    %v2725 = vpack.c.b16 %v1973, %v1965
    %v2726 = vpack.c.b16 %v1974, %v1966
    %v2727 = vpack.c.b16 %v1983, %v1975
    %v2728 = vpack.c.b16 %v1984, %v1976
    %v2729 = vpack.c.b16 %v1985, %v1977
    %v2730 = vpack.c.b16 %v1986, %v1978
    %v2731 = vpack.c.b16 %v1987, %v1979
    %v2732 = vpack.c.b16 %v1988, %v1980
    %v2733 = vpack.c.b16 %v1989, %v1981
    %v2734 = vpack.c.b16 %v1990, %v1982
    %v2735 = vpack.c.b16 %v1999, %v1991
    %v2736 = vpack.c.b16 %v2000, %v1992
    %v2737 = vpack.c.b16 %v2001, %v1993
    %v2738 = vpack.c.b16 %v2002, %v1994
    %v2739 = vpack.c.b16 %v2003, %v1995
    %v2740 = vpack.c.b16 %v2004, %v1996
    %v2741 = vpack.c.b16 %v2005, %v1997
    %v2742 = vpack.c.b16 %v2006, %v1998
    %v2743 = vpack.c.b16 %v2015, %v2007
    %v2744 = vpack.c.b16 %v2016, %v2008
    %v2745 = vpack.c.b16 %v2017, %v2009
    %v2746 = vpack.c.b16 %v2018, %v2010
    %v2747 = vpack.c.b16 %v2019, %v2011
    %v2748 = vpack.c.b16 %v2020, %v2012
    %v2749 = vpack.c.b16 %v2021, %v2013
    %v2750 = vpack.c.b16 %v2022, %v2014
    %v2751 = vpack.c.b16 %v2031, %v2023
    %v2752 = vpack.c.b16 %v2032, %v2024
    %v2753 = vpack.c.b16 %v2033, %v2025
    %v2754 = vpack.c.b16 %v2034, %v2026
    %v2755 = vpack.c.b16 %v2035, %v2027
    %v2756 = vpack.c.b16 %v2036, %v2028
    %v2757 = vpack.c.b16 %v2037, %v2029
    %v2758 = vpack.c.b16 %v2038, %v2030
    %v2759 = vpack.c.b16 %v2047, %v2039
    %v2760 = vpack.c.b16 %v2048, %v2040
    %v2761 = vpack.c.b16 %v2049, %v2041
    %v2762 = vpack.c.b16 %v2050, %v2042
    %v2763 = vpack.c.b16 %v2051, %v2043
    %v2764 = vpack.c.b16 %v2052, %v2044
    %v2765 = vpack.c.b16 %v2053, %v2045
    %v2766 = vpack.c.b16 %v2054, %v2046
    %v2767 = vpack.c.b16 %v2063, %v2055
    %v2768 = vpack.c.b16 %v2064, %v2056
    %v2769 = vpack.c.b16 %v2065, %v2057
    %v2770 = vpack.c.b16 %v2066, %v2058
    %v2771 = vpack.c.b16 %v2067, %v2059
    %v2772 = vpack.c.b16 %v2068, %v2060
    %v2773 = vpack.c.b16 %v2069, %v2061
    %v2774 = vpack.c.b16 %v2070, %v2062
    %v2775 = vpack.c.b16 %v2079, %v2071
    %v2776 = vpack.c.b16 %v2080, %v2072
    %v2777 = vpack.c.b16 %v2081, %v2073
    %v2778 = vpack.c.b16 %v2082, %v2074
    %v2779 = vpack.c.b16 %v2083, %v2075
    %v2780 = vpack.c.b16 %v2084, %v2076
    %v2781 = vpack.c.b16 %v2085, %v2077
    %v2782 = vpack.c.b16 %v2086, %v2078
    %v2783 = vpack.c.b16 %v2095, %v2087
    %v2784 = vpack.c.b16 %v2096, %v2088
    %v2785 = vpack.c.b16 %v2097, %v2089
    %v2786 = vpack.c.b16 %v2098, %v2090
    %v2787 = vpack.c.b16 %v2099, %v2091
    %v2788 = vpack.c.b16 %v2100, %v2092
    %v2789 = vpack.c.b16 %v2101, %v2093
    %v2790 = vpack.c.b16 %v2102, %v2094
    %v2791 = vpack.c.b16 %v2111, %v2103
    %v2792 = vpack.c.b16 %v2112, %v2104
    %v2793 = vpack.c.b16 %v2113, %v2105
    %v2794 = vpack.c.b16 %v2114, %v2106
    %v2795 = vpack.c.b16 %v2115, %v2107
    %v2796 = vpack.c.b16 %v2116, %v2108
    %v2797 = vpack.c.b16 %v2117, %v2109
    %v2798 = vpack.c.b16 %v2118, %v2110
    %v2799 = vpack.c.b16 %v2127, %v2119
    %v2800 = vpack.c.b16 %v2128, %v2120
    %v2801 = vpack.c.b16 %v2129, %v2121
    %v2802 = vpack.c.b16 %v2130, %v2122
    %v2803 = vpack.c.b16 %v2131, %v2123
    %v2804 = vpack.c.b16 %v2132, %v2124
    %v2805 = vpack.c.b16 %v2133, %v2125
    %v2806 = vpack.c.b16 %v2134, %v2126
    %v2807 = vpack.c.b16 %v2143, %v2135
    %v2808 = vpack.c.b16 %v2144, %v2136
    %v2809 = vpack.c.b16 %v2145, %v2137
    %v2810 = vpack.c.b16 %v2146, %v2138
    %v2811 = vpack.c.b16 %v2147, %v2139
    %v2812 = vpack.c.b16 %v2148, %v2140
    %v2813 = vpack.c.b16 %v2149, %v2141
    %v2814 = vpack.c.b16 %v2150, %v2142
    %v2815 = vpack.c.b16 %v2159, %v2151
    %v2816 = vpack.c.b16 %v2160, %v2152
    %v2817 = vpack.c.b16 %v2161, %v2153
    %v2818 = vpack.c.b16 %v2162, %v2154
    %v2819 = vpack.c.b16 %v2163, %v2155
    %v2820 = vpack.c.b16 %v2164, %v2156
    %v2821 = vpack.c.b16 %v2165, %v2157
    %v2822 = vpack.c.b16 %v2166, %v2158
    %v2823 = vpack.c.b16 %v2175, %v2167
    %v2824 = vpack.c.b16 %v2176, %v2168
    %v2825 = vpack.c.b16 %v2177, %v2169
    %v2826 = vpack.c.b16 %v2178, %v2170
    %v2827 = vpack.c.b16 %v2179, %v2171
    %v2828 = vpack.c.b16 %v2180, %v2172
    %v2829 = vpack.c.b16 %v2181, %v2173
    %v2830 = vpack.c.b16 %v2182, %v2174
    %v2831 = vpack.c.b16 %v2191, %v2183
    %v2832 = vpack.c.b16 %v2192, %v2184
    %v2833 = vpack.c.b16 %v2193, %v2185
    %v2834 = vpack.c.b16 %v2194, %v2186
    %v2835 = vpack.c.b16 %v2195, %v2187
    %v2836 = vpack.c.b16 %v2196, %v2188
    %v2837 = vpack.c.b16 %v2197, %v2189
    %v2838 = vpack.c.b16 %v2198, %v2190
    %v2839 = vpack.c.b16 %v2207, %v2199
    %v2840 = vpack.c.b16 %v2208, %v2200
    %v2841 = vpack.c.b16 %v2209, %v2201
    %v2842 = vpack.c.b16 %v2210, %v2202
    %v2843 = vpack.c.b16 %v2211, %v2203
    %v2844 = vpack.c.b16 %v2212, %v2204
    %v2845 = vpack.c.b16 %v2213, %v2205
    %v2846 = vpack.c.b16 %v2214, %v2206
    %v2847 = vpack.c.b16 %v2223, %v2215
    %v2848 = vpack.c.b16 %v2224, %v2216
    %v2849 = vpack.c.b16 %v2225, %v2217
    %v2850 = vpack.c.b16 %v2226, %v2218
    %v2851 = vpack.c.b16 %v2227, %v2219
    %v2852 = vpack.c.b16 %v2228, %v2220
    %v2853 = vpack.c.b16 %v2229, %v2221
    %v2854 = vpack.c.b16 %v2230, %v2222
    %v2855 = vpack.c.b16 %v2239, %v2231
    %v2856 = vpack.c.b16 %v2240, %v2232
    %v2857 = vpack.c.b16 %v2241, %v2233
    %v2858 = vpack.c.b16 %v2242, %v2234
    %v2859 = vpack.c.b16 %v2243, %v2235
    %v2860 = vpack.c.b16 %v2244, %v2236
    %v2861 = vpack.c.b16 %v2245, %v2237
    %v2862 = vpack.c.b16 %v2246, %v2238
    %v2863 = vpack.c.b16 %v2255, %v2247
    %v2864 = vpack.c.b16 %v2256, %v2248
    %v2865 = vpack.c.b16 %v2257, %v2249
    %v2866 = vpack.c.b16 %v2258, %v2250
    %v2867 = vpack.c.b16 %v2259, %v2251
    %v2868 = vpack.c.b16 %v2260, %v2252
    %v2869 = vpack.c.b16 %v2261, %v2253
    %v2870 = vpack.c.b16 %v2262, %v2254
    %v2871 = vpack.c.b16 %v2271, %v2263
    %v2872 = vpack.c.b16 %v2272, %v2264
    %v2873 = vpack.c.b16 %v2273, %v2265
    %v2874 = vpack.c.b16 %v2274, %v2266
    %v2875 = vpack.c.b16 %v2275, %v2267
    %v2876 = vpack.c.b16 %v2276, %v2268
    %v2877 = vpack.c.b16 %v2277, %v2269
    %v2878 = vpack.c.b16 %v2278, %v2270
    %v2879 = vpack.c.b16 %v2287, %v2279
    %v2880 = vpack.c.b16 %v2288, %v2280
    %v2881 = vpack.c.b16 %v2289, %v2281
    %v2882 = vpack.c.b16 %v2290, %v2282
    %v2883 = vpack.c.b16 %v2291, %v2283
    %v2884 = vpack.c.b16 %v2292, %v2284
    %v2885 = vpack.c.b16 %v2293, %v2285
    %v2886 = vpack.c.b16 %v2294, %v2286
    %v2887 = vpack.c.b16 %v2303, %v2295
    %v2888 = vpack.c.b16 %v2304, %v2296
    %v2889 = vpack.c.b16 %v2305, %v2297
    %v2890 = vpack.c.b16 %v2306, %v2298
    %v2891 = vpack.c.b16 %v2307, %v2299
    %v2892 = vpack.c.b16 %v2308, %v2300
    %v2893 = vpack.c.b16 %v2309, %v2301
    %v2894 = vpack.c.b16 %v2310, %v2302
    %v2895 = vpack.c.b16 %v2319, %v2311
    %v2896 = vpack.c.b16 %v2320, %v2312
    %v2897 = vpack.c.b16 %v2321, %v2313
    %v2898 = vpack.c.b16 %v2322, %v2314
    %v2899 = vpack.c.b16 %v2323, %v2315
    %v2900 = vpack.c.b16 %v2324, %v2316
    %v2901 = vpack.c.b16 %v2325, %v2317
    %v2902 = vpack.c.b16 %v2326, %v2318
    %v2903 = vpack.c.b16 %v2335, %v2327
    %v2904 = vpack.c.b16 %v2336, %v2328
    %v2905 = vpack.c.b16 %v2337, %v2329
    %v2906 = vpack.c.b16 %v2338, %v2330
    %v2907 = vpack.c.b16 %v2339, %v2331
    %v2908 = vpack.c.b16 %v2340, %v2332
    %v2909 = vpack.c.b16 %v2341, %v2333
    %v2910 = vpack.c.b16 %v2342, %v2334
    %v2911 = vpack.c.b16 %v2351, %v2343
    %v2912 = vpack.c.b16 %v2352, %v2344
    %v2913 = vpack.c.b16 %v2353, %v2345
    %v2914 = vpack.c.b16 %v2354, %v2346
    %v2915 = vpack.c.b16 %v2355, %v2347
    %v2916 = vpack.c.b16 %v2356, %v2348
    %v2917 = vpack.c.b16 %v2357, %v2349
    %v2918 = vpack.c.b16 %v2358, %v2350
    %v2919 = vpack.c.b16 %v2367, %v2359
    %v2920 = vpack.c.b16 %v2368, %v2360
    %v2921 = vpack.c.b16 %v2369, %v2361
    %v2922 = vpack.c.b16 %v2370, %v2362
    %v2923 = vpack.c.b16 %v2371, %v2363
    %v2924 = vpack.c.b16 %v2372, %v2364
    %v2925 = vpack.c.b16 %v2373, %v2365
    %v2926 = vpack.c.b16 %v2374, %v2366
    %v2927 = vpack.c.b16 %v2383, %v2375
    %v2928 = vpack.c.b16 %v2384, %v2376
    %v2929 = vpack.c.b16 %v2385, %v2377
    %v2930 = vpack.c.b16 %v2386, %v2378
    %v2931 = vpack.c.b16 %v2387, %v2379
    %v2932 = vpack.c.b16 %v2388, %v2380
    %v2933 = vpack.c.b16 %v2389, %v2381
    %v2934 = vpack.c.b16 %v2390, %v2382
    %v2935 = vpack.c.b16 %v2399, %v2391
    %v2936 = vpack.c.b16 %v2400, %v2392
    %v2937 = vpack.c.b16 %v2401, %v2393
    %v2938 = vpack.c.b16 %v2402, %v2394
    %v2939 = vpack.c.b16 %v2403, %v2395
    %v2940 = vpack.c.b16 %v2404, %v2396
    %v2941 = vpack.c.b16 %v2405, %v2397
    %v2942 = vpack.c.b16 %v2406, %v2398
    %v2943 = vpack.c.b16 %v2415, %v2407
    %v2944 = vpack.c.b16 %v2416, %v2408
    %v2945 = vpack.c.b16 %v2417, %v2409
    %v2946 = vpack.c.b16 %v2418, %v2410
    %v2947 = vpack.c.b16 %v2419, %v2411
    %v2948 = vpack.c.b16 %v2420, %v2412
    %v2949 = vpack.c.b16 %v2421, %v2413
    %v2950 = vpack.c.b16 %v2422, %v2414
    %v2951 = vpack.c.b16 %v2431, %v2423
    %v2952 = vpack.c.b16 %v2432, %v2424
    %v2953 = vpack.c.b16 %v2433, %v2425
    %v2954 = vpack.c.b16 %v2434, %v2426
    %v2955 = vpack.c.b16 %v2435, %v2427
    %v2956 = vpack.c.b16 %v2436, %v2428
    %v2957 = vpack.c.b16 %v2437, %v2429
    %v2958 = vpack.c.b16 %v2438, %v2430
    %v2959 = vpack.c.b16 %v2447, %v2439
    %v2960 = vpack.c.b16 %v2448, %v2440
    %v2961 = vpack.c.b16 %v2449, %v2441
    %v2962 = vpack.c.b16 %v2450, %v2442
    %v2963 = vpack.c.b16 %v2451, %v2443
    %v2964 = vpack.c.b16 %v2452, %v2444
    %v2965 = vpack.c.b16 %v2453, %v2445
    %v2966 = vpack.c.b16 %v2454, %v2446
    %3479 = vmatprep.subr.bf16.mxu0 %v2456
    %3480 = vmatpush1.bf16.msra.mxu0 %v2455
    %3481 = vmatprep.subr.bf16.mxu0 %v2464
    %3482 = vmatpush1.bf16.msra.mxu0 %v2463
    %3483 = vmatprep.subr.bf16.mxu0 %v2472
    %3484 = vmatpush1.bf16.msra.mxu0 %v2471
    %3485 = vmatprep.subr.bf16.mxu0 %v2480
    %3486 = vmatpush1.bf16.msra.mxu0 %v2479
    %3487 = vmatprep.subr.bf16.mxu0 %v2488
    %3488 = vmatpush1.bf16.msra.mxu0 %v2487
    %3489 = vmatprep.subr.bf16.mxu0 %v2496
    %3490 = vmatpush1.bf16.msra.mxu0 %v2495
    %3491 = vmatprep.subr.bf16.mxu0 %v2504
    %3492 = vmatpush1.bf16.msra.mxu0 %v2503
    %3493 = vmatprep.subr.bf16.mxu0 %v2512
    %3494 = vmatpush1.bf16.msra.mxu0 %v2511
    %3495 = vmatprep.subr.bf16.mxu0 %v2520
    %3496 = vmatpush1.bf16.msra.mxu0 %v2519
    %3497 = vmatprep.subr.bf16.mxu0 %v2528
    %3498 = vmatpush1.bf16.msra.mxu0 %v2527
    %3499 = vmatprep.subr.bf16.mxu0 %v2536
    %3500 = vmatpush1.bf16.msra.mxu0 %v2535
    %3501 = vmatprep.subr.bf16.mxu0 %v2544
    %3502 = vmatpush1.bf16.msra.mxu0 %v2543
    %3503 = vmatprep.subr.bf16.mxu0 %v2552
    %3504 = vmatpush1.bf16.msra.mxu0 %v2551
    %3505 = vmatprep.subr.bf16.mxu0 %v2560
    %3506 = vmatpush1.bf16.msra.mxu0 %v2559
    %3507 = vmatprep.subr.bf16.mxu0 %v2568
    %3508 = vmatpush1.bf16.msra.mxu0 %v2567
    %3509 = vmatprep.subr.bf16.mxu0 %v2576
    %3510 = vmatpush1.bf16.msra.mxu0 %v2575
    %3511 = vmatprep.mubr.bf16.mxu0 %v904
    %3512 = vmatmul.mubr.bf16.gmra.mrb[0].mxu0 %v903
    %v3513 = vpop.f32.mrb[0].mxu0
    %v3514 = vadd.f32 %v825, %v3513
    %v3515 = vpop.f32.mrb[0].mxu0
    %v3516 = vadd.f32 %v829, %v3515
    %v3517 = vpop.f32.mrb[0].mxu0
    %v3518 = vpop.f32.mrb[0].mxu0
    %3519 = vdwg.mxu0
    %3520 = vmatprep.subr.bf16.mxu0 %v2584
    %3521 = vmatpush1.bf16.msra.mxu0 %v2583
    %3522 = vmatprep.subr.bf16.mxu0 %v2592
    %3523 = vmatpush1.bf16.msra.mxu0 %v2591
    %3524 = vmatprep.subr.bf16.mxu0 %v2600
    %3525 = vmatpush1.bf16.msra.mxu0 %v2599
    %3526 = vmatprep.subr.bf16.mxu0 %v2608
    %3527 = vmatpush1.bf16.msra.mxu0 %v2607
    %3528 = vmatprep.subr.bf16.mxu0 %v2616
    %3529 = vmatpush1.bf16.msra.mxu0 %v2615
    %3530 = vmatprep.subr.bf16.mxu0 %v2624
    %3531 = vmatpush1.bf16.msra.mxu0 %v2623
    %3532 = vmatprep.subr.bf16.mxu0 %v2632
    %3533 = vmatpush1.bf16.msra.mxu0 %v2631
    %3534 = vmatprep.subr.bf16.mxu0 %v2640
    %3535 = vmatpush1.bf16.msra.mxu0 %v2639
    %3536 = vmatprep.subr.bf16.mxu0 %v2648
    %3537 = vmatpush1.bf16.msra.mxu0 %v2647
    %3538 = vmatprep.subr.bf16.mxu0 %v2656
    %3539 = vmatpush1.bf16.msra.mxu0 %v2655
    %3540 = vmatprep.subr.bf16.mxu0 %v2664
    %3541 = vmatpush1.bf16.msra.mxu0 %v2663
    %3542 = vmatprep.subr.bf16.mxu0 %v2672
    %3543 = vmatpush1.bf16.msra.mxu0 %v2671
    %3544 = vmatprep.subr.bf16.mxu0 %v2680
    %3545 = vmatpush1.bf16.msra.mxu0 %v2679
    %3546 = vmatprep.subr.bf16.mxu0 %v2688
    %3547 = vmatpush1.bf16.msra.mxu0 %v2687
    %3548 = vmatprep.subr.bf16.mxu0 %v2696
    %3549 = vmatpush1.bf16.msra.mxu0 %v2695
    %3550 = vmatprep.subr.bf16.mxu0 %v2704
    %3551 = vmatpush1.bf16.msra.mxu0 %v2703
    %3552 = vmatprep.mubr.bf16.mxu0 %v906
    %3553 = vmatmul.mubr.bf16.gmra.mrb[0].mxu0 %v905
    %v3554 = vpop.f32.mrb[0].mxu0
    %v3555 = vadd.f32 %v3514, %v3554
    %v3556 = vpop.f32.mrb[0].mxu0
    %v3557 = vadd.f32 %v3516, %v3556
    %v3558 = vpop.f32.mrb[0].mxu0
    %v3559 = vpop.f32.mrb[0].mxu0
    %3560 = vdwg.mxu0
    %3561 = vmatprep.subr.bf16.mxu0 %v2712
    %3562 = vmatpush1.bf16.msra.mxu0 %v2711
    %3563 = vmatprep.subr.bf16.mxu0 %v2720
    %3564 = vmatpush1.bf16.msra.mxu0 %v2719
    %3565 = vmatprep.subr.bf16.mxu0 %v2728
    %3566 = vmatpush1.bf16.msra.mxu0 %v2727
    %3567 = vmatprep.subr.bf16.mxu0 %v2736
    %3568 = vmatpush1.bf16.msra.mxu0 %v2735
    %3569 = vmatprep.subr.bf16.mxu0 %v2744
    %3570 = vmatpush1.bf16.msra.mxu0 %v2743
    %3571 = vmatprep.subr.bf16.mxu0 %v2752
    %3572 = vmatpush1.bf16.msra.mxu0 %v2751
    %3573 = vmatprep.subr.bf16.mxu0 %v2760
    %3574 = vmatpush1.bf16.msra.mxu0 %v2759
    %3575 = vmatprep.subr.bf16.mxu0 %v2768
    %3576 = vmatpush1.bf16.msra.mxu0 %v2767
    %3577 = vmatprep.subr.bf16.mxu0 %v2776
    %3578 = vmatpush1.bf16.msra.mxu0 %v2775
    %3579 = vmatprep.subr.bf16.mxu0 %v2784
    %3580 = vmatpush1.bf16.msra.mxu0 %v2783
    %3581 = vmatprep.subr.bf16.mxu0 %v2792
    %3582 = vmatpush1.bf16.msra.mxu0 %v2791
    %3583 = vmatprep.subr.bf16.mxu0 %v2800
    %3584 = vmatpush1.bf16.msra.mxu0 %v2799
    %3585 = vmatprep.subr.bf16.mxu0 %v2808
    %3586 = vmatpush1.bf16.msra.mxu0 %v2807
    %3587 = vmatprep.subr.bf16.mxu0 %v2816
    %3588 = vmatpush1.bf16.msra.mxu0 %v2815
    %3589 = vmatprep.subr.bf16.mxu0 %v2824
    %3590 = vmatpush1.bf16.msra.mxu0 %v2823
    %3591 = vmatprep.subr.bf16.mxu0 %v2832
    %3592 = vmatpush1.bf16.msra.mxu0 %v2831
    %3593 = vmatprep.mubr.bf16.mxu0 %v908
    %3594 = vmatmul.mubr.bf16.gmra.mrb[0].mxu0 %v907
    %v3595 = vpop.f32.mrb[0].mxu0
    %v3596 = vadd.f32 %v3555, %v3595
    %v3597 = vpop.f32.mrb[0].mxu0
    %v3598 = vadd.f32 %v3557, %v3597
    %v3599 = vpop.f32.mrb[0].mxu0
    %v3600 = vpop.f32.mrb[0].mxu0
    %3601 = vdwg.mxu0
    %3602 = vmatprep.subr.bf16.mxu0 %v2840
    %3603 = vmatpush1.bf16.msra.mxu0 %v2839
    %3604 = vmatprep.subr.bf16.mxu0 %v2848
    %3605 = vmatpush1.bf16.msra.mxu0 %v2847
    %3606 = vmatprep.subr.bf16.mxu0 %v2856
    %3607 = vmatpush1.bf16.msra.mxu0 %v2855
    %3608 = vmatprep.subr.bf16.mxu0 %v2864
    %3609 = vmatpush1.bf16.msra.mxu0 %v2863
    %3610 = vmatprep.subr.bf16.mxu0 %v2872
    %3611 = vmatpush1.bf16.msra.mxu0 %v2871
    %3612 = vmatprep.subr.bf16.mxu0 %v2880
    %3613 = vmatpush1.bf16.msra.mxu0 %v2879
    %3614 = vmatprep.subr.bf16.mxu0 %v2888
    %3615 = vmatpush1.bf16.msra.mxu0 %v2887
    %3616 = vmatprep.subr.bf16.mxu0 %v2896
    %3617 = vmatpush1.bf16.msra.mxu0 %v2895
    %3618 = vmatprep.subr.bf16.mxu0 %v2904
    %3619 = vmatpush1.bf16.msra.mxu0 %v2903
    %3620 = vmatprep.subr.bf16.mxu0 %v2912
    %3621 = vmatpush1.bf16.msra.mxu0 %v2911
    %3622 = vmatprep.subr.bf16.mxu0 %v2920
    %3623 = vmatpush1.bf16.msra.mxu0 %v2919
    %3624 = vmatprep.subr.bf16.mxu0 %v2928
    %3625 = vmatpush1.bf16.msra.mxu0 %v2927
    %3626 = vmatprep.subr.bf16.mxu0 %v2936
    %3627 = vmatpush1.bf16.msra.mxu0 %v2935
    %3628 = vmatprep.subr.bf16.mxu0 %v2944
    %3629 = vmatpush1.bf16.msra.mxu0 %v2943
    %3630 = vmatprep.subr.bf16.mxu0 %v2952
    %3631 = vmatpush1.bf16.msra.mxu0 %v2951
    %3632 = vmatprep.subr.bf16.mxu0 %v2960
    %3633 = vmatpush1.bf16.msra.mxu0 %v2959
    %3634 = vmatprep.mubr.bf16.mxu0 %v910
    %3635 = vmatmul.mubr.bf16.gmra.mrb[0].mxu0 %v909
    %v3636 = vpop.f32.mrb[0].mxu0
    %v3637 = vadd.f32 %v3596, %v3636
    %v3638 = vpop.f32.mrb[0].mxu0
    %v3639 = vadd.f32 %v3598, %v3638
    %v3640 = vpop.f32.mrb[0].mxu0
    %v3641 = vpop.f32.mrb[0].mxu0
    %3642 = vdwg.mxu0
    %3643 = vmatprep.subr.bf16.mxu0 %v2458
    %3644 = vmatpush1.bf16.msra.mxu0 %v2457
    %3645 = vmatprep.subr.bf16.mxu0 %v2466
    %3646 = vmatpush1.bf16.msra.mxu0 %v2465
    %3647 = vmatprep.subr.bf16.mxu0 %v2474
    %3648 = vmatpush1.bf16.msra.mxu0 %v2473
    %3649 = vmatprep.subr.bf16.mxu0 %v2482
    %3650 = vmatpush1.bf16.msra.mxu0 %v2481
    %3651 = vmatprep.subr.bf16.mxu0 %v2490
    %3652 = vmatpush1.bf16.msra.mxu0 %v2489
    %3653 = vmatprep.subr.bf16.mxu0 %v2498
    %3654 = vmatpush1.bf16.msra.mxu0 %v2497
    %3655 = vmatprep.subr.bf16.mxu0 %v2506
    %3656 = vmatpush1.bf16.msra.mxu0 %v2505
    %3657 = vmatprep.subr.bf16.mxu0 %v2514
    %3658 = vmatpush1.bf16.msra.mxu0 %v2513
    %3659 = vmatprep.subr.bf16.mxu0 %v2522
    %3660 = vmatpush1.bf16.msra.mxu0 %v2521
    %3661 = vmatprep.subr.bf16.mxu0 %v2530
    %3662 = vmatpush1.bf16.msra.mxu0 %v2529
    %3663 = vmatprep.subr.bf16.mxu0 %v2538
    %3664 = vmatpush1.bf16.msra.mxu0 %v2537
    %3665 = vmatprep.subr.bf16.mxu0 %v2546
    %3666 = vmatpush1.bf16.msra.mxu0 %v2545
    %3667 = vmatprep.subr.bf16.mxu0 %v2554
    %3668 = vmatpush1.bf16.msra.mxu0 %v2553
    %3669 = vmatprep.subr.bf16.mxu0 %v2562
    %3670 = vmatpush1.bf16.msra.mxu0 %v2561
    %3671 = vmatprep.subr.bf16.mxu0 %v2570
    %3672 = vmatpush1.bf16.msra.mxu0 %v2569
    %3673 = vmatprep.subr.bf16.mxu0 %v2578
    %3674 = vmatpush1.bf16.msra.mxu0 %v2577
    %3675 = vmatprep.mubr.bf16.mxu0 %v904
    %3676 = vmatmul.mubr.bf16.gmra.mrb[0].mxu0 %v903
    %v3677 = vpop.f32.mrb[0].mxu0
    %v3678 = vadd.f32 %v833, %v3677
    %v3679 = vpop.f32.mrb[0].mxu0
    %v3680 = vadd.f32 %v837, %v3679
    %v3681 = vpop.f32.mrb[0].mxu0
    %v3682 = vpop.f32.mrb[0].mxu0
    %3683 = vdwg.mxu0
    %3684 = vmatprep.subr.bf16.mxu0 %v2586
    %3685 = vmatpush1.bf16.msra.mxu0 %v2585
    %3686 = vmatprep.subr.bf16.mxu0 %v2594
    %3687 = vmatpush1.bf16.msra.mxu0 %v2593
    %3688 = vmatprep.subr.bf16.mxu0 %v2602
    %3689 = vmatpush1.bf16.msra.mxu0 %v2601
    %3690 = vmatprep.subr.bf16.mxu0 %v2610
    %3691 = vmatpush1.bf16.msra.mxu0 %v2609
    %3692 = vmatprep.subr.bf16.mxu0 %v2618
    %3693 = vmatpush1.bf16.msra.mxu0 %v2617
    %3694 = vmatprep.subr.bf16.mxu0 %v2626
    %3695 = vmatpush1.bf16.msra.mxu0 %v2625
    %3696 = vmatprep.subr.bf16.mxu0 %v2634
    %3697 = vmatpush1.bf16.msra.mxu0 %v2633
    %3698 = vmatprep.subr.bf16.mxu0 %v2642
    %3699 = vmatpush1.bf16.msra.mxu0 %v2641
    %3700 = vmatprep.subr.bf16.mxu0 %v2650
    %3701 = vmatpush1.bf16.msra.mxu0 %v2649
    %3702 = vmatprep.subr.bf16.mxu0 %v2658
    %3703 = vmatpush1.bf16.msra.mxu0 %v2657
    %3704 = vmatprep.subr.bf16.mxu0 %v2666
    %3705 = vmatpush1.bf16.msra.mxu0 %v2665
    %3706 = vmatprep.subr.bf16.mxu0 %v2674
    %3707 = vmatpush1.bf16.msra.mxu0 %v2673
    %3708 = vmatprep.subr.bf16.mxu0 %v2682
    %3709 = vmatpush1.bf16.msra.mxu0 %v2681
    %3710 = vmatprep.subr.bf16.mxu0 %v2690
    %3711 = vmatpush1.bf16.msra.mxu0 %v2689
    %3712 = vmatprep.subr.bf16.mxu0 %v2698
    %3713 = vmatpush1.bf16.msra.mxu0 %v2697
    %3714 = vmatprep.subr.bf16.mxu0 %v2706
    %3715 = vmatpush1.bf16.msra.mxu0 %v2705
    %3716 = vmatprep.mubr.bf16.mxu0 %v906
    %3717 = vmatmul.mubr.bf16.gmra.mrb[0].mxu0 %v905
    %v3718 = vpop.f32.mrb[0].mxu0
    %v3719 = vadd.f32 %v3678, %v3718
    %v3720 = vpop.f32.mrb[0].mxu0
    %v3721 = vadd.f32 %v3680, %v3720
    %v3722 = vpop.f32.mrb[0].mxu0
    %v3723 = vpop.f32.mrb[0].mxu0
    %3724 = vdwg.mxu0
    %3725 = vmatprep.subr.bf16.mxu0 %v2714
    %3726 = vmatpush1.bf16.msra.mxu0 %v2713
    %3727 = vmatprep.subr.bf16.mxu0 %v2722
    %3728 = vmatpush1.bf16.msra.mxu0 %v2721
    %3729 = vmatprep.subr.bf16.mxu0 %v2730
    %3730 = vmatpush1.bf16.msra.mxu0 %v2729
    %3731 = vmatprep.subr.bf16.mxu0 %v2738
    %3732 = vmatpush1.bf16.msra.mxu0 %v2737
    %3733 = vmatprep.subr.bf16.mxu0 %v2746
    %3734 = vmatpush1.bf16.msra.mxu0 %v2745
    %3735 = vmatprep.subr.bf16.mxu0 %v2754
    %3736 = vmatpush1.bf16.msra.mxu0 %v2753
    %3737 = vmatprep.subr.bf16.mxu0 %v2762
    %3738 = vmatpush1.bf16.msra.mxu0 %v2761
    %3739 = vmatprep.subr.bf16.mxu0 %v2770
    %3740 = vmatpush1.bf16.msra.mxu0 %v2769
    %3741 = vmatprep.subr.bf16.mxu0 %v2778
    %3742 = vmatpush1.bf16.msra.mxu0 %v2777
    %3743 = vmatprep.subr.bf16.mxu0 %v2786
    %3744 = vmatpush1.bf16.msra.mxu0 %v2785
    %3745 = vmatprep.subr.bf16.mxu0 %v2794
    %3746 = vmatpush1.bf16.msra.mxu0 %v2793
    %3747 = vmatprep.subr.bf16.mxu0 %v2802
    %3748 = vmatpush1.bf16.msra.mxu0 %v2801
    %3749 = vmatprep.subr.bf16.mxu0 %v2810
    %3750 = vmatpush1.bf16.msra.mxu0 %v2809
    %3751 = vmatprep.subr.bf16.mxu0 %v2818
    %3752 = vmatpush1.bf16.msra.mxu0 %v2817
    %3753 = vmatprep.subr.bf16.mxu0 %v2826
    %3754 = vmatpush1.bf16.msra.mxu0 %v2825
    %3755 = vmatprep.subr.bf16.mxu0 %v2834
    %3756 = vmatpush1.bf16.msra.mxu0 %v2833
    %3757 = vmatprep.mubr.bf16.mxu0 %v908
    %3758 = vmatmul.mubr.bf16.gmra.mrb[0].mxu0 %v907
    %v3759 = vpop.f32.mrb[0].mxu0
    %v3760 = vadd.f32 %v3719, %v3759
    %v3761 = vpop.f32.mrb[0].mxu0
    %v3762 = vadd.f32 %v3721, %v3761
    %v3763 = vpop.f32.mrb[0].mxu0
    %v3764 = vpop.f32.mrb[0].mxu0
    %3765 = vdwg.mxu0
    %3766 = vmatprep.subr.bf16.mxu0 %v2842
    %3767 = vmatpush1.bf16.msra.mxu0 %v2841
    %3768 = vmatprep.subr.bf16.mxu0 %v2850
    %3769 = vmatpush1.bf16.msra.mxu0 %v2849
    %3770 = vmatprep.subr.bf16.mxu0 %v2858
    %3771 = vmatpush1.bf16.msra.mxu0 %v2857
    %3772 = vmatprep.subr.bf16.mxu0 %v2866
    %3773 = vmatpush1.bf16.msra.mxu0 %v2865
    %3774 = vmatprep.subr.bf16.mxu0 %v2874
    %3775 = vmatpush1.bf16.msra.mxu0 %v2873
    %3776 = vmatprep.subr.bf16.mxu0 %v2882
    %3777 = vmatpush1.bf16.msra.mxu0 %v2881
    %3778 = vmatprep.subr.bf16.mxu0 %v2890
    %3779 = vmatpush1.bf16.msra.mxu0 %v2889
    %3780 = vmatprep.subr.bf16.mxu0 %v2898
    %3781 = vmatpush1.bf16.msra.mxu0 %v2897
    %3782 = vmatprep.subr.bf16.mxu0 %v2906
    %3783 = vmatpush1.bf16.msra.mxu0 %v2905
    %3784 = vmatprep.subr.bf16.mxu0 %v2914
    %3785 = vmatpush1.bf16.msra.mxu0 %v2913
    %3786 = vmatprep.subr.bf16.mxu0 %v2922
    %3787 = vmatpush1.bf16.msra.mxu0 %v2921
    %3788 = vmatprep.subr.bf16.mxu0 %v2930
    %3789 = vmatpush1.bf16.msra.mxu0 %v2929
    %3790 = vmatprep.subr.bf16.mxu0 %v2938
    %3791 = vmatpush1.bf16.msra.mxu0 %v2937
    %3792 = vmatprep.subr.bf16.mxu0 %v2946
    %3793 = vmatpush1.bf16.msra.mxu0 %v2945
    %3794 = vmatprep.subr.bf16.mxu0 %v2954
    %3795 = vmatpush1.bf16.msra.mxu0 %v2953
    %3796 = vmatprep.subr.bf16.mxu0 %v2962
    %3797 = vmatpush1.bf16.msra.mxu0 %v2961
    %3798 = vmatprep.mubr.bf16.mxu0 %v910
    %3799 = vmatmul.mubr.bf16.gmra.mrb[0].mxu0 %v909
    %v3800 = vpop.f32.mrb[0].mxu0
    %v3801 = vadd.f32 %v3760, %v3800
    %v3802 = vpop.f32.mrb[0].mxu0
    %v3803 = vadd.f32 %v3762, %v3802
    %v3804 = vpop.f32.mrb[0].mxu0
    %v3805 = vpop.f32.mrb[0].mxu0
    %3806 = vdwg.mxu0
    %3807 = vmatprep.subr.bf16.mxu0 %v2460
    %3808 = vmatpush1.bf16.msra.mxu0 %v2459
    %3809 = vmatprep.subr.bf16.mxu0 %v2468
    %3810 = vmatpush1.bf16.msra.mxu0 %v2467
    %3811 = vmatprep.subr.bf16.mxu0 %v2476
    %3812 = vmatpush1.bf16.msra.mxu0 %v2475
    %3813 = vmatprep.subr.bf16.mxu0 %v2484
    %3814 = vmatpush1.bf16.msra.mxu0 %v2483
    %3815 = vmatprep.subr.bf16.mxu0 %v2492
    %3816 = vmatpush1.bf16.msra.mxu0 %v2491
    %3817 = vmatprep.subr.bf16.mxu0 %v2500
    %3818 = vmatpush1.bf16.msra.mxu0 %v2499
    %3819 = vmatprep.subr.bf16.mxu0 %v2508
    %3820 = vmatpush1.bf16.msra.mxu0 %v2507
    %3821 = vmatprep.subr.bf16.mxu0 %v2516
    %3822 = vmatpush1.bf16.msra.mxu0 %v2515
    %3823 = vmatprep.subr.bf16.mxu0 %v2524
    %3824 = vmatpush1.bf16.msra.mxu0 %v2523
    %3825 = vmatprep.subr.bf16.mxu0 %v2532
    %3826 = vmatpush1.bf16.msra.mxu0 %v2531
    %3827 = vmatprep.subr.bf16.mxu0 %v2540
    %3828 = vmatpush1.bf16.msra.mxu0 %v2539
    %3829 = vmatprep.subr.bf16.mxu0 %v2548
    %3830 = vmatpush1.bf16.msra.mxu0 %v2547
    %3831 = vmatprep.subr.bf16.mxu0 %v2556
    %3832 = vmatpush1.bf16.msra.mxu0 %v2555
    %3833 = vmatprep.subr.bf16.mxu0 %v2564
    %3834 = vmatpush1.bf16.msra.mxu0 %v2563
    %3835 = vmatprep.subr.bf16.mxu0 %v2572
    %3836 = vmatpush1.bf16.msra.mxu0 %v2571
    %3837 = vmatprep.subr.bf16.mxu0 %v2580
    %3838 = vmatpush1.bf16.msra.mxu0 %v2579
    %3839 = vmatprep.mubr.bf16.mxu0 %v904
    %3840 = vmatmul.mubr.bf16.gmra.mrb[0].mxu0 %v903
    %v3841 = vpop.f32.mrb[0].mxu0
    %v3842 = vadd.f32 %v841, %v3841
    %v3843 = vpop.f32.mrb[0].mxu0
    %v3844 = vadd.f32 %v845, %v3843
    %v3845 = vpop.f32.mrb[0].mxu0
    %v3846 = vpop.f32.mrb[0].mxu0
    %3847 = vdwg.mxu0
    %3848 = vmatprep.subr.bf16.mxu0 %v2588
    %3849 = vmatpush1.bf16.msra.mxu0 %v2587
    %3850 = vmatprep.subr.bf16.mxu0 %v2596
    %3851 = vmatpush1.bf16.msra.mxu0 %v2595
    %3852 = vmatprep.subr.bf16.mxu0 %v2604
    %3853 = vmatpush1.bf16.msra.mxu0 %v2603
    %3854 = vmatprep.subr.bf16.mxu0 %v2612
    %3855 = vmatpush1.bf16.msra.mxu0 %v2611
    %3856 = vmatprep.subr.bf16.mxu0 %v2620
    %3857 = vmatpush1.bf16.msra.mxu0 %v2619
    %3858 = vmatprep.subr.bf16.mxu0 %v2628
    %3859 = vmatpush1.bf16.msra.mxu0 %v2627
    %3860 = vmatprep.subr.bf16.mxu0 %v2636
    %3861 = vmatpush1.bf16.msra.mxu0 %v2635
    %3862 = vmatprep.subr.bf16.mxu0 %v2644
    %3863 = vmatpush1.bf16.msra.mxu0 %v2643
    %3864 = vmatprep.subr.bf16.mxu0 %v2652
    %3865 = vmatpush1.bf16.msra.mxu0 %v2651
    %3866 = vmatprep.subr.bf16.mxu0 %v2660
    %3867 = vmatpush1.bf16.msra.mxu0 %v2659
    %3868 = vmatprep.subr.bf16.mxu0 %v2668
    %3869 = vmatpush1.bf16.msra.mxu0 %v2667
    %3870 = vmatprep.subr.bf16.mxu0 %v2676
    %3871 = vmatpush1.bf16.msra.mxu0 %v2675
    %3872 = vmatprep.subr.bf16.mxu0 %v2684
    %3873 = vmatpush1.bf16.msra.mxu0 %v2683
    %3874 = vmatprep.subr.bf16.mxu0 %v2692
    %3875 = vmatpush1.bf16.msra.mxu0 %v2691
    %3876 = vmatprep.subr.bf16.mxu0 %v2700
    %3877 = vmatpush1.bf16.msra.mxu0 %v2699
    %3878 = vmatprep.subr.bf16.mxu0 %v2708
    %3879 = vmatpush1.bf16.msra.mxu0 %v2707
    %3880 = vmatprep.mubr.bf16.mxu0 %v906
    %3881 = vmatmul.mubr.bf16.gmra.mrb[0].mxu0 %v905
    %v3882 = vpop.f32.mrb[0].mxu0
    %v3883 = vadd.f32 %v3842, %v3882
    %v3884 = vpop.f32.mrb[0].mxu0
    %v3885 = vadd.f32 %v3844, %v3884
    %v3886 = vpop.f32.mrb[0].mxu0
    %v3887 = vpop.f32.mrb[0].mxu0
    %3888 = vdwg.mxu0
    %3889 = vmatprep.subr.bf16.mxu0 %v2716
    %3890 = vmatpush1.bf16.msra.mxu0 %v2715
    %3891 = vmatprep.subr.bf16.mxu0 %v2724
    %3892 = vmatpush1.bf16.msra.mxu0 %v2723
    %3893 = vmatprep.subr.bf16.mxu0 %v2732
    %3894 = vmatpush1.bf16.msra.mxu0 %v2731
    %3895 = vmatprep.subr.bf16.mxu0 %v2740
    %3896 = vmatpush1.bf16.msra.mxu0 %v2739
    %3897 = vmatprep.subr.bf16.mxu0 %v2748
    %3898 = vmatpush1.bf16.msra.mxu0 %v2747
    %3899 = vmatprep.subr.bf16.mxu0 %v2756
    %3900 = vmatpush1.bf16.msra.mxu0 %v2755
    %3901 = vmatprep.subr.bf16.mxu0 %v2764
    %3902 = vmatpush1.bf16.msra.mxu0 %v2763
    %3903 = vmatprep.subr.bf16.mxu0 %v2772
    %3904 = vmatpush1.bf16.msra.mxu0 %v2771
    %3905 = vmatprep.subr.bf16.mxu0 %v2780
    %3906 = vmatpush1.bf16.msra.mxu0 %v2779
    %3907 = vmatprep.subr.bf16.mxu0 %v2788
    %3908 = vmatpush1.bf16.msra.mxu0 %v2787
    %3909 = vmatprep.subr.bf16.mxu0 %v2796
    %3910 = vmatpush1.bf16.msra.mxu0 %v2795
    %3911 = vmatprep.subr.bf16.mxu0 %v2804
    %3912 = vmatpush1.bf16.msra.mxu0 %v2803
    %3913 = vmatprep.subr.bf16.mxu0 %v2812
    %3914 = vmatpush1.bf16.msra.mxu0 %v2811
    %3915 = vmatprep.subr.bf16.mxu0 %v2820
    %3916 = vmatpush1.bf16.msra.mxu0 %v2819
    %3917 = vmatprep.subr.bf16.mxu0 %v2828
    %3918 = vmatpush1.bf16.msra.mxu0 %v2827
    %3919 = vmatprep.subr.bf16.mxu0 %v2836
    %3920 = vmatpush1.bf16.msra.mxu0 %v2835
    %3921 = vmatprep.mubr.bf16.mxu0 %v908
    %3922 = vmatmul.mubr.bf16.gmra.mrb[0].mxu0 %v907
    %v3923 = vpop.f32.mrb[0].mxu0
    %v3924 = vadd.f32 %v3883, %v3923
    %v3925 = vpop.f32.mrb[0].mxu0
    %v3926 = vadd.f32 %v3885, %v3925
    %v3927 = vpop.f32.mrb[0].mxu0
    %v3928 = vpop.f32.mrb[0].mxu0
    %3929 = vdwg.mxu0
    %3930 = vmatprep.subr.bf16.mxu0 %v2844
    %3931 = vmatpush1.bf16.msra.mxu0 %v2843
    %3932 = vmatprep.subr.bf16.mxu0 %v2852
    %3933 = vmatpush1.bf16.msra.mxu0 %v2851
    %3934 = vmatprep.subr.bf16.mxu0 %v2860
    %3935 = vmatpush1.bf16.msra.mxu0 %v2859
    %3936 = vmatprep.subr.bf16.mxu0 %v2868
    %3937 = vmatpush1.bf16.msra.mxu0 %v2867
    %3938 = vmatprep.subr.bf16.mxu0 %v2876
    %3939 = vmatpush1.bf16.msra.mxu0 %v2875
    %3940 = vmatprep.subr.bf16.mxu0 %v2884
    %3941 = vmatpush1.bf16.msra.mxu0 %v2883
    %3942 = vmatprep.subr.bf16.mxu0 %v2892
    %3943 = vmatpush1.bf16.msra.mxu0 %v2891
    %3944 = vmatprep.subr.bf16.mxu0 %v2900
    %3945 = vmatpush1.bf16.msra.mxu0 %v2899
    %3946 = vmatprep.subr.bf16.mxu0 %v2908
    %3947 = vmatpush1.bf16.msra.mxu0 %v2907
    %3948 = vmatprep.subr.bf16.mxu0 %v2916
    %3949 = vmatpush1.bf16.msra.mxu0 %v2915
    %3950 = vmatprep.subr.bf16.mxu0 %v2924
    %3951 = vmatpush1.bf16.msra.mxu0 %v2923
    %3952 = vmatprep.subr.bf16.mxu0 %v2932
    %3953 = vmatpush1.bf16.msra.mxu0 %v2931
    %3954 = vmatprep.subr.bf16.mxu0 %v2940
    %3955 = vmatpush1.bf16.msra.mxu0 %v2939
    %3956 = vmatprep.subr.bf16.mxu0 %v2948
    %3957 = vmatpush1.bf16.msra.mxu0 %v2947
    %3958 = vmatprep.subr.bf16.mxu0 %v2956
    %3959 = vmatpush1.bf16.msra.mxu0 %v2955
    %3960 = vmatprep.subr.bf16.mxu0 %v2964
    %3961 = vmatpush1.bf16.msra.mxu0 %v2963
    %3962 = vmatprep.mubr.bf16.mxu0 %v910
    %3963 = vmatmul.mubr.bf16.gmra.mrb[0].mxu0 %v909
    %v3964 = vpop.f32.mrb[0].mxu0
    %v3965 = vadd.f32 %v3924, %v3964
    %v3966 = vpop.f32.mrb[0].mxu0
    %v3967 = vadd.f32 %v3926, %v3966
    %v3968 = vpop.f32.mrb[0].mxu0
    %v3969 = vpop.f32.mrb[0].mxu0
    %3970 = vdwg.mxu0
    %3971 = vmatprep.subr.bf16.mxu0 %v2462
    %3972 = vmatpush1.bf16.msra.mxu0 %v2461
    %3973 = vmatprep.subr.bf16.mxu0 %v2470
    %3974 = vmatpush1.bf16.msra.mxu0 %v2469
    %3975 = vmatprep.subr.bf16.mxu0 %v2478
    %3976 = vmatpush1.bf16.msra.mxu0 %v2477
    %3977 = vmatprep.subr.bf16.mxu0 %v2486
    %3978 = vmatpush1.bf16.msra.mxu0 %v2485
    %3979 = vmatprep.subr.bf16.mxu0 %v2494
    %3980 = vmatpush1.bf16.msra.mxu0 %v2493
    %3981 = vmatprep.subr.bf16.mxu0 %v2502
    %3982 = vmatpush1.bf16.msra.mxu0 %v2501
    %3983 = vmatprep.subr.bf16.mxu0 %v2510
    %3984 = vmatpush1.bf16.msra.mxu0 %v2509
    %3985 = vmatprep.subr.bf16.mxu0 %v2518
    %3986 = vmatpush1.bf16.msra.mxu0 %v2517
    %3987 = vmatprep.subr.bf16.mxu0 %v2526
    %3988 = vmatpush1.bf16.msra.mxu0 %v2525
    %3989 = vmatprep.subr.bf16.mxu0 %v2534
    %3990 = vmatpush1.bf16.msra.mxu0 %v2533
    %3991 = vmatprep.subr.bf16.mxu0 %v2542
    %3992 = vmatpush1.bf16.msra.mxu0 %v2541
    %3993 = vmatprep.subr.bf16.mxu0 %v2550
    %3994 = vmatpush1.bf16.msra.mxu0 %v2549
    %3995 = vmatprep.subr.bf16.mxu0 %v2558
    %3996 = vmatpush1.bf16.msra.mxu0 %v2557
    %3997 = vmatprep.subr.bf16.mxu0 %v2566
    %3998 = vmatpush1.bf16.msra.mxu0 %v2565
    %3999 = vmatprep.subr.bf16.mxu0 %v2574
    %4000 = vmatpush1.bf16.msra.mxu0 %v2573
    %4001 = vmatprep.subr.bf16.mxu0 %v2582
    %4002 = vmatpush1.bf16.msra.mxu0 %v2581
    %4003 = vmatprep.mubr.bf16.mxu0 %v904
    %4004 = vmatmul.mubr.bf16.gmra.mrb[0].mxu0 %v903
    %v4005 = vpop.f32.mrb[0].mxu0
    %v4006 = vadd.f32 %v849, %v4005
    %v4007 = vpop.f32.mrb[0].mxu0
    %v4008 = vadd.f32 %v853, %v4007
    %v4009 = vpop.f32.mrb[0].mxu0
    %v4010 = vpop.f32.mrb[0].mxu0
    %4011 = vdwg.mxu0
    %4012 = vmatprep.subr.bf16.mxu0 %v2590
    %4013 = vmatpush1.bf16.msra.mxu0 %v2589
    %4014 = vmatprep.subr.bf16.mxu0 %v2598
    %4015 = vmatpush1.bf16.msra.mxu0 %v2597
    %4016 = vmatprep.subr.bf16.mxu0 %v2606
    %4017 = vmatpush1.bf16.msra.mxu0 %v2605
    %4018 = vmatprep.subr.bf16.mxu0 %v2614
    %4019 = vmatpush1.bf16.msra.mxu0 %v2613
    %4020 = vmatprep.subr.bf16.mxu0 %v2622
    %4021 = vmatpush1.bf16.msra.mxu0 %v2621
    %4022 = vmatprep.subr.bf16.mxu0 %v2630
    %4023 = vmatpush1.bf16.msra.mxu0 %v2629
    %4024 = vmatprep.subr.bf16.mxu0 %v2638
    %4025 = vmatpush1.bf16.msra.mxu0 %v2637
    %4026 = vmatprep.subr.bf16.mxu0 %v2646
    %4027 = vmatpush1.bf16.msra.mxu0 %v2645
    %4028 = vmatprep.subr.bf16.mxu0 %v2654
    %4029 = vmatpush1.bf16.msra.mxu0 %v2653
    %4030 = vmatprep.subr.bf16.mxu0 %v2662
    %4031 = vmatpush1.bf16.msra.mxu0 %v2661
    %4032 = vmatprep.subr.bf16.mxu0 %v2670
    %4033 = vmatpush1.bf16.msra.mxu0 %v2669
    %4034 = vmatprep.subr.bf16.mxu0 %v2678
    %4035 = vmatpush1.bf16.msra.mxu0 %v2677
    %4036 = vmatprep.subr.bf16.mxu0 %v2686
    %4037 = vmatpush1.bf16.msra.mxu0 %v2685
    %4038 = vmatprep.subr.bf16.mxu0 %v2694
    %4039 = vmatpush1.bf16.msra.mxu0 %v2693
    %4040 = vmatprep.subr.bf16.mxu0 %v2702
    %4041 = vmatpush1.bf16.msra.mxu0 %v2701
    %4042 = vmatprep.subr.bf16.mxu0 %v2710
    %4043 = vmatpush1.bf16.msra.mxu0 %v2709
    %4044 = vmatprep.mubr.bf16.mxu0 %v906
    %4045 = vmatmul.mubr.bf16.gmra.mrb[0].mxu0 %v905
    %v4046 = vpop.f32.mrb[0].mxu0
    %v4047 = vadd.f32 %v4006, %v4046
    %v4048 = vpop.f32.mrb[0].mxu0
    %v4049 = vadd.f32 %v4008, %v4048
    %v4050 = vpop.f32.mrb[0].mxu0
    %v4051 = vpop.f32.mrb[0].mxu0
    %4052 = vdwg.mxu0
    %4053 = vmatprep.subr.bf16.mxu0 %v2718
    %4054 = vmatpush1.bf16.msra.mxu0 %v2717
    %4055 = vmatprep.subr.bf16.mxu0 %v2726
    %4056 = vmatpush1.bf16.msra.mxu0 %v2725
    %4057 = vmatprep.subr.bf16.mxu0 %v2734
    %4058 = vmatpush1.bf16.msra.mxu0 %v2733
    %4059 = vmatprep.subr.bf16.mxu0 %v2742
    %4060 = vmatpush1.bf16.msra.mxu0 %v2741
    %4061 = vmatprep.subr.bf16.mxu0 %v2750
    %4062 = vmatpush1.bf16.msra.mxu0 %v2749
    %4063 = vmatprep.subr.bf16.mxu0 %v2758
    %4064 = vmatpush1.bf16.msra.mxu0 %v2757
    %4065 = vmatprep.subr.bf16.mxu0 %v2766
    %4066 = vmatpush1.bf16.msra.mxu0 %v2765
    %4067 = vmatprep.subr.bf16.mxu0 %v2774
    %4068 = vmatpush1.bf16.msra.mxu0 %v2773
    %4069 = vmatprep.subr.bf16.mxu0 %v2782
    %4070 = vmatpush1.bf16.msra.mxu0 %v2781
    %4071 = vmatprep.subr.bf16.mxu0 %v2790
    %4072 = vmatpush1.bf16.msra.mxu0 %v2789
    %4073 = vmatprep.subr.bf16.mxu0 %v2798
    %4074 = vmatpush1.bf16.msra.mxu0 %v2797
    %4075 = vmatprep.subr.bf16.mxu0 %v2806
    %4076 = vmatpush1.bf16.msra.mxu0 %v2805
    %4077 = vmatprep.subr.bf16.mxu0 %v2814
    %4078 = vmatpush1.bf16.msra.mxu0 %v2813
    %4079 = vmatprep.subr.bf16.mxu0 %v2822
    %4080 = vmatpush1.bf16.msra.mxu0 %v2821
    %4081 = vmatprep.subr.bf16.mxu0 %v2830
    %4082 = vmatpush1.bf16.msra.mxu0 %v2829
    %4083 = vmatprep.subr.bf16.mxu0 %v2838
    %4084 = vmatpush1.bf16.msra.mxu0 %v2837
    %4085 = vmatprep.mubr.bf16.mxu0 %v908
    %4086 = vmatmul.mubr.bf16.gmra.mrb[0].mxu0 %v907
    %v4087 = vpop.f32.mrb[0].mxu0
    %v4088 = vadd.f32 %v4047, %v4087
    %v4089 = vpop.f32.mrb[0].mxu0
    %v4090 = vadd.f32 %v4049, %v4089
    %v4091 = vpop.f32.mrb[0].mxu0
    %v4092 = vpop.f32.mrb[0].mxu0
    %4093 = vdwg.mxu0
    %4094 = vmatprep.subr.bf16.mxu0 %v2846
    %4095 = vmatpush1.bf16.msra.mxu0 %v2845
    %4096 = vmatprep.subr.bf16.mxu0 %v2854
    %4097 = vmatpush1.bf16.msra.mxu0 %v2853
    %4098 = vmatprep.subr.bf16.mxu0 %v2862
    %4099 = vmatpush1.bf16.msra.mxu0 %v2861
    %4100 = vmatprep.subr.bf16.mxu0 %v2870
    %4101 = vmatpush1.bf16.msra.mxu0 %v2869
    %4102 = vmatprep.subr.bf16.mxu0 %v2878
    %4103 = vmatpush1.bf16.msra.mxu0 %v2877
    %4104 = vmatprep.subr.bf16.mxu0 %v2886
    %4105 = vmatpush1.bf16.msra.mxu0 %v2885
    %4106 = vmatprep.subr.bf16.mxu0 %v2894
    %4107 = vmatpush1.bf16.msra.mxu0 %v2893
    %4108 = vmatprep.subr.bf16.mxu0 %v2902
    %4109 = vmatpush1.bf16.msra.mxu0 %v2901
    %4110 = vmatprep.subr.bf16.mxu0 %v2910
    %4111 = vmatpush1.bf16.msra.mxu0 %v2909
    %4112 = vmatprep.subr.bf16.mxu0 %v2918
    %4113 = vmatpush1.bf16.msra.mxu0 %v2917
    %4114 = vmatprep.subr.bf16.mxu0 %v2926
    %4115 = vmatpush1.bf16.msra.mxu0 %v2925
    %4116 = vmatprep.subr.bf16.mxu0 %v2934
    %4117 = vmatpush1.bf16.msra.mxu0 %v2933
    %4118 = vmatprep.subr.bf16.mxu0 %v2942
    %4119 = vmatpush1.bf16.msra.mxu0 %v2941
    %4120 = vmatprep.subr.bf16.mxu0 %v2950
    %4121 = vmatpush1.bf16.msra.mxu0 %v2949
    %4122 = vmatprep.subr.bf16.mxu0 %v2958
    %4123 = vmatpush1.bf16.msra.mxu0 %v2957
    %4124 = vmatprep.subr.bf16.mxu0 %v2966
    %4125 = vmatpush1.bf16.msra.mxu0 %v2965
    %4126 = vmatprep.mubr.bf16.mxu0 %v910
    %4127 = vmatmul.mubr.bf16.gmra.mrb[0].mxu0 %v909
    %v4128 = vpop.f32.mrb[0].mxu0
    %v4129 = vadd.f32 %v4088, %v4128
    %v4130 = vpop.f32.mrb[0].mxu0
    %v4131 = vadd.f32 %v4090, %v4130
    %v4132 = vpop.f32.mrb[0].mxu0
    %v4133 = vpop.f32.mrb[0].mxu0
    %4134 = vdwg.mxu0
    %v4135 = vpack.c.bf16 %v276, %v276
    %v4136 = vpack.c.bf16 %v277, %v277
    %v4137 = vpack.c.bf16 %v278, %v278
    %v4138 = vpack.c.bf16 %v279, %v279
    %v4139 = vpack.c.bf16 %v280, %v280
    %v4140 = vpack.c.bf16 %v281, %v281
    %v4141 = vpack.c.bf16 %v282, %v282
    %v4142 = vpack.c.bf16 %v283, %v283
    %v4143 = vpack.c.bf16 %v284, %v284
    %v4144 = vpack.c.bf16 %v285, %v285
    %v4145 = vpack.c.bf16 %v286, %v286
    %v4146 = vpack.c.bf16 %v287, %v287
    %v4147 = vpack.c.bf16 %v288, %v288
    %v4148 = vpack.c.bf16 %v289, %v289
    %v4149 = vpack.c.bf16 %v290, %v290
    %v4150 = vpack.c.bf16 %v291, %v291
    %v4167 = vunpack.c.l.b16 %v4135
    %v4168 = vunpack.c.l.b16 %v4136
    %v4169 = vunpack.c.l.b16 %v4137
    %v4170 = vunpack.c.l.b16 %v4138
    %v4171 = vunpack.c.l.b16 %v4139
    %v4172 = vunpack.c.l.b16 %v4140
    %v4173 = vunpack.c.l.b16 %v4141
    %v4174 = vunpack.c.l.b16 %v4142
    %v4175 = vunpack.c.l.b16 %v4143
    %v4176 = vunpack.c.l.b16 %v4144
    %v4177 = vunpack.c.l.b16 %v4145
    %v4178 = vunpack.c.l.b16 %v4146
    %v4179 = vunpack.c.l.b16 %v4147
    %v4180 = vunpack.c.l.b16 %v4148
    %v4181 = vunpack.c.l.b16 %v4149
    %v4182 = vunpack.c.l.b16 %v4150
    %v4183 = vrot.slane %v4175, 7
    %v4184 = vsel %vm894, %v4183, %v4167
    %v4185 = vrot.slane %v4176, 7
    %v4186 = vsel %vm894, %v4185, %v4168
    %v4187 = vrot.slane %v4177, 7
    %v4188 = vsel %vm894, %v4187, %v4169
    %v4189 = vrot.slane %v4178, 7
    %v4190 = vsel %vm894, %v4189, %v4170
    %v4191 = vrot.slane %v4179, 7
    %v4192 = vsel %vm894, %v4191, %v4171
    %v4193 = vrot.slane %v4180, 7
    %v4194 = vsel %vm894, %v4193, %v4172
    %v4195 = vrot.slane %v4181, 7
    %v4196 = vsel %vm894, %v4195, %v4173
    %v4197 = vrot.slane %v4182, 7
    %v4198 = vsel %vm894, %v4197, %v4174
    %v4199 = vpack.c.b16 %v4184, %v4184
    %v4200 = vpack.c.b16 %v4186, %v4186
    %v4201 = vpack.c.b16 %v4188, %v4188
    %v4202 = vpack.c.b16 %v4190, %v4190
    %v4203 = vpack.c.b16 %v4192, %v4192
    %v4204 = vpack.c.b16 %v4194, %v4194
    %v4205 = vpack.c.b16 %v4196, %v4196
    %v4206 = vpack.c.b16 %v4198, %v4198
    %4215 = vmatprep.subr.bf16.mxu0 %v2456
    %4216 = vmatpush1.bf16.msra.mxu0 %v2455
    %4217 = vmatprep.subr.bf16.mxu0 %v2464
    %4218 = vmatpush1.bf16.msra.mxu0 %v2463
    %4219 = vmatprep.subr.bf16.mxu0 %v2472
    %4220 = vmatpush1.bf16.msra.mxu0 %v2471
    %4221 = vmatprep.subr.bf16.mxu0 %v2480
    %4222 = vmatpush1.bf16.msra.mxu0 %v2479
    %4223 = vmatprep.subr.bf16.mxu0 %v2488
    %4224 = vmatpush1.bf16.msra.mxu0 %v2487
    %4225 = vmatprep.subr.bf16.mxu0 %v2496
    %4226 = vmatpush1.bf16.msra.mxu0 %v2495
    %4227 = vmatprep.subr.bf16.mxu0 %v2504
    %4228 = vmatpush1.bf16.msra.mxu0 %v2503
    %4229 = vmatprep.subr.bf16.mxu0 %v2512
    %4230 = vmatpush1.bf16.msra.mxu0 %v2511
    %4231 = vmatprep.subr.bf16.mxu0 %v2520
    %4232 = vmatpush1.bf16.msra.mxu0 %v2519
    %4233 = vmatprep.subr.bf16.mxu0 %v2528
    %4234 = vmatpush1.bf16.msra.mxu0 %v2527
    %4235 = vmatprep.subr.bf16.mxu0 %v2536
    %4236 = vmatpush1.bf16.msra.mxu0 %v2535
    %4237 = vmatprep.subr.bf16.mxu0 %v2544
    %4238 = vmatpush1.bf16.msra.mxu0 %v2543
    %4239 = vmatprep.subr.bf16.mxu0 %v2552
    %4240 = vmatpush1.bf16.msra.mxu0 %v2551
    %4241 = vmatprep.subr.bf16.mxu0 %v2560
    %4242 = vmatpush1.bf16.msra.mxu0 %v2559
    %4243 = vmatprep.subr.bf16.mxu0 %v2568
    %4244 = vmatpush1.bf16.msra.mxu0 %v2567
    %4245 = vmatprep.subr.bf16.mxu0 %v2576
    %4246 = vmatpush1.bf16.msra.mxu0 %v2575
    %4247 = vmatprep.mubr.bf16.mxu0 %v4200
    %4248 = vmatmul.mubr.bf16.gmra.mrb[0].mxu0 %v4199
    %v4249 = vpop.f32.mrb[0].mxu0
    %v4250 = vadd.f32 %v825, %v4249
    %v4251 = vpop.f32.mrb[0].mxu0
    %v4252 = vadd.f32 %v829, %v4251
    %v4253 = vpop.f32.mrb[0].mxu0
    %v4254 = vpop.f32.mrb[0].mxu0
    %4255 = vdwg.mxu0
    %4256 = vmatprep.subr.bf16.mxu0 %v2584
    %4257 = vmatpush1.bf16.msra.mxu0 %v2583
    %4258 = vmatprep.subr.bf16.mxu0 %v2592
    %4259 = vmatpush1.bf16.msra.mxu0 %v2591
    %4260 = vmatprep.subr.bf16.mxu0 %v2600
    %4261 = vmatpush1.bf16.msra.mxu0 %v2599
    %4262 = vmatprep.subr.bf16.mxu0 %v2608
    %4263 = vmatpush1.bf16.msra.mxu0 %v2607
    %4264 = vmatprep.subr.bf16.mxu0 %v2616
    %4265 = vmatpush1.bf16.msra.mxu0 %v2615
    %4266 = vmatprep.subr.bf16.mxu0 %v2624
    %4267 = vmatpush1.bf16.msra.mxu0 %v2623
    %4268 = vmatprep.subr.bf16.mxu0 %v2632
    %4269 = vmatpush1.bf16.msra.mxu0 %v2631
    %4270 = vmatprep.subr.bf16.mxu0 %v2640
    %4271 = vmatpush1.bf16.msra.mxu0 %v2639
    %4272 = vmatprep.subr.bf16.mxu0 %v2648
    %4273 = vmatpush1.bf16.msra.mxu0 %v2647
    %4274 = vmatprep.subr.bf16.mxu0 %v2656
    %4275 = vmatpush1.bf16.msra.mxu0 %v2655
    %4276 = vmatprep.subr.bf16.mxu0 %v2664
    %4277 = vmatpush1.bf16.msra.mxu0 %v2663
    %4278 = vmatprep.subr.bf16.mxu0 %v2672
    %4279 = vmatpush1.bf16.msra.mxu0 %v2671
    %4280 = vmatprep.subr.bf16.mxu0 %v2680
    %4281 = vmatpush1.bf16.msra.mxu0 %v2679
    %4282 = vmatprep.subr.bf16.mxu0 %v2688
    %4283 = vmatpush1.bf16.msra.mxu0 %v2687
    %4284 = vmatprep.subr.bf16.mxu0 %v2696
    %4285 = vmatpush1.bf16.msra.mxu0 %v2695
    %4286 = vmatprep.subr.bf16.mxu0 %v2704
    %4287 = vmatpush1.bf16.msra.mxu0 %v2703
    %4288 = vmatprep.mubr.bf16.mxu0 %v4202
    %4289 = vmatmul.mubr.bf16.gmra.mrb[0].mxu0 %v4201
    %v4290 = vpop.f32.mrb[0].mxu0
    %v4291 = vadd.f32 %v4250, %v4290
    %v4292 = vpop.f32.mrb[0].mxu0
    %v4293 = vadd.f32 %v4252, %v4292
    %v4294 = vpop.f32.mrb[0].mxu0
    %v4295 = vpop.f32.mrb[0].mxu0
    %4296 = vdwg.mxu0
    %4297 = vmatprep.subr.bf16.mxu0 %v2712
    %4298 = vmatpush1.bf16.msra.mxu0 %v2711
    %4299 = vmatprep.subr.bf16.mxu0 %v2720
    %4300 = vmatpush1.bf16.msra.mxu0 %v2719
    %4301 = vmatprep.subr.bf16.mxu0 %v2728
    %4302 = vmatpush1.bf16.msra.mxu0 %v2727
    %4303 = vmatprep.subr.bf16.mxu0 %v2736
    %4304 = vmatpush1.bf16.msra.mxu0 %v2735
    %4305 = vmatprep.subr.bf16.mxu0 %v2744
    %4306 = vmatpush1.bf16.msra.mxu0 %v2743
    %4307 = vmatprep.subr.bf16.mxu0 %v2752
    %4308 = vmatpush1.bf16.msra.mxu0 %v2751
    %4309 = vmatprep.subr.bf16.mxu0 %v2760
    %4310 = vmatpush1.bf16.msra.mxu0 %v2759
    %4311 = vmatprep.subr.bf16.mxu0 %v2768
    %4312 = vmatpush1.bf16.msra.mxu0 %v2767
    %4313 = vmatprep.subr.bf16.mxu0 %v2776
    %4314 = vmatpush1.bf16.msra.mxu0 %v2775
    %4315 = vmatprep.subr.bf16.mxu0 %v2784
    %4316 = vmatpush1.bf16.msra.mxu0 %v2783
    %4317 = vmatprep.subr.bf16.mxu0 %v2792
    %4318 = vmatpush1.bf16.msra.mxu0 %v2791
    %4319 = vmatprep.subr.bf16.mxu0 %v2800
    %4320 = vmatpush1.bf16.msra.mxu0 %v2799
    %4321 = vmatprep.subr.bf16.mxu0 %v2808
    %4322 = vmatpush1.bf16.msra.mxu0 %v2807
    %4323 = vmatprep.subr.bf16.mxu0 %v2816
    %4324 = vmatpush1.bf16.msra.mxu0 %v2815
    %4325 = vmatprep.subr.bf16.mxu0 %v2824
    %4326 = vmatpush1.bf16.msra.mxu0 %v2823
    %4327 = vmatprep.subr.bf16.mxu0 %v2832
    %4328 = vmatpush1.bf16.msra.mxu0 %v2831
    %4329 = vmatprep.mubr.bf16.mxu0 %v4204
    %4330 = vmatmul.mubr.bf16.gmra.mrb[0].mxu0 %v4203
    %v4331 = vpop.f32.mrb[0].mxu0
    %v4332 = vadd.f32 %v4291, %v4331
    %v4333 = vpop.f32.mrb[0].mxu0
    %v4334 = vadd.f32 %v4293, %v4333
    %v4335 = vpop.f32.mrb[0].mxu0
    %v4336 = vpop.f32.mrb[0].mxu0
    %4337 = vdwg.mxu0
    %4338 = vmatprep.subr.bf16.mxu0 %v2840
    %4339 = vmatpush1.bf16.msra.mxu0 %v2839
    %4340 = vmatprep.subr.bf16.mxu0 %v2848
    %4341 = vmatpush1.bf16.msra.mxu0 %v2847
    %4342 = vmatprep.subr.bf16.mxu0 %v2856
    %4343 = vmatpush1.bf16.msra.mxu0 %v2855
    %4344 = vmatprep.subr.bf16.mxu0 %v2864
    %4345 = vmatpush1.bf16.msra.mxu0 %v2863
    %4346 = vmatprep.subr.bf16.mxu0 %v2872
    %4347 = vmatpush1.bf16.msra.mxu0 %v2871
    %4348 = vmatprep.subr.bf16.mxu0 %v2880
    %4349 = vmatpush1.bf16.msra.mxu0 %v2879
    %4350 = vmatprep.subr.bf16.mxu0 %v2888
    %4351 = vmatpush1.bf16.msra.mxu0 %v2887
    %4352 = vmatprep.subr.bf16.mxu0 %v2896
    %4353 = vmatpush1.bf16.msra.mxu0 %v2895
    %4354 = vmatprep.subr.bf16.mxu0 %v2904
    %4355 = vmatpush1.bf16.msra.mxu0 %v2903
    %4356 = vmatprep.subr.bf16.mxu0 %v2912
    %4357 = vmatpush1.bf16.msra.mxu0 %v2911
    %4358 = vmatprep.subr.bf16.mxu0 %v2920
    %4359 = vmatpush1.bf16.msra.mxu0 %v2919
    %4360 = vmatprep.subr.bf16.mxu0 %v2928
    %4361 = vmatpush1.bf16.msra.mxu0 %v2927
    %4362 = vmatprep.subr.bf16.mxu0 %v2936
    %4363 = vmatpush1.bf16.msra.mxu0 %v2935
    %4364 = vmatprep.subr.bf16.mxu0 %v2944
    %4365 = vmatpush1.bf16.msra.mxu0 %v2943
    %4366 = vmatprep.subr.bf16.mxu0 %v2952
    %4367 = vmatpush1.bf16.msra.mxu0 %v2951
    %4368 = vmatprep.subr.bf16.mxu0 %v2960
    %4369 = vmatpush1.bf16.msra.mxu0 %v2959
    %4370 = vmatprep.mubr.bf16.mxu0 %v4206
    %4371 = vmatmul.mubr.bf16.gmra.mrb[0].mxu0 %v4205
    %v4372 = vpop.f32.mrb[0].mxu0
    %v4373 = vadd.f32 %v4332, %v4372
    %v4374 = vpop.f32.mrb[0].mxu0
    %v4375 = vadd.f32 %v4334, %v4374
    %v4376 = vpop.f32.mrb[0].mxu0
    %v4377 = vpop.f32.mrb[0].mxu0
    %4378 = vdwg.mxu0
    %4379 = vmatprep.subr.bf16.mxu0 %v2458
    %4380 = vmatpush1.bf16.msra.mxu0 %v2457
    %4381 = vmatprep.subr.bf16.mxu0 %v2466
    %4382 = vmatpush1.bf16.msra.mxu0 %v2465
    %4383 = vmatprep.subr.bf16.mxu0 %v2474
    %4384 = vmatpush1.bf16.msra.mxu0 %v2473
    %4385 = vmatprep.subr.bf16.mxu0 %v2482
    %4386 = vmatpush1.bf16.msra.mxu0 %v2481
    %4387 = vmatprep.subr.bf16.mxu0 %v2490
    %4388 = vmatpush1.bf16.msra.mxu0 %v2489
    %4389 = vmatprep.subr.bf16.mxu0 %v2498
    %4390 = vmatpush1.bf16.msra.mxu0 %v2497
    %4391 = vmatprep.subr.bf16.mxu0 %v2506
    %4392 = vmatpush1.bf16.msra.mxu0 %v2505
    %4393 = vmatprep.subr.bf16.mxu0 %v2514
    %4394 = vmatpush1.bf16.msra.mxu0 %v2513
    %4395 = vmatprep.subr.bf16.mxu0 %v2522
    %4396 = vmatpush1.bf16.msra.mxu0 %v2521
    %4397 = vmatprep.subr.bf16.mxu0 %v2530
    %4398 = vmatpush1.bf16.msra.mxu0 %v2529
    %4399 = vmatprep.subr.bf16.mxu0 %v2538
    %4400 = vmatpush1.bf16.msra.mxu0 %v2537
    %4401 = vmatprep.subr.bf16.mxu0 %v2546
    %4402 = vmatpush1.bf16.msra.mxu0 %v2545
    %4403 = vmatprep.subr.bf16.mxu0 %v2554
    %4404 = vmatpush1.bf16.msra.mxu0 %v2553
    %4405 = vmatprep.subr.bf16.mxu0 %v2562
    %4406 = vmatpush1.bf16.msra.mxu0 %v2561
    %4407 = vmatprep.subr.bf16.mxu0 %v2570
    %4408 = vmatpush1.bf16.msra.mxu0 %v2569
    %4409 = vmatprep.subr.bf16.mxu0 %v2578
    %4410 = vmatpush1.bf16.msra.mxu0 %v2577
    %4411 = vmatprep.mubr.bf16.mxu0 %v4200
    %4412 = vmatmul.mubr.bf16.gmra.mrb[0].mxu0 %v4199
    %v4413 = vpop.f32.mrb[0].mxu0
    %v4414 = vadd.f32 %v833, %v4413
    %v4415 = vpop.f32.mrb[0].mxu0
    %v4416 = vadd.f32 %v837, %v4415
    %v4417 = vpop.f32.mrb[0].mxu0
    %v4418 = vpop.f32.mrb[0].mxu0
    %4419 = vdwg.mxu0
    %4420 = vmatprep.subr.bf16.mxu0 %v2586
    %4421 = vmatpush1.bf16.msra.mxu0 %v2585
    %4422 = vmatprep.subr.bf16.mxu0 %v2594
    %4423 = vmatpush1.bf16.msra.mxu0 %v2593
    %4424 = vmatprep.subr.bf16.mxu0 %v2602
    %4425 = vmatpush1.bf16.msra.mxu0 %v2601
    %4426 = vmatprep.subr.bf16.mxu0 %v2610
    %4427 = vmatpush1.bf16.msra.mxu0 %v2609
    %4428 = vmatprep.subr.bf16.mxu0 %v2618
    %4429 = vmatpush1.bf16.msra.mxu0 %v2617
    %4430 = vmatprep.subr.bf16.mxu0 %v2626
    %4431 = vmatpush1.bf16.msra.mxu0 %v2625
    %4432 = vmatprep.subr.bf16.mxu0 %v2634
    %4433 = vmatpush1.bf16.msra.mxu0 %v2633
    %4434 = vmatprep.subr.bf16.mxu0 %v2642
    %4435 = vmatpush1.bf16.msra.mxu0 %v2641
    %4436 = vmatprep.subr.bf16.mxu0 %v2650
    %4437 = vmatpush1.bf16.msra.mxu0 %v2649
    %4438 = vmatprep.subr.bf16.mxu0 %v2658
    %4439 = vmatpush1.bf16.msra.mxu0 %v2657
    %4440 = vmatprep.subr.bf16.mxu0 %v2666
    %4441 = vmatpush1.bf16.msra.mxu0 %v2665
    %4442 = vmatprep.subr.bf16.mxu0 %v2674
    %4443 = vmatpush1.bf16.msra.mxu0 %v2673
    %4444 = vmatprep.subr.bf16.mxu0 %v2682
    %4445 = vmatpush1.bf16.msra.mxu0 %v2681
    %4446 = vmatprep.subr.bf16.mxu0 %v2690
    %4447 = vmatpush1.bf16.msra.mxu0 %v2689
    %4448 = vmatprep.subr.bf16.mxu0 %v2698
    %4449 = vmatpush1.bf16.msra.mxu0 %v2697
    %4450 = vmatprep.subr.bf16.mxu0 %v2706
    %4451 = vmatpush1.bf16.msra.mxu0 %v2705
    %4452 = vmatprep.mubr.bf16.mxu0 %v4202
    %4453 = vmatmul.mubr.bf16.gmra.mrb[0].mxu0 %v4201
    %v4454 = vpop.f32.mrb[0].mxu0
    %v4455 = vadd.f32 %v4414, %v4454
    %v4456 = vpop.f32.mrb[0].mxu0
    %v4457 = vadd.f32 %v4416, %v4456
    %v4458 = vpop.f32.mrb[0].mxu0
    %v4459 = vpop.f32.mrb[0].mxu0
    %4460 = vdwg.mxu0
    %4461 = vmatprep.subr.bf16.mxu0 %v2714
    %4462 = vmatpush1.bf16.msra.mxu0 %v2713
    %4463 = vmatprep.subr.bf16.mxu0 %v2722
    %4464 = vmatpush1.bf16.msra.mxu0 %v2721
    %4465 = vmatprep.subr.bf16.mxu0 %v2730
    %4466 = vmatpush1.bf16.msra.mxu0 %v2729
    %4467 = vmatprep.subr.bf16.mxu0 %v2738
    %4468 = vmatpush1.bf16.msra.mxu0 %v2737
    %4469 = vmatprep.subr.bf16.mxu0 %v2746
    %4470 = vmatpush1.bf16.msra.mxu0 %v2745
    %4471 = vmatprep.subr.bf16.mxu0 %v2754
    %4472 = vmatpush1.bf16.msra.mxu0 %v2753
    %4473 = vmatprep.subr.bf16.mxu0 %v2762
    %4474 = vmatpush1.bf16.msra.mxu0 %v2761
    %4475 = vmatprep.subr.bf16.mxu0 %v2770
    %4476 = vmatpush1.bf16.msra.mxu0 %v2769
    %4477 = vmatprep.subr.bf16.mxu0 %v2778
    %4478 = vmatpush1.bf16.msra.mxu0 %v2777
    %4479 = vmatprep.subr.bf16.mxu0 %v2786
    %4480 = vmatpush1.bf16.msra.mxu0 %v2785
    %4481 = vmatprep.subr.bf16.mxu0 %v2794
    %4482 = vmatpush1.bf16.msra.mxu0 %v2793
    %4483 = vmatprep.subr.bf16.mxu0 %v2802
    %4484 = vmatpush1.bf16.msra.mxu0 %v2801
    %4485 = vmatprep.subr.bf16.mxu0 %v2810
    %4486 = vmatpush1.bf16.msra.mxu0 %v2809
    %4487 = vmatprep.subr.bf16.mxu0 %v2818
    %4488 = vmatpush1.bf16.msra.mxu0 %v2817
    %4489 = vmatprep.subr.bf16.mxu0 %v2826
    %4490 = vmatpush1.bf16.msra.mxu0 %v2825
    %4491 = vmatprep.subr.bf16.mxu0 %v2834
    %4492 = vmatpush1.bf16.msra.mxu0 %v2833
    %4493 = vmatprep.mubr.bf16.mxu0 %v4204
    %4494 = vmatmul.mubr.bf16.gmra.mrb[0].mxu0 %v4203
    %v4495 = vpop.f32.mrb[0].mxu0
    %v4496 = vadd.f32 %v4455, %v4495
    %v4497 = vpop.f32.mrb[0].mxu0
    %v4498 = vadd.f32 %v4457, %v4497
    %v4499 = vpop.f32.mrb[0].mxu0
    %v4500 = vpop.f32.mrb[0].mxu0
    %4501 = vdwg.mxu0
    %4502 = vmatprep.subr.bf16.mxu0 %v2842
    %4503 = vmatpush1.bf16.msra.mxu0 %v2841
    %4504 = vmatprep.subr.bf16.mxu0 %v2850
    %4505 = vmatpush1.bf16.msra.mxu0 %v2849
    %4506 = vmatprep.subr.bf16.mxu0 %v2858
    %4507 = vmatpush1.bf16.msra.mxu0 %v2857
    %4508 = vmatprep.subr.bf16.mxu0 %v2866
    %4509 = vmatpush1.bf16.msra.mxu0 %v2865
    %4510 = vmatprep.subr.bf16.mxu0 %v2874
    %4511 = vmatpush1.bf16.msra.mxu0 %v2873
    %4512 = vmatprep.subr.bf16.mxu0 %v2882
    %4513 = vmatpush1.bf16.msra.mxu0 %v2881
    %4514 = vmatprep.subr.bf16.mxu0 %v2890
    %4515 = vmatpush1.bf16.msra.mxu0 %v2889
    %4516 = vmatprep.subr.bf16.mxu0 %v2898
    %4517 = vmatpush1.bf16.msra.mxu0 %v2897
    %4518 = vmatprep.subr.bf16.mxu0 %v2906
    %4519 = vmatpush1.bf16.msra.mxu0 %v2905
    %4520 = vmatprep.subr.bf16.mxu0 %v2914
    %4521 = vmatpush1.bf16.msra.mxu0 %v2913
    %4522 = vmatprep.subr.bf16.mxu0 %v2922
    %4523 = vmatpush1.bf16.msra.mxu0 %v2921
    %4524 = vmatprep.subr.bf16.mxu0 %v2930
    %4525 = vmatpush1.bf16.msra.mxu0 %v2929
    %4526 = vmatprep.subr.bf16.mxu0 %v2938
    %4527 = vmatpush1.bf16.msra.mxu0 %v2937
    %4528 = vmatprep.subr.bf16.mxu0 %v2946
    %4529 = vmatpush1.bf16.msra.mxu0 %v2945
    %4530 = vmatprep.subr.bf16.mxu0 %v2954
    %4531 = vmatpush1.bf16.msra.mxu0 %v2953
    %4532 = vmatprep.subr.bf16.mxu0 %v2962
    %4533 = vmatpush1.bf16.msra.mxu0 %v2961
    %4534 = vmatprep.mubr.bf16.mxu0 %v4206
    %4535 = vmatmul.mubr.bf16.gmra.mrb[0].mxu0 %v4205
    %v4536 = vpop.f32.mrb[0].mxu0
    %v4537 = vadd.f32 %v4496, %v4536
    %v4538 = vpop.f32.mrb[0].mxu0
    %v4539 = vadd.f32 %v4498, %v4538
    %v4540 = vpop.f32.mrb[0].mxu0
    %v4541 = vpop.f32.mrb[0].mxu0
    %4542 = vdwg.mxu0
    %4543 = vmatprep.subr.bf16.mxu0 %v2460
    %4544 = vmatpush1.bf16.msra.mxu0 %v2459
    %4545 = vmatprep.subr.bf16.mxu0 %v2468
    %4546 = vmatpush1.bf16.msra.mxu0 %v2467
    %4547 = vmatprep.subr.bf16.mxu0 %v2476
    %4548 = vmatpush1.bf16.msra.mxu0 %v2475
    %4549 = vmatprep.subr.bf16.mxu0 %v2484
    %4550 = vmatpush1.bf16.msra.mxu0 %v2483
    %4551 = vmatprep.subr.bf16.mxu0 %v2492
    %4552 = vmatpush1.bf16.msra.mxu0 %v2491
    %4553 = vmatprep.subr.bf16.mxu0 %v2500
    %4554 = vmatpush1.bf16.msra.mxu0 %v2499
    %4555 = vmatprep.subr.bf16.mxu0 %v2508
    %4556 = vmatpush1.bf16.msra.mxu0 %v2507
    %4557 = vmatprep.subr.bf16.mxu0 %v2516
    %4558 = vmatpush1.bf16.msra.mxu0 %v2515
    %4559 = vmatprep.subr.bf16.mxu0 %v2524
    %4560 = vmatpush1.bf16.msra.mxu0 %v2523
    %4561 = vmatprep.subr.bf16.mxu0 %v2532
    %4562 = vmatpush1.bf16.msra.mxu0 %v2531
    %4563 = vmatprep.subr.bf16.mxu0 %v2540
    %4564 = vmatpush1.bf16.msra.mxu0 %v2539
    %4565 = vmatprep.subr.bf16.mxu0 %v2548
    %4566 = vmatpush1.bf16.msra.mxu0 %v2547
    %4567 = vmatprep.subr.bf16.mxu0 %v2556
    %4568 = vmatpush1.bf16.msra.mxu0 %v2555
    %4569 = vmatprep.subr.bf16.mxu0 %v2564
    %4570 = vmatpush1.bf16.msra.mxu0 %v2563
    %4571 = vmatprep.subr.bf16.mxu0 %v2572
    %4572 = vmatpush1.bf16.msra.mxu0 %v2571
    %4573 = vmatprep.subr.bf16.mxu0 %v2580
    %4574 = vmatpush1.bf16.msra.mxu0 %v2579
    %4575 = vmatprep.mubr.bf16.mxu0 %v4200
    %4576 = vmatmul.mubr.bf16.gmra.mrb[0].mxu0 %v4199
    %v4577 = vpop.f32.mrb[0].mxu0
    %v4578 = vadd.f32 %v841, %v4577
    %v4579 = vpop.f32.mrb[0].mxu0
    %v4580 = vadd.f32 %v845, %v4579
    %v4581 = vpop.f32.mrb[0].mxu0
    %v4582 = vpop.f32.mrb[0].mxu0
    %4583 = vdwg.mxu0
    %4584 = vmatprep.subr.bf16.mxu0 %v2588
    %4585 = vmatpush1.bf16.msra.mxu0 %v2587
    %4586 = vmatprep.subr.bf16.mxu0 %v2596
    %4587 = vmatpush1.bf16.msra.mxu0 %v2595
    %4588 = vmatprep.subr.bf16.mxu0 %v2604
    %4589 = vmatpush1.bf16.msra.mxu0 %v2603
    %4590 = vmatprep.subr.bf16.mxu0 %v2612
    %4591 = vmatpush1.bf16.msra.mxu0 %v2611
    %4592 = vmatprep.subr.bf16.mxu0 %v2620
    %4593 = vmatpush1.bf16.msra.mxu0 %v2619
    %4594 = vmatprep.subr.bf16.mxu0 %v2628
    %4595 = vmatpush1.bf16.msra.mxu0 %v2627
    %4596 = vmatprep.subr.bf16.mxu0 %v2636
    %4597 = vmatpush1.bf16.msra.mxu0 %v2635
    %4598 = vmatprep.subr.bf16.mxu0 %v2644
    %4599 = vmatpush1.bf16.msra.mxu0 %v2643
    %4600 = vmatprep.subr.bf16.mxu0 %v2652
    %4601 = vmatpush1.bf16.msra.mxu0 %v2651
    %4602 = vmatprep.subr.bf16.mxu0 %v2660
    %4603 = vmatpush1.bf16.msra.mxu0 %v2659
    %4604 = vmatprep.subr.bf16.mxu0 %v2668
    %4605 = vmatpush1.bf16.msra.mxu0 %v2667
    %4606 = vmatprep.subr.bf16.mxu0 %v2676
    %4607 = vmatpush1.bf16.msra.mxu0 %v2675
    %4608 = vmatprep.subr.bf16.mxu0 %v2684
    %4609 = vmatpush1.bf16.msra.mxu0 %v2683
    %4610 = vmatprep.subr.bf16.mxu0 %v2692
    %4611 = vmatpush1.bf16.msra.mxu0 %v2691
    %4612 = vmatprep.subr.bf16.mxu0 %v2700
    %4613 = vmatpush1.bf16.msra.mxu0 %v2699
    %4614 = vmatprep.subr.bf16.mxu0 %v2708
    %4615 = vmatpush1.bf16.msra.mxu0 %v2707
    %4616 = vmatprep.mubr.bf16.mxu0 %v4202
    %4617 = vmatmul.mubr.bf16.gmra.mrb[0].mxu0 %v4201
    %v4618 = vpop.f32.mrb[0].mxu0
    %v4619 = vadd.f32 %v4578, %v4618
    %v4620 = vpop.f32.mrb[0].mxu0
    %v4621 = vadd.f32 %v4580, %v4620
    %v4622 = vpop.f32.mrb[0].mxu0
    %v4623 = vpop.f32.mrb[0].mxu0
    %4624 = vdwg.mxu0
    %4625 = vmatprep.subr.bf16.mxu0 %v2716
    %4626 = vmatpush1.bf16.msra.mxu0 %v2715
    %4627 = vmatprep.subr.bf16.mxu0 %v2724
    %4628 = vmatpush1.bf16.msra.mxu0 %v2723
    %4629 = vmatprep.subr.bf16.mxu0 %v2732
    %4630 = vmatpush1.bf16.msra.mxu0 %v2731
    %4631 = vmatprep.subr.bf16.mxu0 %v2740
    %4632 = vmatpush1.bf16.msra.mxu0 %v2739
    %4633 = vmatprep.subr.bf16.mxu0 %v2748
    %4634 = vmatpush1.bf16.msra.mxu0 %v2747
    %4635 = vmatprep.subr.bf16.mxu0 %v2756
    %4636 = vmatpush1.bf16.msra.mxu0 %v2755
    %4637 = vmatprep.subr.bf16.mxu0 %v2764
    %4638 = vmatpush1.bf16.msra.mxu0 %v2763
    %4639 = vmatprep.subr.bf16.mxu0 %v2772
    %4640 = vmatpush1.bf16.msra.mxu0 %v2771
    %4641 = vmatprep.subr.bf16.mxu0 %v2780
    %4642 = vmatpush1.bf16.msra.mxu0 %v2779
    %4643 = vmatprep.subr.bf16.mxu0 %v2788
    %4644 = vmatpush1.bf16.msra.mxu0 %v2787
    %4645 = vmatprep.subr.bf16.mxu0 %v2796
    %4646 = vmatpush1.bf16.msra.mxu0 %v2795
    %4647 = vmatprep.subr.bf16.mxu0 %v2804
    %4648 = vmatpush1.bf16.msra.mxu0 %v2803
    %4649 = vmatprep.subr.bf16.mxu0 %v2812
    %4650 = vmatpush1.bf16.msra.mxu0 %v2811
    %4651 = vmatprep.subr.bf16.mxu0 %v2820
    %4652 = vmatpush1.bf16.msra.mxu0 %v2819
    %4653 = vmatprep.subr.bf16.mxu0 %v2828
    %4654 = vmatpush1.bf16.msra.mxu0 %v2827
    %4655 = vmatprep.subr.bf16.mxu0 %v2836
    %4656 = vmatpush1.bf16.msra.mxu0 %v2835
    %4657 = vmatprep.mubr.bf16.mxu0 %v4204
    %4658 = vmatmul.mubr.bf16.gmra.mrb[0].mxu0 %v4203
    %v4659 = vpop.f32.mrb[0].mxu0
    %v4660 = vadd.f32 %v4619, %v4659
    %v4661 = vpop.f32.mrb[0].mxu0
    %v4662 = vadd.f32 %v4621, %v4661
    %v4663 = vpop.f32.mrb[0].mxu0
    %v4664 = vpop.f32.mrb[0].mxu0
    %4665 = vdwg.mxu0
    %4666 = vmatprep.subr.bf16.mxu0 %v2844
    %4667 = vmatpush1.bf16.msra.mxu0 %v2843
    %4668 = vmatprep.subr.bf16.mxu0 %v2852
    %4669 = vmatpush1.bf16.msra.mxu0 %v2851
    %4670 = vmatprep.subr.bf16.mxu0 %v2860
    %4671 = vmatpush1.bf16.msra.mxu0 %v2859
    %4672 = vmatprep.subr.bf16.mxu0 %v2868
    %4673 = vmatpush1.bf16.msra.mxu0 %v2867
    %4674 = vmatprep.subr.bf16.mxu0 %v2876
    %4675 = vmatpush1.bf16.msra.mxu0 %v2875
    %4676 = vmatprep.subr.bf16.mxu0 %v2884
    %4677 = vmatpush1.bf16.msra.mxu0 %v2883
    %4678 = vmatprep.subr.bf16.mxu0 %v2892
    %4679 = vmatpush1.bf16.msra.mxu0 %v2891
    %4680 = vmatprep.subr.bf16.mxu0 %v2900
    %4681 = vmatpush1.bf16.msra.mxu0 %v2899
    %4682 = vmatprep.subr.bf16.mxu0 %v2908
    %4683 = vmatpush1.bf16.msra.mxu0 %v2907
    %4684 = vmatprep.subr.bf16.mxu0 %v2916
    %4685 = vmatpush1.bf16.msra.mxu0 %v2915
    %4686 = vmatprep.subr.bf16.mxu0 %v2924
    %4687 = vmatpush1.bf16.msra.mxu0 %v2923
    %4688 = vmatprep.subr.bf16.mxu0 %v2932
    %4689 = vmatpush1.bf16.msra.mxu0 %v2931
    %4690 = vmatprep.subr.bf16.mxu0 %v2940
    %4691 = vmatpush1.bf16.msra.mxu0 %v2939
    %4692 = vmatprep.subr.bf16.mxu0 %v2948
    %4693 = vmatpush1.bf16.msra.mxu0 %v2947
    %4694 = vmatprep.subr.bf16.mxu0 %v2956
    %4695 = vmatpush1.bf16.msra.mxu0 %v2955
    %4696 = vmatprep.subr.bf16.mxu0 %v2964
    %4697 = vmatpush1.bf16.msra.mxu0 %v2963
    %4698 = vmatprep.mubr.bf16.mxu0 %v4206
    %4699 = vmatmul.mubr.bf16.gmra.mrb[0].mxu0 %v4205
    %v4700 = vpop.f32.mrb[0].mxu0
    %v4701 = vadd.f32 %v4660, %v4700
    %v4702 = vpop.f32.mrb[0].mxu0
    %v4703 = vadd.f32 %v4662, %v4702
    %v4704 = vpop.f32.mrb[0].mxu0
    %v4705 = vpop.f32.mrb[0].mxu0
    %4706 = vdwg.mxu0
    %4707 = vmatprep.subr.bf16.mxu0 %v2462
    %4708 = vmatpush1.bf16.msra.mxu0 %v2461
    %4709 = vmatprep.subr.bf16.mxu0 %v2470
    %4710 = vmatpush1.bf16.msra.mxu0 %v2469
    %4711 = vmatprep.subr.bf16.mxu0 %v2478
    %4712 = vmatpush1.bf16.msra.mxu0 %v2477
    %4713 = vmatprep.subr.bf16.mxu0 %v2486
    %4714 = vmatpush1.bf16.msra.mxu0 %v2485
    %4715 = vmatprep.subr.bf16.mxu0 %v2494
    %4716 = vmatpush1.bf16.msra.mxu0 %v2493
    %4717 = vmatprep.subr.bf16.mxu0 %v2502
    %4718 = vmatpush1.bf16.msra.mxu0 %v2501
    %4719 = vmatprep.subr.bf16.mxu0 %v2510
    %4720 = vmatpush1.bf16.msra.mxu0 %v2509
    %4721 = vmatprep.subr.bf16.mxu0 %v2518
    %4722 = vmatpush1.bf16.msra.mxu0 %v2517
    %4723 = vmatprep.subr.bf16.mxu0 %v2526
    %4724 = vmatpush1.bf16.msra.mxu0 %v2525
    %4725 = vmatprep.subr.bf16.mxu0 %v2534
    %4726 = vmatpush1.bf16.msra.mxu0 %v2533
    %4727 = vmatprep.subr.bf16.mxu0 %v2542
    %4728 = vmatpush1.bf16.msra.mxu0 %v2541
    %4729 = vmatprep.subr.bf16.mxu0 %v2550
    %4730 = vmatpush1.bf16.msra.mxu0 %v2549
    %4731 = vmatprep.subr.bf16.mxu0 %v2558
    %4732 = vmatpush1.bf16.msra.mxu0 %v2557
    %4733 = vmatprep.subr.bf16.mxu0 %v2566
    %4734 = vmatpush1.bf16.msra.mxu0 %v2565
    %4735 = vmatprep.subr.bf16.mxu0 %v2574
    %4736 = vmatpush1.bf16.msra.mxu0 %v2573
    %4737 = vmatprep.subr.bf16.mxu0 %v2582
    %4738 = vmatpush1.bf16.msra.mxu0 %v2581
    %4739 = vmatprep.mubr.bf16.mxu0 %v4200
    %4740 = vmatmul.mubr.bf16.gmra.mrb[0].mxu0 %v4199
    %v4741 = vpop.f32.mrb[0].mxu0
    %v4742 = vadd.f32 %v849, %v4741
    %v4743 = vpop.f32.mrb[0].mxu0
    %v4744 = vadd.f32 %v853, %v4743
    %v4745 = vpop.f32.mrb[0].mxu0
    %v4746 = vpop.f32.mrb[0].mxu0
    %4747 = vdwg.mxu0
    %4748 = vmatprep.subr.bf16.mxu0 %v2590
    %4749 = vmatpush1.bf16.msra.mxu0 %v2589
    %4750 = vmatprep.subr.bf16.mxu0 %v2598
    %4751 = vmatpush1.bf16.msra.mxu0 %v2597
    %4752 = vmatprep.subr.bf16.mxu0 %v2606
    %4753 = vmatpush1.bf16.msra.mxu0 %v2605
    %4754 = vmatprep.subr.bf16.mxu0 %v2614
    %4755 = vmatpush1.bf16.msra.mxu0 %v2613
    %4756 = vmatprep.subr.bf16.mxu0 %v2622
    %4757 = vmatpush1.bf16.msra.mxu0 %v2621
    %4758 = vmatprep.subr.bf16.mxu0 %v2630
    %4759 = vmatpush1.bf16.msra.mxu0 %v2629
    %4760 = vmatprep.subr.bf16.mxu0 %v2638
    %4761 = vmatpush1.bf16.msra.mxu0 %v2637
    %4762 = vmatprep.subr.bf16.mxu0 %v2646
    %4763 = vmatpush1.bf16.msra.mxu0 %v2645
    %4764 = vmatprep.subr.bf16.mxu0 %v2654
    %4765 = vmatpush1.bf16.msra.mxu0 %v2653
    %4766 = vmatprep.subr.bf16.mxu0 %v2662
    %4767 = vmatpush1.bf16.msra.mxu0 %v2661
    %4768 = vmatprep.subr.bf16.mxu0 %v2670
    %4769 = vmatpush1.bf16.msra.mxu0 %v2669
    %4770 = vmatprep.subr.bf16.mxu0 %v2678
    %4771 = vmatpush1.bf16.msra.mxu0 %v2677
    %4772 = vmatprep.subr.bf16.mxu0 %v2686
    %4773 = vmatpush1.bf16.msra.mxu0 %v2685
    %4774 = vmatprep.subr.bf16.mxu0 %v2694
    %4775 = vmatpush1.bf16.msra.mxu0 %v2693
    %4776 = vmatprep.subr.bf16.mxu0 %v2702
    %4777 = vmatpush1.bf16.msra.mxu0 %v2701
    %4778 = vmatprep.subr.bf16.mxu0 %v2710
    %4779 = vmatpush1.bf16.msra.mxu0 %v2709
    %4780 = vmatprep.mubr.bf16.mxu0 %v4202
    %4781 = vmatmul.mubr.bf16.gmra.mrb[0].mxu0 %v4201
    %v4782 = vpop.f32.mrb[0].mxu0
    %v4783 = vadd.f32 %v4742, %v4782
    %v4784 = vpop.f32.mrb[0].mxu0
    %v4785 = vadd.f32 %v4744, %v4784
    %v4786 = vpop.f32.mrb[0].mxu0
    %v4787 = vpop.f32.mrb[0].mxu0
    %4788 = vdwg.mxu0
    %4789 = vmatprep.subr.bf16.mxu0 %v2718
    %4790 = vmatpush1.bf16.msra.mxu0 %v2717
    %4791 = vmatprep.subr.bf16.mxu0 %v2726
    %4792 = vmatpush1.bf16.msra.mxu0 %v2725
    %4793 = vmatprep.subr.bf16.mxu0 %v2734
    %4794 = vmatpush1.bf16.msra.mxu0 %v2733
    %4795 = vmatprep.subr.bf16.mxu0 %v2742
    %4796 = vmatpush1.bf16.msra.mxu0 %v2741
    %4797 = vmatprep.subr.bf16.mxu0 %v2750
    %4798 = vmatpush1.bf16.msra.mxu0 %v2749
    %4799 = vmatprep.subr.bf16.mxu0 %v2758
    %4800 = vmatpush1.bf16.msra.mxu0 %v2757
    %4801 = vmatprep.subr.bf16.mxu0 %v2766
    %4802 = vmatpush1.bf16.msra.mxu0 %v2765
    %4803 = vmatprep.subr.bf16.mxu0 %v2774
    %4804 = vmatpush1.bf16.msra.mxu0 %v2773
    %4805 = vmatprep.subr.bf16.mxu0 %v2782
    %4806 = vmatpush1.bf16.msra.mxu0 %v2781
    %4807 = vmatprep.subr.bf16.mxu0 %v2790
    %4808 = vmatpush1.bf16.msra.mxu0 %v2789
    %4809 = vmatprep.subr.bf16.mxu0 %v2798
    %4810 = vmatpush1.bf16.msra.mxu0 %v2797
    %4811 = vmatprep.subr.bf16.mxu0 %v2806
    %4812 = vmatpush1.bf16.msra.mxu0 %v2805
    %4813 = vmatprep.subr.bf16.mxu0 %v2814
    %4814 = vmatpush1.bf16.msra.mxu0 %v2813
    %4815 = vmatprep.subr.bf16.mxu0 %v2822
    %4816 = vmatpush1.bf16.msra.mxu0 %v2821
    %4817 = vmatprep.subr.bf16.mxu0 %v2830
    %4818 = vmatpush1.bf16.msra.mxu0 %v2829
    %4819 = vmatprep.subr.bf16.mxu0 %v2838
    %4820 = vmatpush1.bf16.msra.mxu0 %v2837
    %4821 = vmatprep.mubr.bf16.mxu0 %v4204
    %4822 = vmatmul.mubr.bf16.gmra.mrb[0].mxu0 %v4203
    %v4823 = vpop.f32.mrb[0].mxu0
    %v4824 = vadd.f32 %v4783, %v4823
    %v4825 = vpop.f32.mrb[0].mxu0
    %v4826 = vadd.f32 %v4785, %v4825
    %v4827 = vpop.f32.mrb[0].mxu0
    %v4828 = vpop.f32.mrb[0].mxu0
    %4829 = vdwg.mxu0
    %4830 = vmatprep.subr.bf16.mxu0 %v2846
    %4831 = vmatpush1.bf16.msra.mxu0 %v2845
    %4832 = vmatprep.subr.bf16.mxu0 %v2854
    %4833 = vmatpush1.bf16.msra.mxu0 %v2853
    %4834 = vmatprep.subr.bf16.mxu0 %v2862
    %4835 = vmatpush1.bf16.msra.mxu0 %v2861
    %4836 = vmatprep.subr.bf16.mxu0 %v2870
    %4837 = vmatpush1.bf16.msra.mxu0 %v2869
    %4838 = vmatprep.subr.bf16.mxu0 %v2878
    %4839 = vmatpush1.bf16.msra.mxu0 %v2877
    %4840 = vmatprep.subr.bf16.mxu0 %v2886
    %4841 = vmatpush1.bf16.msra.mxu0 %v2885
    %4842 = vmatprep.subr.bf16.mxu0 %v2894
    %4843 = vmatpush1.bf16.msra.mxu0 %v2893
    %4844 = vmatprep.subr.bf16.mxu0 %v2902
    %4845 = vmatpush1.bf16.msra.mxu0 %v2901
    %4846 = vmatprep.subr.bf16.mxu0 %v2910
    %4847 = vmatpush1.bf16.msra.mxu0 %v2909
    %4848 = vmatprep.subr.bf16.mxu0 %v2918
    %4849 = vmatpush1.bf16.msra.mxu0 %v2917
    %4850 = vmatprep.subr.bf16.mxu0 %v2926
    %4851 = vmatpush1.bf16.msra.mxu0 %v2925
    %4852 = vmatprep.subr.bf16.mxu0 %v2934
    %4853 = vmatpush1.bf16.msra.mxu0 %v2933
    %4854 = vmatprep.subr.bf16.mxu0 %v2942
    %4855 = vmatpush1.bf16.msra.mxu0 %v2941
    %4856 = vmatprep.subr.bf16.mxu0 %v2950
    %4857 = vmatpush1.bf16.msra.mxu0 %v2949
    %4858 = vmatprep.subr.bf16.mxu0 %v2958
    %4859 = vmatpush1.bf16.msra.mxu0 %v2957
    %4860 = vmatprep.subr.bf16.mxu0 %v2966
    %4861 = vmatpush1.bf16.msra.mxu0 %v2965
    %4862 = vmatprep.mubr.bf16.mxu0 %v4206
    %4863 = vmatmul.mubr.bf16.gmra.mrb[0].mxu0 %v4205
    %v4864 = vpop.f32.mrb[0].mxu0
    %v4865 = vadd.f32 %v4824, %v4864
    %v4866 = vpop.f32.mrb[0].mxu0
    %v4867 = vadd.f32 %v4826, %v4866
    %v4868 = vpop.f32.mrb[0].mxu0
    %v4869 = vpop.f32.mrb[0].mxu0
    %4870 = vdwg.mxu0
    %v4879 = vcombine.low %v3637, %v3639
    %v4880 = vcombine.low %v3801, %v3803
    %v4882 = vunpack.c.l.s4 1983009808
    %v4883 = vunpack.c.0.s8 %v4882
    %v4884 = vlaneseq
    %v4885 = vshrl.u32 %v4884, 7
    %v4886 = vsub.s32 %v4883, %v4885
    %v4887 = vrot.slane %v4879, %v4886
    %v4889 = vunpack.c.l.s4 1983009808
    %v4890 = vunpack.c.0.s8 %v4889
    %v4891 = vlaneseq
    %v4892 = vshrl.u32 %v4891, 7
    %v4893 = vsub.s32 %v4890, %v4892
    %v4894 = vrot.slane %v4880, %v4893
    %v4895 = vcombine.low %v4887, %v4894
    %v4896 = vcombine.low %v3965, %v3967
    %v4897 = vcombine.low %v4129, %v4131
    %v4899 = vunpack.c.l.s4 1983009808
    %v4900 = vunpack.c.0.s8 %v4899
    %v4901 = vlaneseq
    %v4902 = vshrl.u32 %v4901, 7
    %v4903 = vsub.s32 %v4900, %v4902
    %v4904 = vrot.slane %v4896, %v4903
    %v4906 = vunpack.c.l.s4 1983009808
    %v4907 = vunpack.c.0.s8 %v4906
    %v4908 = vlaneseq
    %v4909 = vshrl.u32 %v4908, 7
    %v4910 = vsub.s32 %v4907, %v4909
    %v4911 = vrot.slane %v4897, %v4910
    %v4912 = vcombine.low %v4904, %v4911
    %4915 = vst [vmem:[%s5] sm:$0xff] %v4895
    %4916 = vst [vmem:[%s5 + $0x8] sm:$0xff] %v4912
    %v4925 = vcombine.low %v4373, %v4375
    %v4926 = vcombine.low %v4537, %v4539
    %v4928 = vunpack.c.l.s4 1983009808
    %v4929 = vunpack.c.0.s8 %v4928
    %v4930 = vlaneseq
    %v4931 = vshrl.u32 %v4930, 7
    %v4932 = vsub.s32 %v4929, %v4931
    %v4933 = vrot.slane %v4925, %v4932
    %v4935 = vunpack.c.l.s4 1983009808
    %v4936 = vunpack.c.0.s8 %v4935
    %v4937 = vlaneseq
    %v4938 = vshrl.u32 %v4937, 7
    %v4939 = vsub.s32 %v4936, %v4938
    %v4940 = vrot.slane %v4926, %v4939
    %v4941 = vcombine.low %v4933, %v4940
    %v4942 = vcombine.low %v4701, %v4703
    %v4943 = vcombine.low %v4865, %v4867
    %v4945 = vunpack.c.l.s4 1983009808
    %v4946 = vunpack.c.0.s8 %v4945
    %v4947 = vlaneseq
    %v4948 = vshrl.u32 %v4947, 7
    %v4949 = vsub.s32 %v4946, %v4948
    %v4950 = vrot.slane %v4942, %v4949
    %v4952 = vunpack.c.l.s4 1983009808
    %v4953 = vunpack.c.0.s8 %v4952
    %v4954 = vlaneseq
    %v4955 = vshrl.u32 %v4954, 7
    %v4956 = vsub.s32 %v4953, %v4955
    %v4957 = vrot.slane %v4943, %v4956
    %v4958 = vcombine.low %v4950, %v4957
    %s4961 = scalar_lea.vmem %s5, 16
    %4962 = vst [vmem:[%s4961] sm:$0xff] %v4941
    %4963 = vst [vmem:[%s4961 + $0x8] sm:$0xff] %v4958
    // Predicated region
    $region38: #{linear_model_forward.1} parent=1 // pred_check
      _
    $region39: #{linear_model_forward.1} parent=1 // pred_check_branch
      %4965 = sbr.rel (0) target = $region41
    $region40: #{linear_model_forward.1} parent=1 // pred_region
      _
    $region41: #{linear_model_forward.1} parent=1 // pred_fallthru
      _
    // Predicated region
    $region42: #{linear_model_forward.1} parent=1 // pred_check
      _
    $region43: #{linear_model_forward.1} parent=1 // pred_check_branch
      %4967 = sbr.rel (0) target = $region45
    $region44: #{linear_model_forward.1} parent=1 // pred_region
      _
    $region45: #{linear_model_forward.1} parent=1 // pred_fallthru
      _
    %4968 = vsyncpa [#allocation3], 1
    %4969 = vsyncpa [#allocation5], 1
    %4970 = vsyncpa [#allocation8], 1

</llo_original>
